<compile_context>
chip_gen: v5e
topology: v5e:2x2
jax: 0.10.0
libtpu: 0.0.40
codegen_flags: <defaults>
</compile_context>

<pallas_src>
import functools
import math

import jax
import jax.numpy as jnp
from jax.experimental import pallas as pl
from jax.experimental.pallas import tpu as pltpu

LN_EPS = 1e-5
BF16 = jnp.bfloat16
VMEM = pl.BlockSpec(memory_space=pltpu.MemorySpace.VMEM)

# Row order of the packed per-layer vector bundles (biases + LayerNorm params).
ENC_VEC_FIELDS = ("bqkv", "bo", "b1", "b2", "ln1_g", "ln1_b", "ln2_g", "ln2_b")
DEC_VEC_FIELDS = ("sa_bqkv", "sa_bo", "ca_bq", "ca_bkv", "ca_bo", "b1", "b2",
                  "ln1_g", "ln1_b", "ln2_g", "ln2_b", "ln3_g", "ln3_b")


# ----------------------------- in-kernel building blocks (pure value fns) -----------------------------

def _layer_norm(z, g, b):
    # z: (N, D) f32, g/b: (1, D) f32
    mu = jnp.mean(z, axis=-1, keepdims=True)
    var = jnp.mean(jnp.square(z - mu), axis=-1, keepdims=True)
    return (z - mu) * jax.lax.rsqrt(var + LN_EPS) * g + b


def _mm(x, w_bf16, bias_f32=None):
    # bf16 MXU inputs, f32 accumulation; bias added in f32. Cast x at most once.
    xb = x if x.dtype == BF16 else x.astype(BF16)
    y = jnp.dot(xb, w_bf16, preferred_element_type=jnp.float32)
    if bias_f32 is not None:
        y = y + bias_f32
    return y


def _split_heads(x2, batch, seq, nhead, dh):
    # (batch*seq, nhead*dh) -> (nhead*batch, seq, dh), head-major along the new batch axis.
    return jnp.concatenate(
        [x2[:, h * dh:(h + 1) * dh].reshape(batch, seq, dh) for h in range(nhead)],
        axis=0)


def _merge_heads(o_bh, batch, seq, nhead, dh):
    # (nhead*batch, seq, dh) -> (batch*seq, nhead*dh): one lane-concat, feeds ONE out-proj matmul.
    return jnp.concatenate(
        [o_bh[h * batch:(h + 1) * batch].reshape(batch * seq, dh) for h in range(nhead)],
        axis=-1)


def _attention(q2, kv2, batch, sq, sk, nhead, dh, mask_bh, wo_bf16, bo):
    # q2: (B*Sq, D) f32, ALREADY scaled by 1/sqrt(dh) (folded into the Q projection weights/bias).
    # kv2: (B*Sk, 2D) f32 (K columns then V columns).
    # mask_bh: (nhead*B, Sq, Sk) additive f32 — broadcast hoisted at kernel entry.
    # wo_bf16: (D, D) pre-transposed out-projection, bo: (1, D) f32.
    d = nhead * dh
    qb = q2.astype(BF16)                          # one cast each for Q and K/V
    kvb = kv2.astype(BF16)
    qh = _split_heads(qb, batch, sq, nhead, dh)
    kh = _split_heads(kvb[:, :d], batch, sk, nhead, dh)
    vh = _split_heads(kvb[:, d:], batch, sk, nhead, dh)
    # batched over the merged (head*batch) axis -> single dot_general per einsum
    s = jnp.einsum("bqd,bkd->bqk", qh, kh, preferred_element_type=jnp.float32)
    s = s + mask_bh
    s = s - jnp.max(s, axis=-1, keepdims=True)    # safe: causal/zero masks keep the row max finite
    p = jnp.exp(s)
    p = p * pl.reciprocal(jnp.sum(p, axis=-1, keepdims=True), approx=True)
    o = jnp.einsum("bqk,bkd->bqd", p.astype(BF16), vh, preferred_element_type=jnp.float32)
    o2 = _merge_heads(o, batch, sq, nhead, dh)    # (B*Sq, D) f32
    return _mm(o2, wo_bf16, bo)                   # single K=D out-projection matmul


# ----------------------------- fused full-model Pallas kernel -----------------------------

def _fused_kernel(nhead, num_layers, batch,
                  srcx_ref, tgtx_ref, smask_ref, tmask_ref, mmask_ref,
                  enc_wqkv_ref, enc_wo_ref, enc_w1_ref, enc_w2_ref, enc_vec_ref,
                  dec_wqkv_ref, dec_wo_ref, dec_caq_ref, dec_cakv_ref, dec_cao_ref,
                  dec_w1_ref, dec_w2_ref, dec_vec_ref,
                  enc_norm_ref, dec_norm_ref, fcw_ref, fcb_ref,
                  out_ref):
    d = srcx_ref.shape[1]
    dh = d // nhead
    ss = srcx_ref.shape[0] // batch
    st = tgtx_ref.shape[0] // batch
    dff = enc_w1_ref.shape[2]
    bh = nhead * batch

    # Hoisted additive-mask broadcasts: computed once, shared by every layer and head.
    smask_bh = jnp.broadcast_to(smask_ref[...][None, :, :], (bh, ss, ss))
    tmask_bh = jnp.broadcast_to(tmask_ref[...][None, :, :], (bh, st, st))
    mmask_bh = jnp.broadcast_to(mmask_ref[...][None, :, :], (bh, st, ss))

    def vrow(vec, fields, name, width):
        i = fields.index(name)
        return vec[i:i + 1, :width]               # (1, width) f32

    # ----- encoder stack: activations stay VMEM/vreg resident for the whole stack -----
    x = srcx_ref[...]                             # (B*Ss, D) f32
    for l in range(num_layers):                   # static layer loop over stacked weights
        vec = enc_vec_ref[l]                      # (NVEC_ENC, Dmax) f32
        qkv = _mm(x, enc_wqkv_ref[l], vrow(vec, ENC_VEC_FIELDS, "bqkv", 3 * d))
        sa = _attention(qkv[:, :d], qkv[:, d:], batch, ss, ss, nhead, dh, smask_bh,
                        enc_wo_ref[l], vrow(vec, ENC_VEC_FIELDS, "bo", d))
        x = _layer_norm(x + sa, vrow(vec, ENC_VEC_FIELDS, "ln1_g", d),
                        vrow(vec, ENC_VEC_FIELDS, "ln1_b", d))
        h = jnp.maximum(_mm(x, enc_w1_ref[l], vrow(vec, ENC_VEC_FIELDS, "b1", dff)), 0.0)
        x = _layer_norm(x + _mm(h, enc_w2_ref[l], vrow(vec, ENC_VEC_FIELDS, "b2", d)),
                        vrow(vec, ENC_VEC_FIELDS, "ln2_g", d),
                        vrow(vec, ENC_VEC_FIELDS, "ln2_b", d))
    mem = _layer_norm(x, enc_norm_ref[0:1, :], enc_norm_ref[1:2, :])   # final encoder LayerNorm
    mem_bf = mem.astype(BF16)                     # cast encoder memory once; reused by every layer

    # ----- decoder stack: memory never leaves VMEM -----
    y = tgtx_ref[...]                             # (B*St, D) f32
    for l in range(num_layers):
        vec = dec_vec_ref[l]                      # (NVEC_DEC, Dmax) f32
        # masked self-attention
        qkv = _mm(y, dec_wqkv_ref[l], vrow(vec, DEC_VEC_FIELDS, "sa_bqkv", 3 * d))
        sa = _attention(qkv[:, :d], qkv[:, d:], batch, st, st, nhead, dh, tmask_bh,
                        dec_wo_ref[l], vrow(vec, DEC_VEC_FIELDS, "sa_bo", d))
        y = _layer_norm(y + sa, vrow(vec, DEC_VEC_FIELDS, "ln1_g", d),
                        vrow(vec, DEC_VEC_FIELDS, "ln1_b", d))
        # cross-attention (Q from decoder state, K/V from encoder memory)
        q = _mm(y, dec_caq_ref[l], vrow(vec, DEC_VEC_FIELDS, "ca_bq", d))
        kv = _mm(mem_bf, dec_cakv_ref[l], vrow(vec, DEC_VEC_FIELDS, "ca_bkv", 2 * d))
        ca = _attention(q, kv, batch, st, ss, nhead, dh, mmask_bh,
                        dec_cao_ref[l], vrow(vec, DEC_VEC_FIELDS, "ca_bo", d))
        y = _layer_norm(y + ca, vrow(vec, DEC_VEC_FIELDS, "ln2_g", d),
                        vrow(vec, DEC_VEC_FIELDS, "ln2_b", d))
        # feed-forward
        h = jnp.maximum(_mm(y, dec_w1_ref[l], vrow(vec, DEC_VEC_FIELDS, "b1", dff)), 0.0)
        y = _layer_norm(y + _mm(h, dec_w2_ref[l], vrow(vec, DEC_VEC_FIELDS, "b2", d)),
                        vrow(vec, DEC_VEC_FIELDS, "ln3_g", d),
                        vrow(vec, DEC_VEC_FIELDS, "ln3_b", d))

    y = _layer_norm(y, dec_norm_ref[0:1, :], dec_norm_ref[1:2, :])     # final decoder LayerNorm
    out_ref[...] = _mm(y, fcw_ref[...], fcb_ref[...])                  # lane-dense (B*St, Vpad)


# ----------------------------- Pallas wrapper -----------------------------

def math_solver_forward(pp, src, tgt, src_mask=None, tgt_mask=None, memory_mask=None):
    """src, tgt: (batch, seq) int32 token IDs -> logits (batch, tgt_seq, vocab)."""
    b, ss = src.shape
    st = tgt.shape[1]
    d = pp["d_model"]
    vpad = pp["fc_w"].shape[1]

    # Embedding + positional encoding + (B*S, D) reshape are cheap XLA-side layout plumbing.
    src_x = (jnp.take(pp["src_embedding"], src, axis=0)
             + pp["pe"][None, :ss]).astype(jnp.float32).reshape(b * ss, d)
    tgt_x = (jnp.take(pp["tgt_embedding"], tgt, axis=0)
             + pp["pe"][None, :st]).astype(jnp.float32).reshape(b * st, d)

    zeros = lambda r, c: jnp.zeros((r, c), jnp.float32)
    src_mask = zeros(ss, ss) if src_mask is None else src_mask.astype(jnp.float32)
    tgt_mask = zeros(st, st) if tgt_mask is None else tgt_mask.astype(jnp.float32)
    memory_mask = zeros(st, ss) if memory_mask is None else memory_mask.astype(jnp.float32)

    inputs = [src_x, tgt_x, src_mask, tgt_mask, memory_mask,
              pp["enc"]["wqkv"], pp["enc"]["wo"], pp["enc"]["w1"], pp["enc"]["w2"], pp["enc"]["vec"],
              pp["dec"]["wqkv"], pp["dec"]["wo"], pp["dec"]["caq"], pp["dec"]["cakv"], pp["dec"]["cao"],
              pp["dec"]["w1"], pp["dec"]["w2"], pp["dec"]["vec"],
              pp["enc_norm"], pp["dec_norm"], pp["fc_w"], pp["fc_b"]]

    # Explicit scoped-VMEM budget (all weights + activations are resident). Demo fits the default;
    # large configs should switch to layer-streaming (see TODO at top) rather than raising this.
    need = sum(int(a.size) * a.dtype.itemsize for a in inputs) + b * st * vpad * 4
    vmem_limit = int(min(64 * 2**20, max(32 * 2**20, 2 * need)))

    kernel = functools.partial(_fused_kernel, pp["nhead"], pp["num_layers"], b)
    logits = pl.pallas_call(
        kernel,
        out_shape=jax.ShapeDtypeStruct((b * st, vpad), jnp.float32),
        in_specs=[VMEM] * len(inputs),
        out_specs=VMEM,
        compiler_params=pltpu.CompilerParams(vmem_limit_bytes=vmem_limit),
    )(*inputs)
    return logits.reshape(b, st, vpad)[..., :pp["vocab_size"]]


# ----------------------------- parameters (torch layout) + one-time prep -----------------------------

def positional_encoding_table(max_len, d_model):
    position = jnp.arange(max_len, dtype=jnp.float32)[:, None]
    div_term = jnp.exp(jnp.arange(0, d_model, 2, dtype=jnp.float32)
                       * (-jnp.log(jnp.float32(10000.0)) / d_model))
    pe = jnp.zeros((max_len, d_model), jnp.float32)
    pe = pe.at[:, 0::2].set(jnp.sin(position * div_term))
    pe = pe.at[:, 1::2].set(jnp.cos(position * div_term))
    return pe


def init_params(key, vocab_size, d_model, nhead, num_layers, dim_feedforward, max_len):
    keys = iter(jax.random.split(key, 4096))

    def xavier(shape):
        fan_out, fan_in = shape[0], shape[1]
        limit = math.sqrt(6.0 / (fan_in + fan_out))
        return jax.random.uniform(next(keys), shape, jnp.float32, -limit, limit)

    def mha_params():
        return {
            "in_proj_weight": xavier((3 * d_model, d_model)),
            "in_proj_bias": jnp.zeros((3 * d_model,), jnp.float32),
            "out_proj_weight": xavier((d_model, d_model)),
            "out_proj_bias": jnp.zeros((d_model,), jnp.float32),
        }

    def enc_layer_params():
        return {
            "self_attn": mha_params(),
            "linear1_w": xavier((dim_feedforward, d_model)),
            "linear1_b": jnp.zeros((dim_feedforward,), jnp.float32),
            "linear2_w": xavier((d_model, dim_feedforward)),
            "linear2_b": jnp.zeros((d_model,), jnp.float32),
            "norm1_w": jnp.ones((d_model,), jnp.float32),
            "norm1_b": jnp.zeros((d_model,), jnp.float32),
            "norm2_w": jnp.ones((d_model,), jnp.float32),
            "norm2_b": jnp.zeros((d_model,), jnp.float32),
        }

    def dec_layer_params():
        p = enc_layer_params()
        p["cross_attn"] = mha_params()
        p["norm3_w"] = jnp.ones((d_model,), jnp.float32)
        p["norm3_b"] = jnp.zeros((d_model,), jnp.float32)
        return p

    return {
        "src_embedding": xavier((vocab_size, d_model)),
        "tgt_embedding": xavier((vocab_size, d_model)),
        "pe": positional_encoding_table(max_len, d_model),
        "encoder_layers": [enc_layer_params() for _ in range(num_layers)],
        "decoder_layers": [dec_layer_params() for _ in range(num_layers)],
        "enc_norm_w": jnp.ones((d_model,), jnp.float32),
        "enc_norm_b": jnp.zeros((d_model,), jnp.float32),
        "dec_norm_w": jnp.ones((d_model,), jnp.float32),
        "dec_norm_b": jnp.zeros((d_model,), jnp.float32),
        "fc_out_w": xavier((vocab_size, d_model)),
        "fc_out_b": jnp.zeros((vocab_size,), jnp.float32),
    }


def prepare_params(raw, d_model, nhead, num_layers, vocab_size, dim_feedforward, lane=128):
    """One-time prep: pre-transpose weights to (Din, Dout), fold 1/sqrt(dh) into Q, cast matmul
    weights to bf16, stack per-layer params along a leading layer axis, pack all per-layer
    bias/LayerNorm vectors into one bundle per stack, lane-pad the vocab projection."""
    dh = d_model // nhead
    scale = 1.0 / math.sqrt(dh)
    dmax = max(3 * d_model, dim_feedforward)

    def padded_row(v):
        return jnp.zeros((dmax,), jnp.float32).at[:v.shape[0]].set(v.astype(jnp.float32))

    def split_in_proj(p):
        w, b = p["in_proj_weight"], p["in_proj_bias"]
        wq, wk, wv = w[:d_model], w[d_model:2 * d_model], w[2 * d_model:]
        bq, bk, bv = b[:d_model], b[d_model:2 * d_model], b[2 * d_model:]
        return (wq * scale, wk, wv), (bq * scale, bk, bv)

    def prep_enc_layer(lp):
        (wq, wk, wv), (bq, bk, bv) = split_in_proj(lp["self_attn"])
        vec = jnp.stack([
            padded_row(jnp.concatenate([bq, bk, bv])),
            padded_row(lp["self_attn"]["out_proj_bias"]),
            padded_row(lp["linear1_b"]),
            padded_row(lp["linear2_b"]),
            padded_row(lp["norm1_w"]), padded_row(lp["norm1_b"]),
            padded_row(lp["norm2_w"]), padded_row(lp["norm2_b"]),
        ], axis=0)                                                   # rows == ENC_VEC_FIELDS
        return {
            "wqkv": jnp.concatenate([wq, wk, wv], axis=0).T.astype(BF16),   # (D, 3D)
            "wo": lp["self_attn"]["out_proj_weight"].T.astype(BF16),        # (D, D)
            "w1": lp["linear1_w"].T.astype(BF16),                           # (D, DFF)
            "w2": lp["linear2_w"].T.astype(BF16),                           # (DFF, D)
            "vec": vec,
        }

    def prep_dec_layer(lp):
        (swq, swk, swv), (sbq, sbk, sbv) = split_in_proj(lp["self_attn"])
        (cwq, cwk, cwv), (cbq, cbk, cbv) = split_in_proj(lp["cross_attn"])
        vec = jnp.stack([
            padded_row(jnp.concatenate([sbq, sbk, sbv])),
            padded_row(lp["self_attn"]["out_proj_bias"]),
            padded_row(cbq),
            padded_row(jnp.concatenate([cbk, cbv])),
            padded_row(lp["cross_attn"]["out_proj_bias"]),
            padded_row(lp["linear1_b"]),
            padded_row(lp["linear2_b"]),
            padded_row(lp["norm1_w"]), padded_row(lp["norm1_b"]),
            padded_row(lp["norm2_w"]), padded_row(lp["norm2_b"]),
            padded_row(lp["norm3_w"]), padded_row(lp["norm3_b"]),
        ], axis=0)                                                   # rows == DEC_VEC_FIELDS
        return {
            "wqkv": jnp.concatenate([swq, swk, swv], axis=0).T.astype(BF16),   # (D, 3D)
            "wo": lp["self_attn"]["out_proj_weight"].T.astype(BF16),           # (D, D)
            "caq": cwq.T.astype(BF16),                                         # (D, D)
            "cakv": jnp.concatenate([cwk, cwv], axis=0).T.astype(BF16),        # (D, 2D)
            "cao": lp["cross_attn"]["out_proj_weight"].T.astype(BF16),         # (D, D)
            "w1": lp["linear1_w"].T.astype(BF16),
            "w2": lp["linear2_w"].T.astype(BF16),
            "vec": vec,
        }

    def stack(dicts):
        return {k: jnp.stack([d_[k] for d_ in dicts], axis=0) for k in dicts[0]}

    vpad = ((vocab_size + lane - 1) // lane) * lane
    fc_w = jnp.zeros((d_model, vpad), jnp.float32).at[:, :vocab_size].set(raw["fc_out_w"].T)
    fc_b = jnp.zeros((1, vpad), jnp.float32).at[0, :vocab_size].set(raw["fc_out_b"])

    return {
        "nhead": nhead, "num_layers": num_layers, "d_model": d_model, "vocab_size": vocab_size,
        "src_embedding": raw["src_embedding"], "tgt_embedding": raw["tgt_embedding"],
        "pe": raw["pe"],
        "enc": stack([prep_enc_layer(lp) for lp in raw["encoder_layers"]]),
        "dec": stack([prep_dec_layer(lp) for lp in raw["decoder_layers"]]),
        "enc_norm": jnp.stack([raw["enc_norm_w"], raw["enc_norm_b"]], axis=0),   # (2, D)
        "dec_norm": jnp.stack([raw["dec_norm_w"], raw["dec_norm_b"]], axis=0),   # (2, D)
        "fc_w": fc_w.astype(BF16), "fc_b": fc_b,
    }


# ----------------------------- pure-JAX f32 reference (torch weight layout) -----------------------------

def _ref_ln(x, g, b):
    mu = x.mean(-1, keepdims=True)
    var = ((x - mu) ** 2).mean(-1, keepdims=True)
    return (x - mu) / jnp.sqrt(var + LN_EPS) * g + b


def _ref_mha(xq, xkv, p, nhead, mask):
    b, sq, d = xq.shape
    sk = xkv.shape[1]
    dh = d // nhead
    w, bias = p["in_proj_weight"], p["in_proj_bias"]
    q = xq @ w[:d].T + bias[:d]
    k = xkv @ w[d:2 * d].T + bias[d:2 * d]
    v = xkv @ w[2 * d:].T + bias[2 * d:]
    heads = lambda t, s: t.reshape(b, s, nhead, dh).transpose(0, 2, 1, 3)
    qh, kh, vh = heads(q, sq), heads(k, sk), heads(v, sk)
    s_ = jnp.einsum("bhqd,bhkd->bhqk", qh, kh) / math.sqrt(dh) + mask[None, None]
    p_ = jax.nn.softmax(s_, axis=-1)
    o = jnp.einsum("bhqk,bhkd->bhqd", p_, vh).transpose(0, 2, 1, 3).reshape(b, sq, d)
    return o @ p["out_proj_weight"].T + p["out_proj_bias"]


def reference_forward(raw, src, tgt, nhead, src_mask, tgt_mask, mem_mask):
    pe = raw["pe"]
    x = jnp.take(raw["src_embedding"], src, axis=0) + pe[None, :src.shape[1]]
    for lp in raw["encoder_layers"]:
        x = _ref_ln(x + _ref_mha(x, x, lp["self_attn"], nhead, src_mask), lp["norm1_w"], lp["norm1_b"])
        h = jnp.maximum(x @ lp["linear1_w"].T + lp["linear1_b"], 0.0)
        x = _ref_ln(x + (h @ lp["linear2_w"].T + lp["linear2_b"]), lp["norm2_w"], lp["norm2_b"])
    mem = _ref_ln(x, raw["enc_norm_w"], raw["enc_norm_b"])
    y = jnp.take(raw["tgt_embedding"], tgt, axis=0) + pe[None, :tgt.shape[1]]
    for lp in raw["decoder_layers"]:
        y = _ref_ln(y + _ref_mha(y, y, lp["self_attn"], nhead, tgt_mask), lp["norm1_w"], lp["norm1_b"])
        y = _ref_ln(y + _ref_mha(y, mem, lp["cross_attn"], nhead, mem_mask), lp["norm2_w"], lp["norm2_b"])
        h = jnp.maximum(y @ lp["linear1_w"].T + lp["linear1_b"], 0.0)
        y = _ref_ln(y + (h @ lp["linear2_w"].T + lp["linear2_b"]), lp["norm3_w"], lp["norm3_b"])
    y = _ref_ln(y, raw["dec_norm_w"], raw["dec_norm_b"])
    return y @ raw["fc_out_w"].T + raw["fc_out_b"]


# ----------------------------- main -----------------------------

if __name__ == "__main__":
    VOCAB = 50
    D_MODEL = 32
    NHEAD = 4
    NUM_LAYERS = 2          # module default is 10; 2 layers keep the demo small (same structure)
    DIM_FF = 64
    MAX_LEN = 64
    BATCH, SEQ = 2, 8

    root = jax.random.PRNGKey(0)
    k_params, k_src, k_tgt = jax.random.split(root, 3)
    raw = init_params(k_params, VOCAB, D_MODEL, NHEAD, NUM_LAYERS, DIM_FF, MAX_LEN)
    pp = prepare_params(raw, D_MODEL, NHEAD, NUM_LAYERS, VOCAB, DIM_FF)

    src = jax.random.randint(k_src, (BATCH, SEQ), 0, VOCAB, dtype=jnp.int32)
    tgt = jax.random.randint(k_tgt, (BATCH, SEQ), 0, VOCAB, dtype=jnp.int32)

    # causal target mask, same as torch.nn.Transformer.generate_square_subsequent_mask
    tgt_mask = jnp.where(jnp.arange(SEQ)[None, :] > jnp.arange(SEQ)[:, None],
                         -jnp.inf, 0.0).astype(jnp.float32)

    fwd = jax.jit(functools.partial(math_solver_forward, pp))
    logits = jax.block_until_ready(fwd(src, tgt, tgt_mask=tgt_mask))

    assert logits.shape == (BATCH, SEQ, VOCAB), logits.shape
    assert bool(jnp.all(jnp.isfinite(logits)))

    # end-to-end check of the fused bf16 kernel against a pure-JAX f32 reference (torch layout)
    zeros_ss = jnp.zeros((SEQ, SEQ), jnp.float32)
    ref = reference_forward(raw, src, tgt, NHEAD, zeros_ss, tgt_mask, zeros_ss)
    max_err = float(jnp.max(jnp.abs(logits - ref)))
    assert max_err < 0.15, f"max abs error vs f32 reference too large: {max_err}"

    print("KERNEL_OK")
</pallas_src>

<mosaic_0001>
module attributes {stable_mosaic.version = 11 : i64} {
  func.func @_fused_kernel(%arg0: memref<16x32xf32, #tpu.memory_space<vmem>>, %arg1: memref<16x32xf32, #tpu.memory_space<vmem>>, %arg2: memref<8x8xf32, #tpu.memory_space<vmem>>, %arg3: memref<8x8xf32, #tpu.memory_space<vmem>>, %arg4: memref<8x8xf32, #tpu.memory_space<vmem>>, %arg5: memref<2x32x96xbf16, #tpu.memory_space<vmem>>, %arg6: memref<2x32x32xbf16, #tpu.memory_space<vmem>>, %arg7: memref<2x32x64xbf16, #tpu.memory_space<vmem>>, %arg8: memref<2x64x32xbf16, #tpu.memory_space<vmem>>, %arg9: memref<2x8x96xf32, #tpu.memory_space<vmem>>, %arg10: memref<2x32x96xbf16, #tpu.memory_space<vmem>>, %arg11: memref<2x32x32xbf16, #tpu.memory_space<vmem>>, %arg12: memref<2x32x32xbf16, #tpu.memory_space<vmem>>, %arg13: memref<2x32x64xbf16, #tpu.memory_space<vmem>>, %arg14: memref<2x32x32xbf16, #tpu.memory_space<vmem>>, %arg15: memref<2x32x64xbf16, #tpu.memory_space<vmem>>, %arg16: memref<2x64x32xbf16, #tpu.memory_space<vmem>>, %arg17: memref<2x13x96xf32, #tpu.memory_space<vmem>>, %arg18: memref<2x32xf32, #tpu.memory_space<vmem>>, %arg19: memref<2x32xf32, #tpu.memory_space<vmem>>, %arg20: memref<32x128xbf16, #tpu.memory_space<vmem>>, %arg21: memref<1x128xf32, #tpu.memory_space<vmem>>, %arg22: memref<16x128xf32, #tpu.memory_space<vmem>>) attributes {dimension_semantics = [], scalar_prefetch = 0 : i64, scratch_operands = 0 : i64, tpu.core_type = #tpu.core_type<tc>} {
    %c0 = arith.constant 0 : index
    %c0_0 = arith.constant 0 : index
    %0 = vector.load %arg2[%c0, %c0_0] : memref<8x8xf32, #tpu.memory_space<vmem>>, vector<8x8xf32>
    %1 = vector.shape_cast %0 : vector<8x8xf32> to vector<1x8x8xf32>
    %2 = vector.shape_cast %1 : vector<1x8x8xf32> to vector<1x8x8xf32>
    %3 = vector.broadcast %2 : vector<1x8x8xf32> to vector<8x8x8xf32>
    %c0_1 = arith.constant 0 : index
    %c0_2 = arith.constant 0 : index
    %4 = vector.load %arg3[%c0_1, %c0_2] : memref<8x8xf32, #tpu.memory_space<vmem>>, vector<8x8xf32>
    %5 = vector.shape_cast %4 : vector<8x8xf32> to vector<1x8x8xf32>
    %6 = vector.shape_cast %5 : vector<1x8x8xf32> to vector<1x8x8xf32>
    %7 = vector.broadcast %6 : vector<1x8x8xf32> to vector<8x8x8xf32>
    %c0_3 = arith.constant 0 : index
    %c0_4 = arith.constant 0 : index
    %8 = vector.load %arg4[%c0_3, %c0_4] : memref<8x8xf32, #tpu.memory_space<vmem>>, vector<8x8xf32>
    %9 = vector.shape_cast %8 : vector<8x8xf32> to vector<1x8x8xf32>
    %10 = vector.shape_cast %9 : vector<1x8x8xf32> to vector<1x8x8xf32>
    %11 = vector.broadcast %10 : vector<1x8x8xf32> to vector<8x8x8xf32>
    %c0_5 = arith.constant 0 : index
    %c0_6 = arith.constant 0 : index
    %12 = vector.load %arg0[%c0_5, %c0_6] : memref<16x32xf32, #tpu.memory_space<vmem>>, vector<16x32xf32>
    %c0_7 = arith.constant 0 : index
    %c0_8 = arith.constant 0 : index
    %c0_9 = arith.constant 0 : index
    %13 = vector.load %arg9[%c0_7, %c0_8, %c0_9] : memref<2x8x96xf32, #tpu.memory_space<vmem>>, vector<1x8x96xf32>
    %14 = vector.shape_cast %13 : vector<1x8x96xf32> to vector<8x96xf32>
    %c0_10 = arith.constant 0 : index
    %c0_11 = arith.constant 0 : index
    %c0_12 = arith.constant 0 : index
    %15 = vector.load %arg5[%c0_10, %c0_11, %c0_12] : memref<2x32x96xbf16, #tpu.memory_space<vmem>>, vector<1x32x96xbf16>
    %16 = vector.shape_cast %15 : vector<1x32x96xbf16> to vector<32x96xbf16>
    %17 = vector.extract_strided_slice %14 {offsets = [0, 0], sizes = [1, 96], strides = [1, 1]} : vector<8x96xf32> to vector<1x96xf32>
    %18 = arith.truncf %12 : vector<16x32xf32> to vector<16x32xbf16>
    %cst = arith.constant dense<0.000000e+00> : vector<16x96xf32>
    %19 = tpu.matmul %18, %16, %cst {dimension_numbers = #tpu.dot_dimension_numbers<[1], [0], [0], [1], [0, 0, 1, 1], [], []>} : vector<16x32xbf16>, vector<32x96xbf16>, vector<16x96xf32> -> vector<16x96xf32>
    %20 = vector.broadcast %17 : vector<1x96xf32> to vector<16x96xf32>
    %21 = arith.addf %19, %20 : vector<16x96xf32>
    %22 = vector.extract_strided_slice %21 {offsets = [0, 0], sizes = [16, 32], strides = [1, 1]} : vector<16x96xf32> to vector<16x32xf32>
    %23 = vector.extract_strided_slice %21 {offsets = [0, 32], sizes = [16, 64], strides = [1, 1]} : vector<16x96xf32> to vector<16x64xf32>
    %c0_13 = arith.constant 0 : index
    %c0_14 = arith.constant 0 : index
    %c0_15 = arith.constant 0 : index
    %24 = vector.load %arg6[%c0_13, %c0_14, %c0_15] : memref<2x32x32xbf16, #tpu.memory_space<vmem>>, vector<1x32x32xbf16>
    %25 = vector.shape_cast %24 : vector<1x32x32xbf16> to vector<32x32xbf16>
    %26 = vector.extract_strided_slice %14 {offsets = [1, 0], sizes = [1, 32], strides = [1, 1]} : vector<8x96xf32> to vector<1x32xf32>
    %27 = arith.truncf %22 : vector<16x32xf32> to vector<16x32xbf16>
    %28 = arith.truncf %23 : vector<16x64xf32> to vector<16x64xbf16>
    %29 = vector.extract_strided_slice %27 {offsets = [0, 0], sizes = [16, 8], strides = [1, 1]} : vector<16x32xbf16> to vector<16x8xbf16>
    %30 = vector.shape_cast %29 : vector<16x8xbf16> to vector<2x8x8xbf16>
    %31 = vector.extract_strided_slice %27 {offsets = [0, 8], sizes = [16, 8], strides = [1, 1]} : vector<16x32xbf16> to vector<16x8xbf16>
    %32 = vector.shape_cast %31 : vector<16x8xbf16> to vector<2x8x8xbf16>
    %33 = vector.extract_strided_slice %27 {offsets = [0, 16], sizes = [16, 8], strides = [1, 1]} : vector<16x32xbf16> to vector<16x8xbf16>
    %34 = vector.shape_cast %33 : vector<16x8xbf16> to vector<2x8x8xbf16>
    %35 = vector.extract_strided_slice %27 {offsets = [0, 24], sizes = [16, 8], strides = [1, 1]} : vector<16x32xbf16> to vector<16x8xbf16>
    %36 = vector.shape_cast %35 : vector<16x8xbf16> to vector<2x8x8xbf16>
    %37 = tpu.concatenate %30, %32, %34, %36 in 0 : vector<2x8x8xbf16>, vector<2x8x8xbf16>, vector<2x8x8xbf16>, vector<2x8x8xbf16> -> vector<8x8x8xbf16>
    %38 = vector.extract_strided_slice %28 {offsets = [0, 0], sizes = [16, 32], strides = [1, 1]} : vector<16x64xbf16> to vector<16x32xbf16>
    %39 = vector.extract_strided_slice %38 {offsets = [0, 0], sizes = [16, 8], strides = [1, 1]} : vector<16x32xbf16> to vector<16x8xbf16>
    %40 = vector.shape_cast %39 : vector<16x8xbf16> to vector<2x8x8xbf16>
    %41 = vector.extract_strided_slice %38 {offsets = [0, 8], sizes = [16, 8], strides = [1, 1]} : vector<16x32xbf16> to vector<16x8xbf16>
    %42 = vector.shape_cast %41 : vector<16x8xbf16> to vector<2x8x8xbf16>
    %43 = vector.extract_strided_slice %38 {offsets = [0, 16], sizes = [16, 8], strides = [1, 1]} : vector<16x32xbf16> to vector<16x8xbf16>
    %44 = vector.shape_cast %43 : vector<16x8xbf16> to vector<2x8x8xbf16>
    %45 = vector.extract_strided_slice %38 {offsets = [0, 24], sizes = [16, 8], strides = [1, 1]} : vector<16x32xbf16> to vector<16x8xbf16>
    %46 = vector.shape_cast %45 : vector<16x8xbf16> to vector<2x8x8xbf16>
    %47 = tpu.concatenate %40, %42, %44, %46 in 0 : vector<2x8x8xbf16>, vector<2x8x8xbf16>, vector<2x8x8xbf16>, vector<2x8x8xbf16> -> vector<8x8x8xbf16>
    %48 = vector.extract_strided_slice %28 {offsets = [0, 32], sizes = [16, 32], strides = [1, 1]} : vector<16x64xbf16> to vector<16x32xbf16>
    %49 = vector.extract_strided_slice %48 {offsets = [0, 0], sizes = [16, 8], strides = [1, 1]} : vector<16x32xbf16> to vector<16x8xbf16>
    %50 = vector.shape_cast %49 : vector<16x8xbf16> to vector<2x8x8xbf16>
    %51 = vector.extract_strided_slice %48 {offsets = [0, 8], sizes = [16, 8], strides = [1, 1]} : vector<16x32xbf16> to vector<16x8xbf16>
    %52 = vector.shape_cast %51 : vector<16x8xbf16> to vector<2x8x8xbf16>
    %53 = vector.extract_strided_slice %48 {offsets = [0, 16], sizes = [16, 8], strides = [1, 1]} : vector<16x32xbf16> to vector<16x8xbf16>
    %54 = vector.shape_cast %53 : vector<16x8xbf16> to vector<2x8x8xbf16>
    %55 = vector.extract_strided_slice %48 {offsets = [0, 24], sizes = [16, 8], strides = [1, 1]} : vector<16x32xbf16> to vector<16x8xbf16>
    %56 = vector.shape_cast %55 : vector<16x8xbf16> to vector<2x8x8xbf16>
    %57 = tpu.concatenate %50, %52, %54, %56 in 0 : vector<2x8x8xbf16>, vector<2x8x8xbf16>, vector<2x8x8xbf16>, vector<2x8x8xbf16> -> vector<8x8x8xbf16>
    "tpu.trace_start"() <{level = 10 : i32, message = "bqd,bkd->bqk"}> : () -> ()
    %cst_16 = arith.constant dense<0.000000e+00> : vector<8x8x8xf32>
    %58 = tpu.matmul %37, %47, %cst_16 {dimension_numbers = #tpu.dot_dimension_numbers<[2], [2], [1], [1], [0, 0, 0, 1, 1, 1], [0], [0]>} : vector<8x8x8xbf16>, vector<8x8x8xbf16>, vector<8x8x8xf32> -> vector<8x8x8xf32>
    "tpu.trace_stop"() : () -> ()
    %59 = arith.addf %58, %3 : vector<8x8x8xf32>
    %cst_17 = arith.constant dense<0xFF800000> : vector<8x8xf32>
    %60 = vector.multi_reduction <maximumf>, %59, %cst_17 [2] : vector<8x8x8xf32> to vector<8x8xf32>
    %61 = vector.shape_cast %60 : vector<8x8xf32> to vector<8x8x1xf32>
    %62 = vector.broadcast %61 : vector<8x8x1xf32> to vector<8x8x8xf32>
    %63 = arith.subf %59, %62 : vector<8x8x8xf32>
    %64 = math.exp %63 : vector<8x8x8xf32>
    %cst_18 = arith.constant dense<0.000000e+00> : vector<8x8xf32>
    %65 = vector.multi_reduction <add>, %64, %cst_18 [2] : vector<8x8x8xf32> to vector<8x8xf32>
    %66 = vector.shape_cast %65 : vector<8x8xf32> to vector<8x8x1xf32>
    %67 = tpu.reciprocal %66 {approx = true} : vector<8x8x1xf32> -> vector<8x8x1xf32>
    %68 = vector.broadcast %67 : vector<8x8x1xf32> to vector<8x8x8xf32>
    %69 = arith.mulf %64, %68 : vector<8x8x8xf32>
    %70 = arith.truncf %69 : vector<8x8x8xf32> to vector<8x8x8xbf16>
    "tpu.trace_start"() <{level = 10 : i32, message = "bqk,bkd->bqd"}> : () -> ()
    %cst_19 = arith.constant dense<0.000000e+00> : vector<8x8x8xf32>
    %71 = tpu.matmul %70, %57, %cst_19 {dimension_numbers = #tpu.dot_dimension_numbers<[2], [1], [1], [2], [0, 0, 0, 1, 1, 2], [0], [0]>} : vector<8x8x8xbf16>, vector<8x8x8xbf16>, vector<8x8x8xf32> -> vector<8x8x8xf32>
    "tpu.trace_stop"() : () -> ()
    %72 = vector.extract_strided_slice %71 {offsets = [0, 0, 0], sizes = [2, 8, 8], strides = [1, 1, 1]} : vector<8x8x8xf32> to vector<2x8x8xf32>
    %73 = vector.shape_cast %72 : vector<2x8x8xf32> to vector<16x8xf32>
    %74 = vector.extract_strided_slice %71 {offsets = [2, 0, 0], sizes = [2, 8, 8], strides = [1, 1, 1]} : vector<8x8x8xf32> to vector<2x8x8xf32>
    %75 = vector.shape_cast %74 : vector<2x8x8xf32> to vector<16x8xf32>
    %76 = vector.extract_strided_slice %71 {offsets = [4, 0, 0], sizes = [2, 8, 8], strides = [1, 1, 1]} : vector<8x8x8xf32> to vector<2x8x8xf32>
    %77 = vector.shape_cast %76 : vector<2x8x8xf32> to vector<16x8xf32>
    %78 = vector.extract_strided_slice %71 {offsets = [6, 0, 0], sizes = [2, 8, 8], strides = [1, 1, 1]} : vector<8x8x8xf32> to vector<2x8x8xf32>
    %79 = vector.shape_cast %78 : vector<2x8x8xf32> to vector<16x8xf32>
    %80 = tpu.concatenate %73, %75, %77, %79 in 1 : vector<16x8xf32>, vector<16x8xf32>, vector<16x8xf32>, vector<16x8xf32> -> vector<16x32xf32>
    %81 = arith.truncf %80 : vector<16x32xf32> to vector<16x32xbf16>
    %cst_20 = arith.constant dense<0.000000e+00> : vector<16x32xf32>
    %82 = tpu.matmul %81, %25, %cst_20 {dimension_numbers = #tpu.dot_dimension_numbers<[1], [0], [0], [1], [0, 0, 1, 1], [], []>} : vector<16x32xbf16>, vector<32x32xbf16>, vector<16x32xf32> -> vector<16x32xf32>
    %83 = vector.broadcast %26 : vector<1x32xf32> to vector<16x32xf32>
    %84 = arith.addf %82, %83 : vector<16x32xf32>
    %85 = arith.addf %12, %84 : vector<16x32xf32>
    %86 = vector.extract_strided_slice %14 {offsets = [4, 0], sizes = [1, 32], strides = [1, 1]} : vector<8x96xf32> to vector<1x32xf32>
    %87 = vector.extract_strided_slice %14 {offsets = [5, 0], sizes = [1, 32], strides = [1, 1]} : vector<8x96xf32> to vector<1x32xf32>
    %cst_21 = arith.constant dense<0.000000e+00> : vector<16xf32>
    %88 = vector.multi_reduction <add>, %85, %cst_21 [1] : vector<16x32xf32> to vector<16xf32>
    %89 = vector.shape_cast %88 : vector<16xf32> to vector<16x1xf32>
    %cst_22 = arith.constant 3.200000e+01 : f32
    %90 = vector.broadcast %cst_22 : f32 to vector<16x1xf32>
    %91 = arith.divf %89, %90 : vector<16x1xf32>
    %92 = vector.broadcast %91 : vector<16x1xf32> to vector<16x32xf32>
    %93 = arith.subf %85, %92 : vector<16x32xf32>
    %94 = arith.mulf %93, %93 : vector<16x32xf32>
    %cst_23 = arith.constant dense<0.000000e+00> : vector<16xf32>
    %95 = vector.multi_reduction <add>, %94, %cst_23 [1] : vector<16x32xf32> to vector<16xf32>
    %96 = vector.shape_cast %95 : vector<16xf32> to vector<16x1xf32>
    %cst_24 = arith.constant 3.200000e+01 : f32
    %97 = vector.broadcast %cst_24 : f32 to vector<16x1xf32>
    %98 = arith.divf %96, %97 : vector<16x1xf32>
    %99 = vector.broadcast %91 : vector<16x1xf32> to vector<16x32xf32>
    %100 = arith.subf %85, %99 : vector<16x32xf32>
    %cst_25 = arith.constant 9.99999974E-6 : f32
    %101 = vector.broadcast %cst_25 : f32 to vector<16x1xf32>
    %102 = arith.addf %98, %101 : vector<16x1xf32>
    %103 = math.rsqrt %102 : vector<16x1xf32>
    %104 = vector.broadcast %103 : vector<16x1xf32> to vector<16x32xf32>
    %105 = arith.mulf %100, %104 : vector<16x32xf32>
    %106 = vector.broadcast %86 : vector<1x32xf32> to vector<16x32xf32>
    %107 = arith.mulf %105, %106 : vector<16x32xf32>
    %108 = vector.broadcast %87 : vector<1x32xf32> to vector<16x32xf32>
    %109 = arith.addf %107, %108 : vector<16x32xf32>
    %c0_26 = arith.constant 0 : index
    %c0_27 = arith.constant 0 : index
    %c0_28 = arith.constant 0 : index
    %110 = vector.load %arg7[%c0_26, %c0_27, %c0_28] : memref<2x32x64xbf16, #tpu.memory_space<vmem>>, vector<1x32x64xbf16>
    %111 = vector.shape_cast %110 : vector<1x32x64xbf16> to vector<32x64xbf16>
    %112 = vector.extract_strided_slice %14 {offsets = [2, 0], sizes = [1, 64], strides = [1, 1]} : vector<8x96xf32> to vector<1x64xf32>
    %113 = arith.truncf %109 : vector<16x32xf32> to vector<16x32xbf16>
    %cst_29 = arith.constant dense<0.000000e+00> : vector<16x64xf32>
    %114 = tpu.matmul %113, %111, %cst_29 {dimension_numbers = #tpu.dot_dimension_numbers<[1], [0], [0], [1], [0, 0, 1, 1], [], []>} : vector<16x32xbf16>, vector<32x64xbf16>, vector<16x64xf32> -> vector<16x64xf32>
    %115 = vector.broadcast %112 : vector<1x64xf32> to vector<16x64xf32>
    %116 = arith.addf %114, %115 : vector<16x64xf32>
    %cst_30 = arith.constant 0.000000e+00 : f32
    %117 = vector.broadcast %cst_30 : f32 to vector<16x64xf32>
    %118 = arith.maximumf %116, %117 : vector<16x64xf32>
    %c0_31 = arith.constant 0 : index
    %c0_32 = arith.constant 0 : index
    %c0_33 = arith.constant 0 : index
    %119 = vector.load %arg8[%c0_31, %c0_32, %c0_33] : memref<2x64x32xbf16, #tpu.memory_space<vmem>>, vector<1x64x32xbf16>
    %120 = vector.shape_cast %119 : vector<1x64x32xbf16> to vector<64x32xbf16>
    %121 = vector.extract_strided_slice %14 {offsets = [3, 0], sizes = [1, 32], strides = [1, 1]} : vector<8x96xf32> to vector<1x32xf32>
    %122 = arith.truncf %118 : vector<16x64xf32> to vector<16x64xbf16>
    %cst_34 = arith.constant dense<0.000000e+00> : vector<16x32xf32>
    %123 = tpu.matmul %122, %120, %cst_34 {dimension_numbers = #tpu.dot_dimension_numbers<[1], [0], [0], [1], [0, 0, 1, 1], [], []>} : vector<16x64xbf16>, vector<64x32xbf16>, vector<16x32xf32> -> vector<16x32xf32>
    %124 = vector.broadcast %121 : vector<1x32xf32> to vector<16x32xf32>
    %125 = arith.addf %123, %124 : vector<16x32xf32>
    %126 = arith.addf %109, %125 : vector<16x32xf32>
    %127 = vector.extract_strided_slice %14 {offsets = [6, 0], sizes = [1, 32], strides = [1, 1]} : vector<8x96xf32> to vector<1x32xf32>
    %128 = vector.extract_strided_slice %14 {offsets = [7, 0], sizes = [1, 32], strides = [1, 1]} : vector<8x96xf32> to vector<1x32xf32>
    %cst_35 = arith.constant dense<0.000000e+00> : vector<16xf32>
    %129 = vector.multi_reduction <add>, %126, %cst_35 [1] : vector<16x32xf32> to vector<16xf32>
    %130 = vector.shape_cast %129 : vector<16xf32> to vector<16x1xf32>
    %cst_36 = arith.constant 3.200000e+01 : f32
    %131 = vector.broadcast %cst_36 : f32 to vector<16x1xf32>
    %132 = arith.divf %130, %131 : vector<16x1xf32>
    %133 = vector.broadcast %132 : vector<16x1xf32> to vector<16x32xf32>
    %134 = arith.subf %126, %133 : vector<16x32xf32>
    %135 = arith.mulf %134, %134 : vector<16x32xf32>
    %cst_37 = arith.constant dense<0.000000e+00> : vector<16xf32>
    %136 = vector.multi_reduction <add>, %135, %cst_37 [1] : vector<16x32xf32> to vector<16xf32>
    %137 = vector.shape_cast %136 : vector<16xf32> to vector<16x1xf32>
    %cst_38 = arith.constant 3.200000e+01 : f32
    %138 = vector.broadcast %cst_38 : f32 to vector<16x1xf32>
    %139 = arith.divf %137, %138 : vector<16x1xf32>
    %140 = vector.broadcast %132 : vector<16x1xf32> to vector<16x32xf32>
    %141 = arith.subf %126, %140 : vector<16x32xf32>
    %cst_39 = arith.constant 9.99999974E-6 : f32
    %142 = vector.broadcast %cst_39 : f32 to vector<16x1xf32>
    %143 = arith.addf %139, %142 : vector<16x1xf32>
    %144 = math.rsqrt %143 : vector<16x1xf32>
    %145 = vector.broadcast %144 : vector<16x1xf32> to vector<16x32xf32>
    %146 = arith.mulf %141, %145 : vector<16x32xf32>
    %147 = vector.broadcast %127 : vector<1x32xf32> to vector<16x32xf32>
    %148 = arith.mulf %146, %147 : vector<16x32xf32>
    %149 = vector.broadcast %128 : vector<1x32xf32> to vector<16x32xf32>
    %150 = arith.addf %148, %149 : vector<16x32xf32>
    %c1 = arith.constant 1 : index
    %c0_40 = arith.constant 0 : index
    %c0_41 = arith.constant 0 : index
    %151 = vector.load %arg9[%c1, %c0_40, %c0_41] : memref<2x8x96xf32, #tpu.memory_space<vmem>>, vector<1x8x96xf32>
    %152 = vector.shape_cast %151 : vector<1x8x96xf32> to vector<8x96xf32>
    %c1_42 = arith.constant 1 : index
    %c0_43 = arith.constant 0 : index
    %c0_44 = arith.constant 0 : index
    %153 = vector.load %arg5[%c1_42, %c0_43, %c0_44] : memref<2x32x96xbf16, #tpu.memory_space<vmem>>, vector<1x32x96xbf16>
    %154 = vector.shape_cast %153 : vector<1x32x96xbf16> to vector<32x96xbf16>
    %155 = vector.extract_strided_slice %152 {offsets = [0, 0], sizes = [1, 96], strides = [1, 1]} : vector<8x96xf32> to vector<1x96xf32>
    %156 = arith.truncf %150 : vector<16x32xf32> to vector<16x32xbf16>
    %cst_45 = arith.constant dense<0.000000e+00> : vector<16x96xf32>
    %157 = tpu.matmul %156, %154, %cst_45 {dimension_numbers = #tpu.dot_dimension_numbers<[1], [0], [0], [1], [0, 0, 1, 1], [], []>} : vector<16x32xbf16>, vector<32x96xbf16>, vector<16x96xf32> -> vector<16x96xf32>
    %158 = vector.broadcast %155 : vector<1x96xf32> to vector<16x96xf32>
    %159 = arith.addf %157, %158 : vector<16x96xf32>
    %160 = vector.extract_strided_slice %159 {offsets = [0, 0], sizes = [16, 32], strides = [1, 1]} : vector<16x96xf32> to vector<16x32xf32>
    %161 = vector.extract_strided_slice %159 {offsets = [0, 32], sizes = [16, 64], strides = [1, 1]} : vector<16x96xf32> to vector<16x64xf32>
    %c1_46 = arith.constant 1 : index
    %c0_47 = arith.constant 0 : index
    %c0_48 = arith.constant 0 : index
    %162 = vector.load %arg6[%c1_46, %c0_47, %c0_48] : memref<2x32x32xbf16, #tpu.memory_space<vmem>>, vector<1x32x32xbf16>
    %163 = vector.shape_cast %162 : vector<1x32x32xbf16> to vector<32x32xbf16>
    %164 = vector.extract_strided_slice %152 {offsets = [1, 0], sizes = [1, 32], strides = [1, 1]} : vector<8x96xf32> to vector<1x32xf32>
    %165 = arith.truncf %160 : vector<16x32xf32> to vector<16x32xbf16>
    %166 = arith.truncf %161 : vector<16x64xf32> to vector<16x64xbf16>
    %167 = vector.extract_strided_slice %165 {offsets = [0, 0], sizes = [16, 8], strides = [1, 1]} : vector<16x32xbf16> to vector<16x8xbf16>
    %168 = vector.shape_cast %167 : vector<16x8xbf16> to vector<2x8x8xbf16>
    %169 = vector.extract_strided_slice %165 {offsets = [0, 8], sizes = [16, 8], strides = [1, 1]} : vector<16x32xbf16> to vector<16x8xbf16>
    %170 = vector.shape_cast %169 : vector<16x8xbf16> to vector<2x8x8xbf16>
    %171 = vector.extract_strided_slice %165 {offsets = [0, 16], sizes = [16, 8], strides = [1, 1]} : vector<16x32xbf16> to vector<16x8xbf16>
    %172 = vector.shape_cast %171 : vector<16x8xbf16> to vector<2x8x8xbf16>
    %173 = vector.extract_strided_slice %165 {offsets = [0, 24], sizes = [16, 8], strides = [1, 1]} : vector<16x32xbf16> to vector<16x8xbf16>
    %174 = vector.shape_cast %173 : vector<16x8xbf16> to vector<2x8x8xbf16>
    %175 = tpu.concatenate %168, %170, %172, %174 in 0 : vector<2x8x8xbf16>, vector<2x8x8xbf16>, vector<2x8x8xbf16>, vector<2x8x8xbf16> -> vector<8x8x8xbf16>
    %176 = vector.extract_strided_slice %166 {offsets = [0, 0], sizes = [16, 32], strides = [1, 1]} : vector<16x64xbf16> to vector<16x32xbf16>
    %177 = vector.extract_strided_slice %176 {offsets = [0, 0], sizes = [16, 8], strides = [1, 1]} : vector<16x32xbf16> to vector<16x8xbf16>
    %178 = vector.shape_cast %177 : vector<16x8xbf16> to vector<2x8x8xbf16>
    %179 = vector.extract_strided_slice %176 {offsets = [0, 8], sizes = [16, 8], strides = [1, 1]} : vector<16x32xbf16> to vector<16x8xbf16>
    %180 = vector.shape_cast %179 : vector<16x8xbf16> to vector<2x8x8xbf16>
    %181 = vector.extract_strided_slice %176 {offsets = [0, 16], sizes = [16, 8], strides = [1, 1]} : vector<16x32xbf16> to vector<16x8xbf16>
    %182 = vector.shape_cast %181 : vector<16x8xbf16> to vector<2x8x8xbf16>
    %183 = vector.extract_strided_slice %176 {offsets = [0, 24], sizes = [16, 8], strides = [1, 1]} : vector<16x32xbf16> to vector<16x8xbf16>
    %184 = vector.shape_cast %183 : vector<16x8xbf16> to vector<2x8x8xbf16>
    %185 = tpu.concatenate %178, %180, %182, %184 in 0 : vector<2x8x8xbf16>, vector<2x8x8xbf16>, vector<2x8x8xbf16>, vector<2x8x8xbf16> -> vector<8x8x8xbf16>
    %186 = vector.extract_strided_slice %166 {offsets = [0, 32], sizes = [16, 32], strides = [1, 1]} : vector<16x64xbf16> to vector<16x32xbf16>
    %187 = vector.extract_strided_slice %186 {offsets = [0, 0], sizes = [16, 8], strides = [1, 1]} : vector<16x32xbf16> to vector<16x8xbf16>
    %188 = vector.shape_cast %187 : vector<16x8xbf16> to vector<2x8x8xbf16>
    %189 = vector.extract_strided_slice %186 {offsets = [0, 8], sizes = [16, 8], strides = [1, 1]} : vector<16x32xbf16> to vector<16x8xbf16>
    %190 = vector.shape_cast %189 : vector<16x8xbf16> to vector<2x8x8xbf16>
    %191 = vector.extract_strided_slice %186 {offsets = [0, 16], sizes = [16, 8], strides = [1, 1]} : vector<16x32xbf16> to vector<16x8xbf16>
    %192 = vector.shape_cast %191 : vector<16x8xbf16> to vector<2x8x8xbf16>
    %193 = vector.extract_strided_slice %186 {offsets = [0, 24], sizes = [16, 8], strides = [1, 1]} : vector<16x32xbf16> to vector<16x8xbf16>
    %194 = vector.shape_cast %193 : vector<16x8xbf16> to vector<2x8x8xbf16>
    %195 = tpu.concatenate %188, %190, %192, %194 in 0 : vector<2x8x8xbf16>, vector<2x8x8xbf16>, vector<2x8x8xbf16>, vector<2x8x8xbf16> -> vector<8x8x8xbf16>
    "tpu.trace_start"() <{level = 10 : i32, message = "bqd,bkd->bqk"}> : () -> ()
    %cst_49 = arith.constant dense<0.000000e+00> : vector<8x8x8xf32>
    %196 = tpu.matmul %175, %185, %cst_49 {dimension_numbers = #tpu.dot_dimension_numbers<[2], [2], [1], [1], [0, 0, 0, 1, 1, 1], [0], [0]>} : vector<8x8x8xbf16>, vector<8x8x8xbf16>, vector<8x8x8xf32> -> vector<8x8x8xf32>
    "tpu.trace_stop"() : () -> ()
    %197 = arith.addf %196, %3 : vector<8x8x8xf32>
    %cst_50 = arith.constant dense<0xFF800000> : vector<8x8xf32>
    %198 = vector.multi_reduction <maximumf>, %197, %cst_50 [2] : vector<8x8x8xf32> to vector<8x8xf32>
    %199 = vector.shape_cast %198 : vector<8x8xf32> to vector<8x8x1xf32>
    %200 = vector.broadcast %199 : vector<8x8x1xf32> to vector<8x8x8xf32>
    %201 = arith.subf %197, %200 : vector<8x8x8xf32>
    %202 = math.exp %201 : vector<8x8x8xf32>
    %cst_51 = arith.constant dense<0.000000e+00> : vector<8x8xf32>
    %203 = vector.multi_reduction <add>, %202, %cst_51 [2] : vector<8x8x8xf32> to vector<8x8xf32>
    %204 = vector.shape_cast %203 : vector<8x8xf32> to vector<8x8x1xf32>
    %205 = tpu.reciprocal %204 {approx = true} : vector<8x8x1xf32> -> vector<8x8x1xf32>
    %206 = vector.broadcast %205 : vector<8x8x1xf32> to vector<8x8x8xf32>
    %207 = arith.mulf %202, %206 : vector<8x8x8xf32>
    %208 = arith.truncf %207 : vector<8x8x8xf32> to vector<8x8x8xbf16>
    "tpu.trace_start"() <{level = 10 : i32, message = "bqk,bkd->bqd"}> : () -> ()
    %cst_52 = arith.constant dense<0.000000e+00> : vector<8x8x8xf32>
    %209 = tpu.matmul %208, %195, %cst_52 {dimension_numbers = #tpu.dot_dimension_numbers<[2], [1], [1], [2], [0, 0, 0, 1, 1, 2], [0], [0]>} : vector<8x8x8xbf16>, vector<8x8x8xbf16>, vector<8x8x8xf32> -> vector<8x8x8xf32>
    "tpu.trace_stop"() : () -> ()
    %210 = vector.extract_strided_slice %209 {offsets = [0, 0, 0], sizes = [2, 8, 8], strides = [1, 1, 1]} : vector<8x8x8xf32> to vector<2x8x8xf32>
    %211 = vector.shape_cast %210 : vector<2x8x8xf32> to vector<16x8xf32>
    %212 = vector.extract_strided_slice %209 {offsets = [2, 0, 0], sizes = [2, 8, 8], strides = [1, 1, 1]} : vector<8x8x8xf32> to vector<2x8x8xf32>
    %213 = vector.shape_cast %212 : vector<2x8x8xf32> to vector<16x8xf32>
    %214 = vector.extract_strided_slice %209 {offsets = [4, 0, 0], sizes = [2, 8, 8], strides = [1, 1, 1]} : vector<8x8x8xf32> to vector<2x8x8xf32>
    %215 = vector.shape_cast %214 : vector<2x8x8xf32> to vector<16x8xf32>
    %216 = vector.extract_strided_slice %209 {offsets = [6, 0, 0], sizes = [2, 8, 8], strides = [1, 1, 1]} : vector<8x8x8xf32> to vector<2x8x8xf32>
    %217 = vector.shape_cast %216 : vector<2x8x8xf32> to vector<16x8xf32>
    %218 = tpu.concatenate %211, %213, %215, %217 in 1 : vector<16x8xf32>, vector<16x8xf32>, vector<16x8xf32>, vector<16x8xf32> -> vector<16x32xf32>
    %219 = arith.truncf %218 : vector<16x32xf32> to vector<16x32xbf16>
    %cst_53 = arith.constant dense<0.000000e+00> : vector<16x32xf32>
    %220 = tpu.matmul %219, %163, %cst_53 {dimension_numbers = #tpu.dot_dimension_numbers<[1], [0], [0], [1], [0, 0, 1, 1], [], []>} : vector<16x32xbf16>, vector<32x32xbf16>, vector<16x32xf32> -> vector<16x32xf32>
    %221 = vector.broadcast %164 : vector<1x32xf32> to vector<16x32xf32>
    %222 = arith.addf %220, %221 : vector<16x32xf32>
    %223 = arith.addf %150, %222 : vector<16x32xf32>
    %224 = vector.extract_strided_slice %152 {offsets = [4, 0], sizes = [1, 32], strides = [1, 1]} : vector<8x96xf32> to vector<1x32xf32>
    %225 = vector.extract_strided_slice %152 {offsets = [5, 0], sizes = [1, 32], strides = [1, 1]} : vector<8x96xf32> to vector<1x32xf32>
    %cst_54 = arith.constant dense<0.000000e+00> : vector<16xf32>
    %226 = vector.multi_reduction <add>, %223, %cst_54 [1] : vector<16x32xf32> to vector<16xf32>
    %227 = vector.shape_cast %226 : vector<16xf32> to vector<16x1xf32>
    %cst_55 = arith.constant 3.200000e+01 : f32
    %228 = vector.broadcast %cst_55 : f32 to vector<16x1xf32>
    %229 = arith.divf %227, %228 : vector<16x1xf32>
    %230 = vector.broadcast %229 : vector<16x1xf32> to vector<16x32xf32>
    %231 = arith.subf %223, %230 : vector<16x32xf32>
    %232 = arith.mulf %231, %231 : vector<16x32xf32>
    %cst_56 = arith.constant dense<0.000000e+00> : vector<16xf32>
    %233 = vector.multi_reduction <add>, %232, %cst_56 [1] : vector<16x32xf32> to vector<16xf32>
    %234 = vector.shape_cast %233 : vector<16xf32> to vector<16x1xf32>
    %cst_57 = arith.constant 3.200000e+01 : f32
    %235 = vector.broadcast %cst_57 : f32 to vector<16x1xf32>
    %236 = arith.divf %234, %235 : vector<16x1xf32>
    %237 = vector.broadcast %229 : vector<16x1xf32> to vector<16x32xf32>
    %238 = arith.subf %223, %237 : vector<16x32xf32>
    %cst_58 = arith.constant 9.99999974E-6 : f32
    %239 = vector.broadcast %cst_58 : f32 to vector<16x1xf32>
    %240 = arith.addf %236, %239 : vector<16x1xf32>
    %241 = math.rsqrt %240 : vector<16x1xf32>
    %242 = vector.broadcast %241 : vector<16x1xf32> to vector<16x32xf32>
    %243 = arith.mulf %238, %242 : vector<16x32xf32>
    %244 = vector.broadcast %224 : vector<1x32xf32> to vector<16x32xf32>
    %245 = arith.mulf %243, %244 : vector<16x32xf32>
    %246 = vector.broadcast %225 : vector<1x32xf32> to vector<16x32xf32>
    %247 = arith.addf %245, %246 : vector<16x32xf32>
    %c1_59 = arith.constant 1 : index
    %c0_60 = arith.constant 0 : index
    %c0_61 = arith.constant 0 : index
    %248 = vector.load %arg7[%c1_59, %c0_60, %c0_61] : memref<2x32x64xbf16, #tpu.memory_space<vmem>>, vector<1x32x64xbf16>
    %249 = vector.shape_cast %248 : vector<1x32x64xbf16> to vector<32x64xbf16>
    %250 = vector.extract_strided_slice %152 {offsets = [2, 0], sizes = [1, 64], strides = [1, 1]} : vector<8x96xf32> to vector<1x64xf32>
    %251 = arith.truncf %247 : vector<16x32xf32> to vector<16x32xbf16>
    %cst_62 = arith.constant dense<0.000000e+00> : vector<16x64xf32>
    %252 = tpu.matmul %251, %249, %cst_62 {dimension_numbers = #tpu.dot_dimension_numbers<[1], [0], [0], [1], [0, 0, 1, 1], [], []>} : vector<16x32xbf16>, vector<32x64xbf16>, vector<16x64xf32> -> vector<16x64xf32>
    %253 = vector.broadcast %250 : vector<1x64xf32> to vector<16x64xf32>
    %254 = arith.addf %252, %253 : vector<16x64xf32>
    %cst_63 = arith.constant 0.000000e+00 : f32
    %255 = vector.broadcast %cst_63 : f32 to vector<16x64xf32>
    %256 = arith.maximumf %254, %255 : vector<16x64xf32>
    %c1_64 = arith.constant 1 : index
    %c0_65 = arith.constant 0 : index
    %c0_66 = arith.constant 0 : index
    %257 = vector.load %arg8[%c1_64, %c0_65, %c0_66] : memref<2x64x32xbf16, #tpu.memory_space<vmem>>, vector<1x64x32xbf16>
    %258 = vector.shape_cast %257 : vector<1x64x32xbf16> to vector<64x32xbf16>
    %259 = vector.extract_strided_slice %152 {offsets = [3, 0], sizes = [1, 32], strides = [1, 1]} : vector<8x96xf32> to vector<1x32xf32>
    %260 = arith.truncf %256 : vector<16x64xf32> to vector<16x64xbf16>
    %cst_67 = arith.constant dense<0.000000e+00> : vector<16x32xf32>
    %261 = tpu.matmul %260, %258, %cst_67 {dimension_numbers = #tpu.dot_dimension_numbers<[1], [0], [0], [1], [0, 0, 1, 1], [], []>} : vector<16x64xbf16>, vector<64x32xbf16>, vector<16x32xf32> -> vector<16x32xf32>
    %262 = vector.broadcast %259 : vector<1x32xf32> to vector<16x32xf32>
    %263 = arith.addf %261, %262 : vector<16x32xf32>
    %264 = arith.addf %247, %263 : vector<16x32xf32>
    %265 = vector.extract_strided_slice %152 {offsets = [6, 0], sizes = [1, 32], strides = [1, 1]} : vector<8x96xf32> to vector<1x32xf32>
    %266 = vector.extract_strided_slice %152 {offsets = [7, 0], sizes = [1, 32], strides = [1, 1]} : vector<8x96xf32> to vector<1x32xf32>
    %cst_68 = arith.constant dense<0.000000e+00> : vector<16xf32>
    %267 = vector.multi_reduction <add>, %264, %cst_68 [1] : vector<16x32xf32> to vector<16xf32>
    %268 = vector.shape_cast %267 : vector<16xf32> to vector<16x1xf32>
    %cst_69 = arith.constant 3.200000e+01 : f32
    %269 = vector.broadcast %cst_69 : f32 to vector<16x1xf32>
    %270 = arith.divf %268, %269 : vector<16x1xf32>
    %271 = vector.broadcast %270 : vector<16x1xf32> to vector<16x32xf32>
    %272 = arith.subf %264, %271 : vector<16x32xf32>
    %273 = arith.mulf %272, %272 : vector<16x32xf32>
    %cst_70 = arith.constant dense<0.000000e+00> : vector<16xf32>
    %274 = vector.multi_reduction <add>, %273, %cst_70 [1] : vector<16x32xf32> to vector<16xf32>
    %275 = vector.shape_cast %274 : vector<16xf32> to vector<16x1xf32>
    %cst_71 = arith.constant 3.200000e+01 : f32
    %276 = vector.broadcast %cst_71 : f32 to vector<16x1xf32>
    %277 = arith.divf %275, %276 : vector<16x1xf32>
    %278 = vector.broadcast %270 : vector<16x1xf32> to vector<16x32xf32>
    %279 = arith.subf %264, %278 : vector<16x32xf32>
    %cst_72 = arith.constant 9.99999974E-6 : f32
    %280 = vector.broadcast %cst_72 : f32 to vector<16x1xf32>
    %281 = arith.addf %277, %280 : vector<16x1xf32>
    %282 = math.rsqrt %281 : vector<16x1xf32>
    %283 = vector.broadcast %282 : vector<16x1xf32> to vector<16x32xf32>
    %284 = arith.mulf %279, %283 : vector<16x32xf32>
    %285 = vector.broadcast %265 : vector<1x32xf32> to vector<16x32xf32>
    %286 = arith.mulf %284, %285 : vector<16x32xf32>
    %287 = vector.broadcast %266 : vector<1x32xf32> to vector<16x32xf32>
    %288 = arith.addf %286, %287 : vector<16x32xf32>
    %c0_73 = arith.constant 0 : index
    %c0_74 = arith.constant 0 : index
    %289 = vector.load %arg18[%c0_73, %c0_74] : memref<2x32xf32, #tpu.memory_space<vmem>>, vector<1x32xf32>
    %c1_75 = arith.constant 1 : index
    %c0_76 = arith.constant 0 : index
    %290 = vector.load %arg18[%c1_75, %c0_76] : memref<2x32xf32, #tpu.memory_space<vmem>>, vector<1x32xf32>
    %cst_77 = arith.constant dense<0.000000e+00> : vector<16xf32>
    %291 = vector.multi_reduction <add>, %288, %cst_77 [1] : vector<16x32xf32> to vector<16xf32>
    %292 = vector.shape_cast %291 : vector<16xf32> to vector<16x1xf32>
    %cst_78 = arith.constant 3.200000e+01 : f32
    %293 = vector.broadcast %cst_78 : f32 to vector<16x1xf32>
    %294 = arith.divf %292, %293 : vector<16x1xf32>
    %295 = vector.broadcast %294 : vector<16x1xf32> to vector<16x32xf32>
    %296 = arith.subf %288, %295 : vector<16x32xf32>
    %297 = arith.mulf %296, %296 : vector<16x32xf32>
    %cst_79 = arith.constant dense<0.000000e+00> : vector<16xf32>
    %298 = vector.multi_reduction <add>, %297, %cst_79 [1] : vector<16x32xf32> to vector<16xf32>
    %299 = vector.shape_cast %298 : vector<16xf32> to vector<16x1xf32>
    %cst_80 = arith.constant 3.200000e+01 : f32
    %300 = vector.broadcast %cst_80 : f32 to vector<16x1xf32>
    %301 = arith.divf %299, %300 : vector<16x1xf32>
    %302 = vector.broadcast %294 : vector<16x1xf32> to vector<16x32xf32>
    %303 = arith.subf %288, %302 : vector<16x32xf32>
    %cst_81 = arith.constant 9.99999974E-6 : f32
    %304 = vector.broadcast %cst_81 : f32 to vector<16x1xf32>
    %305 = arith.addf %301, %304 : vector<16x1xf32>
    %306 = math.rsqrt %305 : vector<16x1xf32>
    %307 = vector.broadcast %306 : vector<16x1xf32> to vector<16x32xf32>
    %308 = arith.mulf %303, %307 : vector<16x32xf32>
    %309 = vector.broadcast %289 : vector<1x32xf32> to vector<16x32xf32>
    %310 = arith.mulf %308, %309 : vector<16x32xf32>
    %311 = vector.broadcast %290 : vector<1x32xf32> to vector<16x32xf32>
    %312 = arith.addf %310, %311 : vector<16x32xf32>
    %313 = arith.truncf %312 : vector<16x32xf32> to vector<16x32xbf16>
    %c0_82 = arith.constant 0 : index
    %c0_83 = arith.constant 0 : index
    %314 = vector.load %arg1[%c0_82, %c0_83] : memref<16x32xf32, #tpu.memory_space<vmem>>, vector<16x32xf32>
    %c0_84 = arith.constant 0 : index
    %c0_85 = arith.constant 0 : index
    %c0_86 = arith.constant 0 : index
    %315 = vector.load %arg17[%c0_84, %c0_85, %c0_86] : memref<2x13x96xf32, #tpu.memory_space<vmem>>, vector<1x13x96xf32>
    %316 = vector.shape_cast %315 : vector<1x13x96xf32> to vector<13x96xf32>
    %c0_87 = arith.constant 0 : index
    %c0_88 = arith.constant 0 : index
    %c0_89 = arith.constant 0 : index
    %317 = vector.load %arg10[%c0_87, %c0_88, %c0_89] : memref<2x32x96xbf16, #tpu.memory_space<vmem>>, vector<1x32x96xbf16>
    %318 = vector.shape_cast %317 : vector<1x32x96xbf16> to vector<32x96xbf16>
    %319 = vector.extract_strided_slice %316 {offsets = [0, 0], sizes = [1, 96], strides = [1, 1]} : vector<13x96xf32> to vector<1x96xf32>
    %320 = arith.truncf %314 : vector<16x32xf32> to vector<16x32xbf16>
    %cst_90 = arith.constant dense<0.000000e+00> : vector<16x96xf32>
    %321 = tpu.matmul %320, %318, %cst_90 {dimension_numbers = #tpu.dot_dimension_numbers<[1], [0], [0], [1], [0, 0, 1, 1], [], []>} : vector<16x32xbf16>, vector<32x96xbf16>, vector<16x96xf32> -> vector<16x96xf32>
    %322 = vector.broadcast %319 : vector<1x96xf32> to vector<16x96xf32>
    %323 = arith.addf %321, %322 : vector<16x96xf32>
    %324 = vector.extract_strided_slice %323 {offsets = [0, 0], sizes = [16, 32], strides = [1, 1]} : vector<16x96xf32> to vector<16x32xf32>
    %325 = vector.extract_strided_slice %323 {offsets = [0, 32], sizes = [16, 64], strides = [1, 1]} : vector<16x96xf32> to vector<16x64xf32>
    %c0_91 = arith.constant 0 : index
    %c0_92 = arith.constant 0 : index
    %c0_93 = arith.constant 0 : index
    %326 = vector.load %arg11[%c0_91, %c0_92, %c0_93] : memref<2x32x32xbf16, #tpu.memory_space<vmem>>, vector<1x32x32xbf16>
    %327 = vector.shape_cast %326 : vector<1x32x32xbf16> to vector<32x32xbf16>
    %328 = vector.extract_strided_slice %316 {offsets = [1, 0], sizes = [1, 32], strides = [1, 1]} : vector<13x96xf32> to vector<1x32xf32>
    %329 = arith.truncf %324 : vector<16x32xf32> to vector<16x32xbf16>
    %330 = arith.truncf %325 : vector<16x64xf32> to vector<16x64xbf16>
    %331 = vector.extract_strided_slice %329 {offsets = [0, 0], sizes = [16, 8], strides = [1, 1]} : vector<16x32xbf16> to vector<16x8xbf16>
    %332 = vector.shape_cast %331 : vector<16x8xbf16> to vector<2x8x8xbf16>
    %333 = vector.extract_strided_slice %329 {offsets = [0, 8], sizes = [16, 8], strides = [1, 1]} : vector<16x32xbf16> to vector<16x8xbf16>
    %334 = vector.shape_cast %333 : vector<16x8xbf16> to vector<2x8x8xbf16>
    %335 = vector.extract_strided_slice %329 {offsets = [0, 16], sizes = [16, 8], strides = [1, 1]} : vector<16x32xbf16> to vector<16x8xbf16>
    %336 = vector.shape_cast %335 : vector<16x8xbf16> to vector<2x8x8xbf16>
    %337 = vector.extract_strided_slice %329 {offsets = [0, 24], sizes = [16, 8], strides = [1, 1]} : vector<16x32xbf16> to vector<16x8xbf16>
    %338 = vector.shape_cast %337 : vector<16x8xbf16> to vector<2x8x8xbf16>
    %339 = tpu.concatenate %332, %334, %336, %338 in 0 : vector<2x8x8xbf16>, vector<2x8x8xbf16>, vector<2x8x8xbf16>, vector<2x8x8xbf16> -> vector<8x8x8xbf16>
    %340 = vector.extract_strided_slice %330 {offsets = [0, 0], sizes = [16, 32], strides = [1, 1]} : vector<16x64xbf16> to vector<16x32xbf16>
    %341 = vector.extract_strided_slice %340 {offsets = [0, 0], sizes = [16, 8], strides = [1, 1]} : vector<16x32xbf16> to vector<16x8xbf16>
    %342 = vector.shape_cast %341 : vector<16x8xbf16> to vector<2x8x8xbf16>
    %343 = vector.extract_strided_slice %340 {offsets = [0, 8], sizes = [16, 8], strides = [1, 1]} : vector<16x32xbf16> to vector<16x8xbf16>
    %344 = vector.shape_cast %343 : vector<16x8xbf16> to vector<2x8x8xbf16>
    %345 = vector.extract_strided_slice %340 {offsets = [0, 16], sizes = [16, 8], strides = [1, 1]} : vector<16x32xbf16> to vector<16x8xbf16>
    %346 = vector.shape_cast %345 : vector<16x8xbf16> to vector<2x8x8xbf16>
    %347 = vector.extract_strided_slice %340 {offsets = [0, 24], sizes = [16, 8], strides = [1, 1]} : vector<16x32xbf16> to vector<16x8xbf16>
    %348 = vector.shape_cast %347 : vector<16x8xbf16> to vector<2x8x8xbf16>
    %349 = tpu.concatenate %342, %344, %346, %348 in 0 : vector<2x8x8xbf16>, vector<2x8x8xbf16>, vector<2x8x8xbf16>, vector<2x8x8xbf16> -> vector<8x8x8xbf16>
    %350 = vector.extract_strided_slice %330 {offsets = [0, 32], sizes = [16, 32], strides = [1, 1]} : vector<16x64xbf16> to vector<16x32xbf16>
    %351 = vector.extract_strided_slice %350 {offsets = [0, 0], sizes = [16, 8], strides = [1, 1]} : vector<16x32xbf16> to vector<16x8xbf16>
    %352 = vector.shape_cast %351 : vector<16x8xbf16> to vector<2x8x8xbf16>
    %353 = vector.extract_strided_slice %350 {offsets = [0, 8], sizes = [16, 8], strides = [1, 1]} : vector<16x32xbf16> to vector<16x8xbf16>
    %354 = vector.shape_cast %353 : vector<16x8xbf16> to vector<2x8x8xbf16>
    %355 = vector.extract_strided_slice %350 {offsets = [0, 16], sizes = [16, 8], strides = [1, 1]} : vector<16x32xbf16> to vector<16x8xbf16>
    %356 = vector.shape_cast %355 : vector<16x8xbf16> to vector<2x8x8xbf16>
    %357 = vector.extract_strided_slice %350 {offsets = [0, 24], sizes = [16, 8], strides = [1, 1]} : vector<16x32xbf16> to vector<16x8xbf16>
    %358 = vector.shape_cast %357 : vector<16x8xbf16> to vector<2x8x8xbf16>
    %359 = tpu.concatenate %352, %354, %356, %358 in 0 : vector<2x8x8xbf16>, vector<2x8x8xbf16>, vector<2x8x8xbf16>, vector<2x8x8xbf16> -> vector<8x8x8xbf16>
    "tpu.trace_start"() <{level = 10 : i32, message = "bqd,bkd->bqk"}> : () -> ()
    %cst_94 = arith.constant dense<0.000000e+00> : vector<8x8x8xf32>
    %360 = tpu.matmul %339, %349, %cst_94 {dimension_numbers = #tpu.dot_dimension_numbers<[2], [2], [1], [1], [0, 0, 0, 1, 1, 1], [0], [0]>} : vector<8x8x8xbf16>, vector<8x8x8xbf16>, vector<8x8x8xf32> -> vector<8x8x8xf32>
    "tpu.trace_stop"() : () -> ()
    %361 = arith.addf %360, %7 : vector<8x8x8xf32>
    %cst_95 = arith.constant dense<0xFF800000> : vector<8x8xf32>
    %362 = vector.multi_reduction <maximumf>, %361, %cst_95 [2] : vector<8x8x8xf32> to vector<8x8xf32>
    %363 = vector.shape_cast %362 : vector<8x8xf32> to vector<8x8x1xf32>
    %364 = vector.broadcast %363 : vector<8x8x1xf32> to vector<8x8x8xf32>
    %365 = arith.subf %361, %364 : vector<8x8x8xf32>
    %366 = math.exp %365 : vector<8x8x8xf32>
    %cst_96 = arith.constant dense<0.000000e+00> : vector<8x8xf32>
    %367 = vector.multi_reduction <add>, %366, %cst_96 [2] : vector<8x8x8xf32> to vector<8x8xf32>
    %368 = vector.shape_cast %367 : vector<8x8xf32> to vector<8x8x1xf32>
    %369 = tpu.reciprocal %368 {approx = true} : vector<8x8x1xf32> -> vector<8x8x1xf32>
    %370 = vector.broadcast %369 : vector<8x8x1xf32> to vector<8x8x8xf32>
    %371 = arith.mulf %366, %370 : vector<8x8x8xf32>
    %372 = arith.truncf %371 : vector<8x8x8xf32> to vector<8x8x8xbf16>
    "tpu.trace_start"() <{level = 10 : i32, message = "bqk,bkd->bqd"}> : () -> ()
    %cst_97 = arith.constant dense<0.000000e+00> : vector<8x8x8xf32>
    %373 = tpu.matmul %372, %359, %cst_97 {dimension_numbers = #tpu.dot_dimension_numbers<[2], [1], [1], [2], [0, 0, 0, 1, 1, 2], [0], [0]>} : vector<8x8x8xbf16>, vector<8x8x8xbf16>, vector<8x8x8xf32> -> vector<8x8x8xf32>
    "tpu.trace_stop"() : () -> ()
    %374 = vector.extract_strided_slice %373 {offsets = [0, 0, 0], sizes = [2, 8, 8], strides = [1, 1, 1]} : vector<8x8x8xf32> to vector<2x8x8xf32>
    %375 = vector.shape_cast %374 : vector<2x8x8xf32> to vector<16x8xf32>
    %376 = vector.extract_strided_slice %373 {offsets = [2, 0, 0], sizes = [2, 8, 8], strides = [1, 1, 1]} : vector<8x8x8xf32> to vector<2x8x8xf32>
    %377 = vector.shape_cast %376 : vector<2x8x8xf32> to vector<16x8xf32>
    %378 = vector.extract_strided_slice %373 {offsets = [4, 0, 0], sizes = [2, 8, 8], strides = [1, 1, 1]} : vector<8x8x8xf32> to vector<2x8x8xf32>
    %379 = vector.shape_cast %378 : vector<2x8x8xf32> to vector<16x8xf32>
    %380 = vector.extract_strided_slice %373 {offsets = [6, 0, 0], sizes = [2, 8, 8], strides = [1, 1, 1]} : vector<8x8x8xf32> to vector<2x8x8xf32>
    %381 = vector.shape_cast %380 : vector<2x8x8xf32> to vector<16x8xf32>
    %382 = tpu.concatenate %375, %377, %379, %381 in 1 : vector<16x8xf32>, vector<16x8xf32>, vector<16x8xf32>, vector<16x8xf32> -> vector<16x32xf32>
    %383 = arith.truncf %382 : vector<16x32xf32> to vector<16x32xbf16>
    %cst_98 = arith.constant dense<0.000000e+00> : vector<16x32xf32>
    %384 = tpu.matmul %383, %327, %cst_98 {dimension_numbers = #tpu.dot_dimension_numbers<[1], [0], [0], [1], [0, 0, 1, 1], [], []>} : vector<16x32xbf16>, vector<32x32xbf16>, vector<16x32xf32> -> vector<16x32xf32>
    %385 = vector.broadcast %328 : vector<1x32xf32> to vector<16x32xf32>
    %386 = arith.addf %384, %385 : vector<16x32xf32>
    %387 = arith.addf %314, %386 : vector<16x32xf32>
    %388 = vector.extract_strided_slice %316 {offsets = [7, 0], sizes = [1, 32], strides = [1, 1]} : vector<13x96xf32> to vector<1x32xf32>
    %389 = vector.extract_strided_slice %316 {offsets = [8, 0], sizes = [1, 32], strides = [1, 1]} : vector<13x96xf32> to vector<1x32xf32>
    %cst_99 = arith.constant dense<0.000000e+00> : vector<16xf32>
    %390 = vector.multi_reduction <add>, %387, %cst_99 [1] : vector<16x32xf32> to vector<16xf32>
    %391 = vector.shape_cast %390 : vector<16xf32> to vector<16x1xf32>
    %cst_100 = arith.constant 3.200000e+01 : f32
    %392 = vector.broadcast %cst_100 : f32 to vector<16x1xf32>
    %393 = arith.divf %391, %392 : vector<16x1xf32>
    %394 = vector.broadcast %393 : vector<16x1xf32> to vector<16x32xf32>
    %395 = arith.subf %387, %394 : vector<16x32xf32>
    %396 = arith.mulf %395, %395 : vector<16x32xf32>
    %cst_101 = arith.constant dense<0.000000e+00> : vector<16xf32>
    %397 = vector.multi_reduction <add>, %396, %cst_101 [1] : vector<16x32xf32> to vector<16xf32>
    %398 = vector.shape_cast %397 : vector<16xf32> to vector<16x1xf32>
    %cst_102 = arith.constant 3.200000e+01 : f32
    %399 = vector.broadcast %cst_102 : f32 to vector<16x1xf32>
    %400 = arith.divf %398, %399 : vector<16x1xf32>
    %401 = vector.broadcast %393 : vector<16x1xf32> to vector<16x32xf32>
    %402 = arith.subf %387, %401 : vector<16x32xf32>
    %cst_103 = arith.constant 9.99999974E-6 : f32
    %403 = vector.broadcast %cst_103 : f32 to vector<16x1xf32>
    %404 = arith.addf %400, %403 : vector<16x1xf32>
    %405 = math.rsqrt %404 : vector<16x1xf32>
    %406 = vector.broadcast %405 : vector<16x1xf32> to vector<16x32xf32>
    %407 = arith.mulf %402, %406 : vector<16x32xf32>
    %408 = vector.broadcast %388 : vector<1x32xf32> to vector<16x32xf32>
    %409 = arith.mulf %407, %408 : vector<16x32xf32>
    %410 = vector.broadcast %389 : vector<1x32xf32> to vector<16x32xf32>
    %411 = arith.addf %409, %410 : vector<16x32xf32>
    %c0_104 = arith.constant 0 : index
    %c0_105 = arith.constant 0 : index
    %c0_106 = arith.constant 0 : index
    %412 = vector.load %arg12[%c0_104, %c0_105, %c0_106] : memref<2x32x32xbf16, #tpu.memory_space<vmem>>, vector<1x32x32xbf16>
    %413 = vector.shape_cast %412 : vector<1x32x32xbf16> to vector<32x32xbf16>
    %414 = vector.extract_strided_slice %316 {offsets = [2, 0], sizes = [1, 32], strides = [1, 1]} : vector<13x96xf32> to vector<1x32xf32>
    %415 = arith.truncf %411 : vector<16x32xf32> to vector<16x32xbf16>
    %cst_107 = arith.constant dense<0.000000e+00> : vector<16x32xf32>
    %416 = tpu.matmul %415, %413, %cst_107 {dimension_numbers = #tpu.dot_dimension_numbers<[1], [0], [0], [1], [0, 0, 1, 1], [], []>} : vector<16x32xbf16>, vector<32x32xbf16>, vector<16x32xf32> -> vector<16x32xf32>
    %417 = vector.broadcast %414 : vector<1x32xf32> to vector<16x32xf32>
    %418 = arith.addf %416, %417 : vector<16x32xf32>
    %c0_108 = arith.constant 0 : index
    %c0_109 = arith.constant 0 : index
    %c0_110 = arith.constant 0 : index
    %419 = vector.load %arg13[%c0_108, %c0_109, %c0_110] : memref<2x32x64xbf16, #tpu.memory_space<vmem>>, vector<1x32x64xbf16>
    %420 = vector.shape_cast %419 : vector<1x32x64xbf16> to vector<32x64xbf16>
    %421 = vector.extract_strided_slice %316 {offsets = [3, 0], sizes = [1, 64], strides = [1, 1]} : vector<13x96xf32> to vector<1x64xf32>
    %cst_111 = arith.constant dense<0.000000e+00> : vector<16x64xf32>
    %422 = tpu.matmul %313, %420, %cst_111 {dimension_numbers = #tpu.dot_dimension_numbers<[1], [0], [0], [1], [0, 0, 1, 1], [], []>} : vector<16x32xbf16>, vector<32x64xbf16>, vector<16x64xf32> -> vector<16x64xf32>
    %423 = vector.broadcast %421 : vector<1x64xf32> to vector<16x64xf32>
    %424 = arith.addf %422, %423 : vector<16x64xf32>
    %c0_112 = arith.constant 0 : index
    %c0_113 = arith.constant 0 : index
    %c0_114 = arith.constant 0 : index
    %425 = vector.load %arg14[%c0_112, %c0_113, %c0_114] : memref<2x32x32xbf16, #tpu.memory_space<vmem>>, vector<1x32x32xbf16>
    %426 = vector.shape_cast %425 : vector<1x32x32xbf16> to vector<32x32xbf16>
    %427 = vector.extract_strided_slice %316 {offsets = [4, 0], sizes = [1, 32], strides = [1, 1]} : vector<13x96xf32> to vector<1x32xf32>
    %428 = arith.truncf %418 : vector<16x32xf32> to vector<16x32xbf16>
    %429 = arith.truncf %424 : vector<16x64xf32> to vector<16x64xbf16>
    %430 = vector.extract_strided_slice %428 {offsets = [0, 0], sizes = [16, 8], strides = [1, 1]} : vector<16x32xbf16> to vector<16x8xbf16>
    %431 = vector.shape_cast %430 : vector<16x8xbf16> to vector<2x8x8xbf16>
    %432 = vector.extract_strided_slice %428 {offsets = [0, 8], sizes = [16, 8], strides = [1, 1]} : vector<16x32xbf16> to vector<16x8xbf16>
    %433 = vector.shape_cast %432 : vector<16x8xbf16> to vector<2x8x8xbf16>
    %434 = vector.extract_strided_slice %428 {offsets = [0, 16], sizes = [16, 8], strides = [1, 1]} : vector<16x32xbf16> to vector<16x8xbf16>
    %435 = vector.shape_cast %434 : vector<16x8xbf16> to vector<2x8x8xbf16>
    %436 = vector.extract_strided_slice %428 {offsets = [0, 24], sizes = [16, 8], strides = [1, 1]} : vector<16x32xbf16> to vector<16x8xbf16>
    %437 = vector.shape_cast %436 : vector<16x8xbf16> to vector<2x8x8xbf16>
    %438 = tpu.concatenate %431, %433, %435, %437 in 0 : vector<2x8x8xbf16>, vector<2x8x8xbf16>, vector<2x8x8xbf16>, vector<2x8x8xbf16> -> vector<8x8x8xbf16>
    %439 = vector.extract_strided_slice %429 {offsets = [0, 0], sizes = [16, 32], strides = [1, 1]} : vector<16x64xbf16> to vector<16x32xbf16>
    %440 = vector.extract_strided_slice %439 {offsets = [0, 0], sizes = [16, 8], strides = [1, 1]} : vector<16x32xbf16> to vector<16x8xbf16>
    %441 = vector.shape_cast %440 : vector<16x8xbf16> to vector<2x8x8xbf16>
    %442 = vector.extract_strided_slice %439 {offsets = [0, 8], sizes = [16, 8], strides = [1, 1]} : vector<16x32xbf16> to vector<16x8xbf16>
    %443 = vector.shape_cast %442 : vector<16x8xbf16> to vector<2x8x8xbf16>
    %444 = vector.extract_strided_slice %439 {offsets = [0, 16], sizes = [16, 8], strides = [1, 1]} : vector<16x32xbf16> to vector<16x8xbf16>
    %445 = vector.shape_cast %444 : vector<16x8xbf16> to vector<2x8x8xbf16>
    %446 = vector.extract_strided_slice %439 {offsets = [0, 24], sizes = [16, 8], strides = [1, 1]} : vector<16x32xbf16> to vector<16x8xbf16>
    %447 = vector.shape_cast %446 : vector<16x8xbf16> to vector<2x8x8xbf16>
    %448 = tpu.concatenate %441, %443, %445, %447 in 0 : vector<2x8x8xbf16>, vector<2x8x8xbf16>, vector<2x8x8xbf16>, vector<2x8x8xbf16> -> vector<8x8x8xbf16>
    %449 = vector.extract_strided_slice %429 {offsets = [0, 32], sizes = [16, 32], strides = [1, 1]} : vector<16x64xbf16> to vector<16x32xbf16>
    %450 = vector.extract_strided_slice %449 {offsets = [0, 0], sizes = [16, 8], strides = [1, 1]} : vector<16x32xbf16> to vector<16x8xbf16>
    %451 = vector.shape_cast %450 : vector<16x8xbf16> to vector<2x8x8xbf16>
    %452 = vector.extract_strided_slice %449 {offsets = [0, 8], sizes = [16, 8], strides = [1, 1]} : vector<16x32xbf16> to vector<16x8xbf16>
    %453 = vector.shape_cast %452 : vector<16x8xbf16> to vector<2x8x8xbf16>
    %454 = vector.extract_strided_slice %449 {offsets = [0, 16], sizes = [16, 8], strides = [1, 1]} : vector<16x32xbf16> to vector<16x8xbf16>
    %455 = vector.shape_cast %454 : vector<16x8xbf16> to vector<2x8x8xbf16>
    %456 = vector.extract_strided_slice %449 {offsets = [0, 24], sizes = [16, 8], strides = [1, 1]} : vector<16x32xbf16> to vector<16x8xbf16>
    %457 = vector.shape_cast %456 : vector<16x8xbf16> to vector<2x8x8xbf16>
    %458 = tpu.concatenate %451, %453, %455, %457 in 0 : vector<2x8x8xbf16>, vector<2x8x8xbf16>, vector<2x8x8xbf16>, vector<2x8x8xbf16> -> vector<8x8x8xbf16>
    "tpu.trace_start"() <{level = 10 : i32, message = "bqd,bkd->bqk"}> : () -> ()
    %cst_115 = arith.constant dense<0.000000e+00> : vector<8x8x8xf32>
    %459 = tpu.matmul %438, %448, %cst_115 {dimension_numbers = #tpu.dot_dimension_numbers<[2], [2], [1], [1], [0, 0, 0, 1, 1, 1], [0], [0]>} : vector<8x8x8xbf16>, vector<8x8x8xbf16>, vector<8x8x8xf32> -> vector<8x8x8xf32>
    "tpu.trace_stop"() : () -> ()
    %460 = arith.addf %459, %11 : vector<8x8x8xf32>
    %cst_116 = arith.constant dense<0xFF800000> : vector<8x8xf32>
    %461 = vector.multi_reduction <maximumf>, %460, %cst_116 [2] : vector<8x8x8xf32> to vector<8x8xf32>
    %462 = vector.shape_cast %461 : vector<8x8xf32> to vector<8x8x1xf32>
    %463 = vector.broadcast %462 : vector<8x8x1xf32> to vector<8x8x8xf32>
    %464 = arith.subf %460, %463 : vector<8x8x8xf32>
    %465 = math.exp %464 : vector<8x8x8xf32>
    %cst_117 = arith.constant dense<0.000000e+00> : vector<8x8xf32>
    %466 = vector.multi_reduction <add>, %465, %cst_117 [2] : vector<8x8x8xf32> to vector<8x8xf32>
    %467 = vector.shape_cast %466 : vector<8x8xf32> to vector<8x8x1xf32>
    %468 = tpu.reciprocal %467 {approx = true} : vector<8x8x1xf32> -> vector<8x8x1xf32>
    %469 = vector.broadcast %468 : vector<8x8x1xf32> to vector<8x8x8xf32>
    %470 = arith.mulf %465, %469 : vector<8x8x8xf32>
    %471 = arith.truncf %470 : vector<8x8x8xf32> to vector<8x8x8xbf16>
    "tpu.trace_start"() <{level = 10 : i32, message = "bqk,bkd->bqd"}> : () -> ()
    %cst_118 = arith.constant dense<0.000000e+00> : vector<8x8x8xf32>
    %472 = tpu.matmul %471, %458, %cst_118 {dimension_numbers = #tpu.dot_dimension_numbers<[2], [1], [1], [2], [0, 0, 0, 1, 1, 2], [0], [0]>} : vector<8x8x8xbf16>, vector<8x8x8xbf16>, vector<8x8x8xf32> -> vector<8x8x8xf32>
    "tpu.trace_stop"() : () -> ()
    %473 = vector.extract_strided_slice %472 {offsets = [0, 0, 0], sizes = [2, 8, 8], strides = [1, 1, 1]} : vector<8x8x8xf32> to vector<2x8x8xf32>
    %474 = vector.shape_cast %473 : vector<2x8x8xf32> to vector<16x8xf32>
    %475 = vector.extract_strided_slice %472 {offsets = [2, 0, 0], sizes = [2, 8, 8], strides = [1, 1, 1]} : vector<8x8x8xf32> to vector<2x8x8xf32>
    %476 = vector.shape_cast %475 : vector<2x8x8xf32> to vector<16x8xf32>
    %477 = vector.extract_strided_slice %472 {offsets = [4, 0, 0], sizes = [2, 8, 8], strides = [1, 1, 1]} : vector<8x8x8xf32> to vector<2x8x8xf32>
    %478 = vector.shape_cast %477 : vector<2x8x8xf32> to vector<16x8xf32>
    %479 = vector.extract_strided_slice %472 {offsets = [6, 0, 0], sizes = [2, 8, 8], strides = [1, 1, 1]} : vector<8x8x8xf32> to vector<2x8x8xf32>
    %480 = vector.shape_cast %479 : vector<2x8x8xf32> to vector<16x8xf32>
    %481 = tpu.concatenate %474, %476, %478, %480 in 1 : vector<16x8xf32>, vector<16x8xf32>, vector<16x8xf32>, vector<16x8xf32> -> vector<16x32xf32>
    %482 = arith.truncf %481 : vector<16x32xf32> to vector<16x32xbf16>
    %cst_119 = arith.constant dense<0.000000e+00> : vector<16x32xf32>
    %483 = tpu.matmul %482, %426, %cst_119 {dimension_numbers = #tpu.dot_dimension_numbers<[1], [0], [0], [1], [0, 0, 1, 1], [], []>} : vector<16x32xbf16>, vector<32x32xbf16>, vector<16x32xf32> -> vector<16x32xf32>
    %484 = vector.broadcast %427 : vector<1x32xf32> to vector<16x32xf32>
    %485 = arith.addf %483, %484 : vector<16x32xf32>
    %486 = arith.addf %411, %485 : vector<16x32xf32>
    %487 = vector.extract_strided_slice %316 {offsets = [9, 0], sizes = [1, 32], strides = [1, 1]} : vector<13x96xf32> to vector<1x32xf32>
    %488 = vector.extract_strided_slice %316 {offsets = [10, 0], sizes = [1, 32], strides = [1, 1]} : vector<13x96xf32> to vector<1x32xf32>
    %cst_120 = arith.constant dense<0.000000e+00> : vector<16xf32>
    %489 = vector.multi_reduction <add>, %486, %cst_120 [1] : vector<16x32xf32> to vector<16xf32>
    %490 = vector.shape_cast %489 : vector<16xf32> to vector<16x1xf32>
    %cst_121 = arith.constant 3.200000e+01 : f32
    %491 = vector.broadcast %cst_121 : f32 to vector<16x1xf32>
    %492 = arith.divf %490, %491 : vector<16x1xf32>
    %493 = vector.broadcast %492 : vector<16x1xf32> to vector<16x32xf32>
    %494 = arith.subf %486, %493 : vector<16x32xf32>
    %495 = arith.mulf %494, %494 : vector<16x32xf32>
    %cst_122 = arith.constant dense<0.000000e+00> : vector<16xf32>
    %496 = vector.multi_reduction <add>, %495, %cst_122 [1] : vector<16x32xf32> to vector<16xf32>
    %497 = vector.shape_cast %496 : vector<16xf32> to vector<16x1xf32>
    %cst_123 = arith.constant 3.200000e+01 : f32
    %498 = vector.broadcast %cst_123 : f32 to vector<16x1xf32>
    %499 = arith.divf %497, %498 : vector<16x1xf32>
    %500 = vector.broadcast %492 : vector<16x1xf32> to vector<16x32xf32>
    %501 = arith.subf %486, %500 : vector<16x32xf32>
    %cst_124 = arith.constant 9.99999974E-6 : f32
    %502 = vector.broadcast %cst_124 : f32 to vector<16x1xf32>
    %503 = arith.addf %499, %502 : vector<16x1xf32>
    %504 = math.rsqrt %503 : vector<16x1xf32>
    %505 = vector.broadcast %504 : vector<16x1xf32> to vector<16x32xf32>
    %506 = arith.mulf %501, %505 : vector<16x32xf32>
    %507 = vector.broadcast %487 : vector<1x32xf32> to vector<16x32xf32>
    %508 = arith.mulf %506, %507 : vector<16x32xf32>
    %509 = vector.broadcast %488 : vector<1x32xf32> to vector<16x32xf32>
    %510 = arith.addf %508, %509 : vector<16x32xf32>
    %c0_125 = arith.constant 0 : index
    %c0_126 = arith.constant 0 : index
    %c0_127 = arith.constant 0 : index
    %511 = vector.load %arg15[%c0_125, %c0_126, %c0_127] : memref<2x32x64xbf16, #tpu.memory_space<vmem>>, vector<1x32x64xbf16>
    %512 = vector.shape_cast %511 : vector<1x32x64xbf16> to vector<32x64xbf16>
    %513 = vector.extract_strided_slice %316 {offsets = [5, 0], sizes = [1, 64], strides = [1, 1]} : vector<13x96xf32> to vector<1x64xf32>
    %514 = arith.truncf %510 : vector<16x32xf32> to vector<16x32xbf16>
    %cst_128 = arith.constant dense<0.000000e+00> : vector<16x64xf32>
    %515 = tpu.matmul %514, %512, %cst_128 {dimension_numbers = #tpu.dot_dimension_numbers<[1], [0], [0], [1], [0, 0, 1, 1], [], []>} : vector<16x32xbf16>, vector<32x64xbf16>, vector<16x64xf32> -> vector<16x64xf32>
    %516 = vector.broadcast %513 : vector<1x64xf32> to vector<16x64xf32>
    %517 = arith.addf %515, %516 : vector<16x64xf32>
    %cst_129 = arith.constant 0.000000e+00 : f32
    %518 = vector.broadcast %cst_129 : f32 to vector<16x64xf32>
    %519 = arith.maximumf %517, %518 : vector<16x64xf32>
    %c0_130 = arith.constant 0 : index
    %c0_131 = arith.constant 0 : index
    %c0_132 = arith.constant 0 : index
    %520 = vector.load %arg16[%c0_130, %c0_131, %c0_132] : memref<2x64x32xbf16, #tpu.memory_space<vmem>>, vector<1x64x32xbf16>
    %521 = vector.shape_cast %520 : vector<1x64x32xbf16> to vector<64x32xbf16>
    %522 = vector.extract_strided_slice %316 {offsets = [6, 0], sizes = [1, 32], strides = [1, 1]} : vector<13x96xf32> to vector<1x32xf32>
    %523 = arith.truncf %519 : vector<16x64xf32> to vector<16x64xbf16>
    %cst_133 = arith.constant dense<0.000000e+00> : vector<16x32xf32>
    %524 = tpu.matmul %523, %521, %cst_133 {dimension_numbers = #tpu.dot_dimension_numbers<[1], [0], [0], [1], [0, 0, 1, 1], [], []>} : vector<16x64xbf16>, vector<64x32xbf16>, vector<16x32xf32> -> vector<16x32xf32>
    %525 = vector.broadcast %522 : vector<1x32xf32> to vector<16x32xf32>
    %526 = arith.addf %524, %525 : vector<16x32xf32>
    %527 = arith.addf %510, %526 : vector<16x32xf32>
    %528 = vector.extract_strided_slice %316 {offsets = [11, 0], sizes = [1, 32], strides = [1, 1]} : vector<13x96xf32> to vector<1x32xf32>
    %529 = vector.extract_strided_slice %316 {offsets = [12, 0], sizes = [1, 32], strides = [1, 1]} : vector<13x96xf32> to vector<1x32xf32>
    %cst_134 = arith.constant dense<0.000000e+00> : vector<16xf32>
    %530 = vector.multi_reduction <add>, %527, %cst_134 [1] : vector<16x32xf32> to vector<16xf32>
    %531 = vector.shape_cast %530 : vector<16xf32> to vector<16x1xf32>
    %cst_135 = arith.constant 3.200000e+01 : f32
    %532 = vector.broadcast %cst_135 : f32 to vector<16x1xf32>
    %533 = arith.divf %531, %532 : vector<16x1xf32>
    %534 = vector.broadcast %533 : vector<16x1xf32> to vector<16x32xf32>
    %535 = arith.subf %527, %534 : vector<16x32xf32>
    %536 = arith.mulf %535, %535 : vector<16x32xf32>
    %cst_136 = arith.constant dense<0.000000e+00> : vector<16xf32>
    %537 = vector.multi_reduction <add>, %536, %cst_136 [1] : vector<16x32xf32> to vector<16xf32>
    %538 = vector.shape_cast %537 : vector<16xf32> to vector<16x1xf32>
    %cst_137 = arith.constant 3.200000e+01 : f32
    %539 = vector.broadcast %cst_137 : f32 to vector<16x1xf32>
    %540 = arith.divf %538, %539 : vector<16x1xf32>
    %541 = vector.broadcast %533 : vector<16x1xf32> to vector<16x32xf32>
    %542 = arith.subf %527, %541 : vector<16x32xf32>
    %cst_138 = arith.constant 9.99999974E-6 : f32
    %543 = vector.broadcast %cst_138 : f32 to vector<16x1xf32>
    %544 = arith.addf %540, %543 : vector<16x1xf32>
    %545 = math.rsqrt %544 : vector<16x1xf32>
    %546 = vector.broadcast %545 : vector<16x1xf32> to vector<16x32xf32>
    %547 = arith.mulf %542, %546 : vector<16x32xf32>
    %548 = vector.broadcast %528 : vector<1x32xf32> to vector<16x32xf32>
    %549 = arith.mulf %547, %548 : vector<16x32xf32>
    %550 = vector.broadcast %529 : vector<1x32xf32> to vector<16x32xf32>
    %551 = arith.addf %549, %550 : vector<16x32xf32>
    %c1_139 = arith.constant 1 : index
    %c0_140 = arith.constant 0 : index
    %c0_141 = arith.constant 0 : index
    %552 = vector.load %arg17[%c1_139, %c0_140, %c0_141] : memref<2x13x96xf32, #tpu.memory_space<vmem>>, vector<1x13x96xf32>
    %553 = vector.shape_cast %552 : vector<1x13x96xf32> to vector<13x96xf32>
    %c1_142 = arith.constant 1 : index
    %c0_143 = arith.constant 0 : index
    %c0_144 = arith.constant 0 : index
    %554 = vector.load %arg10[%c1_142, %c0_143, %c0_144] : memref<2x32x96xbf16, #tpu.memory_space<vmem>>, vector<1x32x96xbf16>
    %555 = vector.shape_cast %554 : vector<1x32x96xbf16> to vector<32x96xbf16>
    %556 = vector.extract_strided_slice %553 {offsets = [0, 0], sizes = [1, 96], strides = [1, 1]} : vector<13x96xf32> to vector<1x96xf32>
    %557 = arith.truncf %551 : vector<16x32xf32> to vector<16x32xbf16>
    %cst_145 = arith.constant dense<0.000000e+00> : vector<16x96xf32>
    %558 = tpu.matmul %557, %555, %cst_145 {dimension_numbers = #tpu.dot_dimension_numbers<[1], [0], [0], [1], [0, 0, 1, 1], [], []>} : vector<16x32xbf16>, vector<32x96xbf16>, vector<16x96xf32> -> vector<16x96xf32>
    %559 = vector.broadcast %556 : vector<1x96xf32> to vector<16x96xf32>
    %560 = arith.addf %558, %559 : vector<16x96xf32>
    %561 = vector.extract_strided_slice %560 {offsets = [0, 0], sizes = [16, 32], strides = [1, 1]} : vector<16x96xf32> to vector<16x32xf32>
    %562 = vector.extract_strided_slice %560 {offsets = [0, 32], sizes = [16, 64], strides = [1, 1]} : vector<16x96xf32> to vector<16x64xf32>
    %c1_146 = arith.constant 1 : index
    %c0_147 = arith.constant 0 : index
    %c0_148 = arith.constant 0 : index
    %563 = vector.load %arg11[%c1_146, %c0_147, %c0_148] : memref<2x32x32xbf16, #tpu.memory_space<vmem>>, vector<1x32x32xbf16>
    %564 = vector.shape_cast %563 : vector<1x32x32xbf16> to vector<32x32xbf16>
    %565 = vector.extract_strided_slice %553 {offsets = [1, 0], sizes = [1, 32], strides = [1, 1]} : vector<13x96xf32> to vector<1x32xf32>
    %566 = arith.truncf %561 : vector<16x32xf32> to vector<16x32xbf16>
    %567 = arith.truncf %562 : vector<16x64xf32> to vector<16x64xbf16>
    %568 = vector.extract_strided_slice %566 {offsets = [0, 0], sizes = [16, 8], strides = [1, 1]} : vector<16x32xbf16> to vector<16x8xbf16>
    %569 = vector.shape_cast %568 : vector<16x8xbf16> to vector<2x8x8xbf16>
    %570 = vector.extract_strided_slice %566 {offsets = [0, 8], sizes = [16, 8], strides = [1, 1]} : vector<16x32xbf16> to vector<16x8xbf16>
    %571 = vector.shape_cast %570 : vector<16x8xbf16> to vector<2x8x8xbf16>
    %572 = vector.extract_strided_slice %566 {offsets = [0, 16], sizes = [16, 8], strides = [1, 1]} : vector<16x32xbf16> to vector<16x8xbf16>
    %573 = vector.shape_cast %572 : vector<16x8xbf16> to vector<2x8x8xbf16>
    %574 = vector.extract_strided_slice %566 {offsets = [0, 24], sizes = [16, 8], strides = [1, 1]} : vector<16x32xbf16> to vector<16x8xbf16>
    %575 = vector.shape_cast %574 : vector<16x8xbf16> to vector<2x8x8xbf16>
    %576 = tpu.concatenate %569, %571, %573, %575 in 0 : vector<2x8x8xbf16>, vector<2x8x8xbf16>, vector<2x8x8xbf16>, vector<2x8x8xbf16> -> vector<8x8x8xbf16>
    %577 = vector.extract_strided_slice %567 {offsets = [0, 0], sizes = [16, 32], strides = [1, 1]} : vector<16x64xbf16> to vector<16x32xbf16>
    %578 = vector.extract_strided_slice %577 {offsets = [0, 0], sizes = [16, 8], strides = [1, 1]} : vector<16x32xbf16> to vector<16x8xbf16>
    %579 = vector.shape_cast %578 : vector<16x8xbf16> to vector<2x8x8xbf16>
    %580 = vector.extract_strided_slice %577 {offsets = [0, 8], sizes = [16, 8], strides = [1, 1]} : vector<16x32xbf16> to vector<16x8xbf16>
    %581 = vector.shape_cast %580 : vector<16x8xbf16> to vector<2x8x8xbf16>
    %582 = vector.extract_strided_slice %577 {offsets = [0, 16], sizes = [16, 8], strides = [1, 1]} : vector<16x32xbf16> to vector<16x8xbf16>
    %583 = vector.shape_cast %582 : vector<16x8xbf16> to vector<2x8x8xbf16>
    %584 = vector.extract_strided_slice %577 {offsets = [0, 24], sizes = [16, 8], strides = [1, 1]} : vector<16x32xbf16> to vector<16x8xbf16>
    %585 = vector.shape_cast %584 : vector<16x8xbf16> to vector<2x8x8xbf16>
    %586 = tpu.concatenate %579, %581, %583, %585 in 0 : vector<2x8x8xbf16>, vector<2x8x8xbf16>, vector<2x8x8xbf16>, vector<2x8x8xbf16> -> vector<8x8x8xbf16>
    %587 = vector.extract_strided_slice %567 {offsets = [0, 32], sizes = [16, 32], strides = [1, 1]} : vector<16x64xbf16> to vector<16x32xbf16>
    %588 = vector.extract_strided_slice %587 {offsets = [0, 0], sizes = [16, 8], strides = [1, 1]} : vector<16x32xbf16> to vector<16x8xbf16>
    %589 = vector.shape_cast %588 : vector<16x8xbf16> to vector<2x8x8xbf16>
    %590 = vector.extract_strided_slice %587 {offsets = [0, 8], sizes = [16, 8], strides = [1, 1]} : vector<16x32xbf16> to vector<16x8xbf16>
    %591 = vector.shape_cast %590 : vector<16x8xbf16> to vector<2x8x8xbf16>
    %592 = vector.extract_strided_slice %587 {offsets = [0, 16], sizes = [16, 8], strides = [1, 1]} : vector<16x32xbf16> to vector<16x8xbf16>
    %593 = vector.shape_cast %592 : vector<16x8xbf16> to vector<2x8x8xbf16>
    %594 = vector.extract_strided_slice %587 {offsets = [0, 24], sizes = [16, 8], strides = [1, 1]} : vector<16x32xbf16> to vector<16x8xbf16>
    %595 = vector.shape_cast %594 : vector<16x8xbf16> to vector<2x8x8xbf16>
    %596 = tpu.concatenate %589, %591, %593, %595 in 0 : vector<2x8x8xbf16>, vector<2x8x8xbf16>, vector<2x8x8xbf16>, vector<2x8x8xbf16> -> vector<8x8x8xbf16>
    "tpu.trace_start"() <{level = 10 : i32, message = "bqd,bkd->bqk"}> : () -> ()
    %cst_149 = arith.constant dense<0.000000e+00> : vector<8x8x8xf32>
    %597 = tpu.matmul %576, %586, %cst_149 {dimension_numbers = #tpu.dot_dimension_numbers<[2], [2], [1], [1], [0, 0, 0, 1, 1, 1], [0], [0]>} : vector<8x8x8xbf16>, vector<8x8x8xbf16>, vector<8x8x8xf32> -> vector<8x8x8xf32>
    "tpu.trace_stop"() : () -> ()
    %598 = arith.addf %597, %7 : vector<8x8x8xf32>
    %cst_150 = arith.constant dense<0xFF800000> : vector<8x8xf32>
    %599 = vector.multi_reduction <maximumf>, %598, %cst_150 [2] : vector<8x8x8xf32> to vector<8x8xf32>
    %600 = vector.shape_cast %599 : vector<8x8xf32> to vector<8x8x1xf32>
    %601 = vector.broadcast %600 : vector<8x8x1xf32> to vector<8x8x8xf32>
    %602 = arith.subf %598, %601 : vector<8x8x8xf32>
    %603 = math.exp %602 : vector<8x8x8xf32>
    %cst_151 = arith.constant dense<0.000000e+00> : vector<8x8xf32>
    %604 = vector.multi_reduction <add>, %603, %cst_151 [2] : vector<8x8x8xf32> to vector<8x8xf32>
    %605 = vector.shape_cast %604 : vector<8x8xf32> to vector<8x8x1xf32>
    %606 = tpu.reciprocal %605 {approx = true} : vector<8x8x1xf32> -> vector<8x8x1xf32>
    %607 = vector.broadcast %606 : vector<8x8x1xf32> to vector<8x8x8xf32>
    %608 = arith.mulf %603, %607 : vector<8x8x8xf32>
    %609 = arith.truncf %608 : vector<8x8x8xf32> to vector<8x8x8xbf16>
    "tpu.trace_start"() <{level = 10 : i32, message = "bqk,bkd->bqd"}> : () -> ()
    %cst_152 = arith.constant dense<0.000000e+00> : vector<8x8x8xf32>
    %610 = tpu.matmul %609, %596, %cst_152 {dimension_numbers = #tpu.dot_dimension_numbers<[2], [1], [1], [2], [0, 0, 0, 1, 1, 2], [0], [0]>} : vector<8x8x8xbf16>, vector<8x8x8xbf16>, vector<8x8x8xf32> -> vector<8x8x8xf32>
    "tpu.trace_stop"() : () -> ()
    %611 = vector.extract_strided_slice %610 {offsets = [0, 0, 0], sizes = [2, 8, 8], strides = [1, 1, 1]} : vector<8x8x8xf32> to vector<2x8x8xf32>
    %612 = vector.shape_cast %611 : vector<2x8x8xf32> to vector<16x8xf32>
    %613 = vector.extract_strided_slice %610 {offsets = [2, 0, 0], sizes = [2, 8, 8], strides = [1, 1, 1]} : vector<8x8x8xf32> to vector<2x8x8xf32>
    %614 = vector.shape_cast %613 : vector<2x8x8xf32> to vector<16x8xf32>
    %615 = vector.extract_strided_slice %610 {offsets = [4, 0, 0], sizes = [2, 8, 8], strides = [1, 1, 1]} : vector<8x8x8xf32> to vector<2x8x8xf32>
    %616 = vector.shape_cast %615 : vector<2x8x8xf32> to vector<16x8xf32>
    %617 = vector.extract_strided_slice %610 {offsets = [6, 0, 0], sizes = [2, 8, 8], strides = [1, 1, 1]} : vector<8x8x8xf32> to vector<2x8x8xf32>
    %618 = vector.shape_cast %617 : vector<2x8x8xf32> to vector<16x8xf32>
    %619 = tpu.concatenate %612, %614, %616, %618 in 1 : vector<16x8xf32>, vector<16x8xf32>, vector<16x8xf32>, vector<16x8xf32> -> vector<16x32xf32>
    %620 = arith.truncf %619 : vector<16x32xf32> to vector<16x32xbf16>
    %cst_153 = arith.constant dense<0.000000e+00> : vector<16x32xf32>
    %621 = tpu.matmul %620, %564, %cst_153 {dimension_numbers = #tpu.dot_dimension_numbers<[1], [0], [0], [1], [0, 0, 1, 1], [], []>} : vector<16x32xbf16>, vector<32x32xbf16>, vector<16x32xf32> -> vector<16x32xf32>
    %622 = vector.broadcast %565 : vector<1x32xf32> to vector<16x32xf32>
    %623 = arith.addf %621, %622 : vector<16x32xf32>
    %624 = arith.addf %551, %623 : vector<16x32xf32>
    %625 = vector.extract_strided_slice %553 {offsets = [7, 0], sizes = [1, 32], strides = [1, 1]} : vector<13x96xf32> to vector<1x32xf32>
    %626 = vector.extract_strided_slice %553 {offsets = [8, 0], sizes = [1, 32], strides = [1, 1]} : vector<13x96xf32> to vector<1x32xf32>
    %cst_154 = arith.constant dense<0.000000e+00> : vector<16xf32>
    %627 = vector.multi_reduction <add>, %624, %cst_154 [1] : vector<16x32xf32> to vector<16xf32>
    %628 = vector.shape_cast %627 : vector<16xf32> to vector<16x1xf32>
    %cst_155 = arith.constant 3.200000e+01 : f32
    %629 = vector.broadcast %cst_155 : f32 to vector<16x1xf32>
    %630 = arith.divf %628, %629 : vector<16x1xf32>
    %631 = vector.broadcast %630 : vector<16x1xf32> to vector<16x32xf32>
    %632 = arith.subf %624, %631 : vector<16x32xf32>
    %633 = arith.mulf %632, %632 : vector<16x32xf32>
    %cst_156 = arith.constant dense<0.000000e+00> : vector<16xf32>
    %634 = vector.multi_reduction <add>, %633, %cst_156 [1] : vector<16x32xf32> to vector<16xf32>
    %635 = vector.shape_cast %634 : vector<16xf32> to vector<16x1xf32>
    %cst_157 = arith.constant 3.200000e+01 : f32
    %636 = vector.broadcast %cst_157 : f32 to vector<16x1xf32>
    %637 = arith.divf %635, %636 : vector<16x1xf32>
    %638 = vector.broadcast %630 : vector<16x1xf32> to vector<16x32xf32>
    %639 = arith.subf %624, %638 : vector<16x32xf32>
    %cst_158 = arith.constant 9.99999974E-6 : f32
    %640 = vector.broadcast %cst_158 : f32 to vector<16x1xf32>
    %641 = arith.addf %637, %640 : vector<16x1xf32>
    %642 = math.rsqrt %641 : vector<16x1xf32>
    %643 = vector.broadcast %642 : vector<16x1xf32> to vector<16x32xf32>
    %644 = arith.mulf %639, %643 : vector<16x32xf32>
    %645 = vector.broadcast %625 : vector<1x32xf32> to vector<16x32xf32>
    %646 = arith.mulf %644, %645 : vector<16x32xf32>
    %647 = vector.broadcast %626 : vector<1x32xf32> to vector<16x32xf32>
    %648 = arith.addf %646, %647 : vector<16x32xf32>
    %c1_159 = arith.constant 1 : index
    %c0_160 = arith.constant 0 : index
    %c0_161 = arith.constant 0 : index
    %649 = vector.load %arg12[%c1_159, %c0_160, %c0_161] : memref<2x32x32xbf16, #tpu.memory_space<vmem>>, vector<1x32x32xbf16>
    %650 = vector.shape_cast %649 : vector<1x32x32xbf16> to vector<32x32xbf16>
    %651 = vector.extract_strided_slice %553 {offsets = [2, 0], sizes = [1, 32], strides = [1, 1]} : vector<13x96xf32> to vector<1x32xf32>
    %652 = arith.truncf %648 : vector<16x32xf32> to vector<16x32xbf16>
    %cst_162 = arith.constant dense<0.000000e+00> : vector<16x32xf32>
    %653 = tpu.matmul %652, %650, %cst_162 {dimension_numbers = #tpu.dot_dimension_numbers<[1], [0], [0], [1], [0, 0, 1, 1], [], []>} : vector<16x32xbf16>, vector<32x32xbf16>, vector<16x32xf32> -> vector<16x32xf32>
    %654 = vector.broadcast %651 : vector<1x32xf32> to vector<16x32xf32>
    %655 = arith.addf %653, %654 : vector<16x32xf32>
    %c1_163 = arith.constant 1 : index
    %c0_164 = arith.constant 0 : index
    %c0_165 = arith.constant 0 : index
    %656 = vector.load %arg13[%c1_163, %c0_164, %c0_165] : memref<2x32x64xbf16, #tpu.memory_space<vmem>>, vector<1x32x64xbf16>
    %657 = vector.shape_cast %656 : vector<1x32x64xbf16> to vector<32x64xbf16>
    %658 = vector.extract_strided_slice %553 {offsets = [3, 0], sizes = [1, 64], strides = [1, 1]} : vector<13x96xf32> to vector<1x64xf32>
    %cst_166 = arith.constant dense<0.000000e+00> : vector<16x64xf32>
    %659 = tpu.matmul %313, %657, %cst_166 {dimension_numbers = #tpu.dot_dimension_numbers<[1], [0], [0], [1], [0, 0, 1, 1], [], []>} : vector<16x32xbf16>, vector<32x64xbf16>, vector<16x64xf32> -> vector<16x64xf32>
    %660 = vector.broadcast %658 : vector<1x64xf32> to vector<16x64xf32>
    %661 = arith.addf %659, %660 : vector<16x64xf32>
    %c1_167 = arith.constant 1 : index
    %c0_168 = arith.constant 0 : index
    %c0_169 = arith.constant 0 : index
    %662 = vector.load %arg14[%c1_167, %c0_168, %c0_169] : memref<2x32x32xbf16, #tpu.memory_space<vmem>>, vector<1x32x32xbf16>
    %663 = vector.shape_cast %662 : vector<1x32x32xbf16> to vector<32x32xbf16>
    %664 = vector.extract_strided_slice %553 {offsets = [4, 0], sizes = [1, 32], strides = [1, 1]} : vector<13x96xf32> to vector<1x32xf32>
    %665 = arith.truncf %655 : vector<16x32xf32> to vector<16x32xbf16>
    %666 = arith.truncf %661 : vector<16x64xf32> to vector<16x64xbf16>
    %667 = vector.extract_strided_slice %665 {offsets = [0, 0], sizes = [16, 8], strides = [1, 1]} : vector<16x32xbf16> to vector<16x8xbf16>
    %668 = vector.shape_cast %667 : vector<16x8xbf16> to vector<2x8x8xbf16>
    %669 = vector.extract_strided_slice %665 {offsets = [0, 8], sizes = [16, 8], strides = [1, 1]} : vector<16x32xbf16> to vector<16x8xbf16>
    %670 = vector.shape_cast %669 : vector<16x8xbf16> to vector<2x8x8xbf16>
    %671 = vector.extract_strided_slice %665 {offsets = [0, 16], sizes = [16, 8], strides = [1, 1]} : vector<16x32xbf16> to vector<16x8xbf16>
    %672 = vector.shape_cast %671 : vector<16x8xbf16> to vector<2x8x8xbf16>
    %673 = vector.extract_strided_slice %665 {offsets = [0, 24], sizes = [16, 8], strides = [1, 1]} : vector<16x32xbf16> to vector<16x8xbf16>
    %674 = vector.shape_cast %673 : vector<16x8xbf16> to vector<2x8x8xbf16>
    %675 = tpu.concatenate %668, %670, %672, %674 in 0 : vector<2x8x8xbf16>, vector<2x8x8xbf16>, vector<2x8x8xbf16>, vector<2x8x8xbf16> -> vector<8x8x8xbf16>
    %676 = vector.extract_strided_slice %666 {offsets = [0, 0], sizes = [16, 32], strides = [1, 1]} : vector<16x64xbf16> to vector<16x32xbf16>
    %677 = vector.extract_strided_slice %676 {offsets = [0, 0], sizes = [16, 8], strides = [1, 1]} : vector<16x32xbf16> to vector<16x8xbf16>
    %678 = vector.shape_cast %677 : vector<16x8xbf16> to vector<2x8x8xbf16>
    %679 = vector.extract_strided_slice %676 {offsets = [0, 8], sizes = [16, 8], strides = [1, 1]} : vector<16x32xbf16> to vector<16x8xbf16>
    %680 = vector.shape_cast %679 : vector<16x8xbf16> to vector<2x8x8xbf16>
    %681 = vector.extract_strided_slice %676 {offsets = [0, 16], sizes = [16, 8], strides = [1, 1]} : vector<16x32xbf16> to vector<16x8xbf16>
    %682 = vector.shape_cast %681 : vector<16x8xbf16> to vector<2x8x8xbf16>
    %683 = vector.extract_strided_slice %676 {offsets = [0, 24], sizes = [16, 8], strides = [1, 1]} : vector<16x32xbf16> to vector<16x8xbf16>
    %684 = vector.shape_cast %683 : vector<16x8xbf16> to vector<2x8x8xbf16>
    %685 = tpu.concatenate %678, %680, %682, %684 in 0 : vector<2x8x8xbf16>, vector<2x8x8xbf16>, vector<2x8x8xbf16>, vector<2x8x8xbf16> -> vector<8x8x8xbf16>
    %686 = vector.extract_strided_slice %666 {offsets = [0, 32], sizes = [16, 32], strides = [1, 1]} : vector<16x64xbf16> to vector<16x32xbf16>
    %687 = vector.extract_strided_slice %686 {offsets = [0, 0], sizes = [16, 8], strides = [1, 1]} : vector<16x32xbf16> to vector<16x8xbf16>
    %688 = vector.shape_cast %687 : vector<16x8xbf16> to vector<2x8x8xbf16>
    %689 = vector.extract_strided_slice %686 {offsets = [0, 8], sizes = [16, 8], strides = [1, 1]} : vector<16x32xbf16> to vector<16x8xbf16>
    %690 = vector.shape_cast %689 : vector<16x8xbf16> to vector<2x8x8xbf16>
    %691 = vector.extract_strided_slice %686 {offsets = [0, 16], sizes = [16, 8], strides = [1, 1]} : vector<16x32xbf16> to vector<16x8xbf16>
    %692 = vector.shape_cast %691 : vector<16x8xbf16> to vector<2x8x8xbf16>
    %693 = vector.extract_strided_slice %686 {offsets = [0, 24], sizes = [16, 8], strides = [1, 1]} : vector<16x32xbf16> to vector<16x8xbf16>
    %694 = vector.shape_cast %693 : vector<16x8xbf16> to vector<2x8x8xbf16>
    %695 = tpu.concatenate %688, %690, %692, %694 in 0 : vector<2x8x8xbf16>, vector<2x8x8xbf16>, vector<2x8x8xbf16>, vector<2x8x8xbf16> -> vector<8x8x8xbf16>
    "tpu.trace_start"() <{level = 10 : i32, message = "bqd,bkd->bqk"}> : () -> ()
    %cst_170 = arith.constant dense<0.000000e+00> : vector<8x8x8xf32>
    %696 = tpu.matmul %675, %685, %cst_170 {dimension_numbers = #tpu.dot_dimension_numbers<[2], [2], [1], [1], [0, 0, 0, 1, 1, 1], [0], [0]>} : vector<8x8x8xbf16>, vector<8x8x8xbf16>, vector<8x8x8xf32> -> vector<8x8x8xf32>
    "tpu.trace_stop"() : () -> ()
    %697 = arith.addf %696, %11 : vector<8x8x8xf32>
    %cst_171 = arith.constant dense<0xFF800000> : vector<8x8xf32>
    %698 = vector.multi_reduction <maximumf>, %697, %cst_171 [2] : vector<8x8x8xf32> to vector<8x8xf32>
    %699 = vector.shape_cast %698 : vector<8x8xf32> to vector<8x8x1xf32>
    %700 = vector.broadcast %699 : vector<8x8x1xf32> to vector<8x8x8xf32>
    %701 = arith.subf %697, %700 : vector<8x8x8xf32>
    %702 = math.exp %701 : vector<8x8x8xf32>
    %cst_172 = arith.constant dense<0.000000e+00> : vector<8x8xf32>
    %703 = vector.multi_reduction <add>, %702, %cst_172 [2] : vector<8x8x8xf32> to vector<8x8xf32>
    %704 = vector.shape_cast %703 : vector<8x8xf32> to vector<8x8x1xf32>
    %705 = tpu.reciprocal %704 {approx = true} : vector<8x8x1xf32> -> vector<8x8x1xf32>
    %706 = vector.broadcast %705 : vector<8x8x1xf32> to vector<8x8x8xf32>
    %707 = arith.mulf %702, %706 : vector<8x8x8xf32>
    %708 = arith.truncf %707 : vector<8x8x8xf32> to vector<8x8x8xbf16>
    "tpu.trace_start"() <{level = 10 : i32, message = "bqk,bkd->bqd"}> : () -> ()
    %cst_173 = arith.constant dense<0.000000e+00> : vector<8x8x8xf32>
    %709 = tpu.matmul %708, %695, %cst_173 {dimension_numbers = #tpu.dot_dimension_numbers<[2], [1], [1], [2], [0, 0, 0, 1, 1, 2], [0], [0]>} : vector<8x8x8xbf16>, vector<8x8x8xbf16>, vector<8x8x8xf32> -> vector<8x8x8xf32>
    "tpu.trace_stop"() : () -> ()
    %710 = vector.extract_strided_slice %709 {offsets = [0, 0, 0], sizes = [2, 8, 8], strides = [1, 1, 1]} : vector<8x8x8xf32> to vector<2x8x8xf32>
    %711 = vector.shape_cast %710 : vector<2x8x8xf32> to vector<16x8xf32>
    %712 = vector.extract_strided_slice %709 {offsets = [2, 0, 0], sizes = [2, 8, 8], strides = [1, 1, 1]} : vector<8x8x8xf32> to vector<2x8x8xf32>
    %713 = vector.shape_cast %712 : vector<2x8x8xf32> to vector<16x8xf32>
    %714 = vector.extract_strided_slice %709 {offsets = [4, 0, 0], sizes = [2, 8, 8], strides = [1, 1, 1]} : vector<8x8x8xf32> to vector<2x8x8xf32>
    %715 = vector.shape_cast %714 : vector<2x8x8xf32> to vector<16x8xf32>
    %716 = vector.extract_strided_slice %709 {offsets = [6, 0, 0], sizes = [2, 8, 8], strides = [1, 1, 1]} : vector<8x8x8xf32> to vector<2x8x8xf32>
    %717 = vector.shape_cast %716 : vector<2x8x8xf32> to vector<16x8xf32>
    %718 = tpu.concatenate %711, %713, %715, %717 in 1 : vector<16x8xf32>, vector<16x8xf32>, vector<16x8xf32>, vector<16x8xf32> -> vector<16x32xf32>
    %719 = arith.truncf %718 : vector<16x32xf32> to vector<16x32xbf16>
    %cst_174 = arith.constant dense<0.000000e+00> : vector<16x32xf32>
    %720 = tpu.matmul %719, %663, %cst_174 {dimension_numbers = #tpu.dot_dimension_numbers<[1], [0], [0], [1], [0, 0, 1, 1], [], []>} : vector<16x32xbf16>, vector<32x32xbf16>, vector<16x32xf32> -> vector<16x32xf32>
    %721 = vector.broadcast %664 : vector<1x32xf32> to vector<16x32xf32>
    %722 = arith.addf %720, %721 : vector<16x32xf32>
    %723 = arith.addf %648, %722 : vector<16x32xf32>
    %724 = vector.extract_strided_slice %553 {offsets = [9, 0], sizes = [1, 32], strides = [1, 1]} : vector<13x96xf32> to vector<1x32xf32>
    %725 = vector.extract_strided_slice %553 {offsets = [10, 0], sizes = [1, 32], strides = [1, 1]} : vector<13x96xf32> to vector<1x32xf32>
    %cst_175 = arith.constant dense<0.000000e+00> : vector<16xf32>
    %726 = vector.multi_reduction <add>, %723, %cst_175 [1] : vector<16x32xf32> to vector<16xf32>
    %727 = vector.shape_cast %726 : vector<16xf32> to vector<16x1xf32>
    %cst_176 = arith.constant 3.200000e+01 : f32
    %728 = vector.broadcast %cst_176 : f32 to vector<16x1xf32>
    %729 = arith.divf %727, %728 : vector<16x1xf32>
    %730 = vector.broadcast %729 : vector<16x1xf32> to vector<16x32xf32>
    %731 = arith.subf %723, %730 : vector<16x32xf32>
    %732 = arith.mulf %731, %731 : vector<16x32xf32>
    %cst_177 = arith.constant dense<0.000000e+00> : vector<16xf32>
    %733 = vector.multi_reduction <add>, %732, %cst_177 [1] : vector<16x32xf32> to vector<16xf32>
    %734 = vector.shape_cast %733 : vector<16xf32> to vector<16x1xf32>
    %cst_178 = arith.constant 3.200000e+01 : f32
    %735 = vector.broadcast %cst_178 : f32 to vector<16x1xf32>
    %736 = arith.divf %734, %735 : vector<16x1xf32>
    %737 = vector.broadcast %729 : vector<16x1xf32> to vector<16x32xf32>
    %738 = arith.subf %723, %737 : vector<16x32xf32>
    %cst_179 = arith.constant 9.99999974E-6 : f32
    %739 = vector.broadcast %cst_179 : f32 to vector<16x1xf32>
    %740 = arith.addf %736, %739 : vector<16x1xf32>
    %741 = math.rsqrt %740 : vector<16x1xf32>
    %742 = vector.broadcast %741 : vector<16x1xf32> to vector<16x32xf32>
    %743 = arith.mulf %738, %742 : vector<16x32xf32>
    %744 = vector.broadcast %724 : vector<1x32xf32> to vector<16x32xf32>
    %745 = arith.mulf %743, %744 : vector<16x32xf32>
    %746 = vector.broadcast %725 : vector<1x32xf32> to vector<16x32xf32>
    %747 = arith.addf %745, %746 : vector<16x32xf32>
    %c1_180 = arith.constant 1 : index
    %c0_181 = arith.constant 0 : index
    %c0_182 = arith.constant 0 : index
    %748 = vector.load %arg15[%c1_180, %c0_181, %c0_182] : memref<2x32x64xbf16, #tpu.memory_space<vmem>>, vector<1x32x64xbf16>
    %749 = vector.shape_cast %748 : vector<1x32x64xbf16> to vector<32x64xbf16>
    %750 = vector.extract_strided_slice %553 {offsets = [5, 0], sizes = [1, 64], strides = [1, 1]} : vector<13x96xf32> to vector<1x64xf32>
    %751 = arith.truncf %747 : vector<16x32xf32> to vector<16x32xbf16>
    %cst_183 = arith.constant dense<0.000000e+00> : vector<16x64xf32>
    %752 = tpu.matmul %751, %749, %cst_183 {dimension_numbers = #tpu.dot_dimension_numbers<[1], [0], [0], [1], [0, 0, 1, 1], [], []>} : vector<16x32xbf16>, vector<32x64xbf16>, vector<16x64xf32> -> vector<16x64xf32>
    %753 = vector.broadcast %750 : vector<1x64xf32> to vector<16x64xf32>
    %754 = arith.addf %752, %753 : vector<16x64xf32>
    %cst_184 = arith.constant 0.000000e+00 : f32
    %755 = vector.broadcast %cst_184 : f32 to vector<16x64xf32>
    %756 = arith.maximumf %754, %755 : vector<16x64xf32>
    %c1_185 = arith.constant 1 : index
    %c0_186 = arith.constant 0 : index
    %c0_187 = arith.constant 0 : index
    %757 = vector.load %arg16[%c1_185, %c0_186, %c0_187] : memref<2x64x32xbf16, #tpu.memory_space<vmem>>, vector<1x64x32xbf16>
    %758 = vector.shape_cast %757 : vector<1x64x32xbf16> to vector<64x32xbf16>
    %759 = vector.extract_strided_slice %553 {offsets = [6, 0], sizes = [1, 32], strides = [1, 1]} : vector<13x96xf32> to vector<1x32xf32>
    %760 = arith.truncf %756 : vector<16x64xf32> to vector<16x64xbf16>
    %cst_188 = arith.constant dense<0.000000e+00> : vector<16x32xf32>
    %761 = tpu.matmul %760, %758, %cst_188 {dimension_numbers = #tpu.dot_dimension_numbers<[1], [0], [0], [1], [0, 0, 1, 1], [], []>} : vector<16x64xbf16>, vector<64x32xbf16>, vector<16x32xf32> -> vector<16x32xf32>
    %762 = vector.broadcast %759 : vector<1x32xf32> to vector<16x32xf32>
    %763 = arith.addf %761, %762 : vector<16x32xf32>
    %764 = arith.addf %747, %763 : vector<16x32xf32>
    %765 = vector.extract_strided_slice %553 {offsets = [11, 0], sizes = [1, 32], strides = [1, 1]} : vector<13x96xf32> to vector<1x32xf32>
    %766 = vector.extract_strided_slice %553 {offsets = [12, 0], sizes = [1, 32], strides = [1, 1]} : vector<13x96xf32> to vector<1x32xf32>
    %cst_189 = arith.constant dense<0.000000e+00> : vector<16xf32>
    %767 = vector.multi_reduction <add>, %764, %cst_189 [1] : vector<16x32xf32> to vector<16xf32>
    %768 = vector.shape_cast %767 : vector<16xf32> to vector<16x1xf32>
    %cst_190 = arith.constant 3.200000e+01 : f32
    %769 = vector.broadcast %cst_190 : f32 to vector<16x1xf32>
    %770 = arith.divf %768, %769 : vector<16x1xf32>
    %771 = vector.broadcast %770 : vector<16x1xf32> to vector<16x32xf32>
    %772 = arith.subf %764, %771 : vector<16x32xf32>
    %773 = arith.mulf %772, %772 : vector<16x32xf32>
    %cst_191 = arith.constant dense<0.000000e+00> : vector<16xf32>
    %774 = vector.multi_reduction <add>, %773, %cst_191 [1] : vector<16x32xf32> to vector<16xf32>
    %775 = vector.shape_cast %774 : vector<16xf32> to vector<16x1xf32>
    %cst_192 = arith.constant 3.200000e+01 : f32
    %776 = vector.broadcast %cst_192 : f32 to vector<16x1xf32>
    %777 = arith.divf %775, %776 : vector<16x1xf32>
    %778 = vector.broadcast %770 : vector<16x1xf32> to vector<16x32xf32>
    %779 = arith.subf %764, %778 : vector<16x32xf32>
    %cst_193 = arith.constant 9.99999974E-6 : f32
    %780 = vector.broadcast %cst_193 : f32 to vector<16x1xf32>
    %781 = arith.addf %777, %780 : vector<16x1xf32>
    %782 = math.rsqrt %781 : vector<16x1xf32>
    %783 = vector.broadcast %782 : vector<16x1xf32> to vector<16x32xf32>
    %784 = arith.mulf %779, %783 : vector<16x32xf32>
    %785 = vector.broadcast %765 : vector<1x32xf32> to vector<16x32xf32>
    %786 = arith.mulf %784, %785 : vector<16x32xf32>
    %787 = vector.broadcast %766 : vector<1x32xf32> to vector<16x32xf32>
    %788 = arith.addf %786, %787 : vector<16x32xf32>
    %c0_194 = arith.constant 0 : index
    %c0_195 = arith.constant 0 : index
    %789 = vector.load %arg19[%c0_194, %c0_195] : memref<2x32xf32, #tpu.memory_space<vmem>>, vector<1x32xf32>
    %c1_196 = arith.constant 1 : index
    %c0_197 = arith.constant 0 : index
    %790 = vector.load %arg19[%c1_196, %c0_197] : memref<2x32xf32, #tpu.memory_space<vmem>>, vector<1x32xf32>
    %cst_198 = arith.constant dense<0.000000e+00> : vector<16xf32>
    %791 = vector.multi_reduction <add>, %788, %cst_198 [1] : vector<16x32xf32> to vector<16xf32>
    %792 = vector.shape_cast %791 : vector<16xf32> to vector<16x1xf32>
    %cst_199 = arith.constant 3.200000e+01 : f32
    %793 = vector.broadcast %cst_199 : f32 to vector<16x1xf32>
    %794 = arith.divf %792, %793 : vector<16x1xf32>
    %795 = vector.broadcast %794 : vector<16x1xf32> to vector<16x32xf32>
    %796 = arith.subf %788, %795 : vector<16x32xf32>
    %797 = arith.mulf %796, %796 : vector<16x32xf32>
    %cst_200 = arith.constant dense<0.000000e+00> : vector<16xf32>
    %798 = vector.multi_reduction <add>, %797, %cst_200 [1] : vector<16x32xf32> to vector<16xf32>
    %799 = vector.shape_cast %798 : vector<16xf32> to vector<16x1xf32>
    %cst_201 = arith.constant 3.200000e+01 : f32
    %800 = vector.broadcast %cst_201 : f32 to vector<16x1xf32>
    %801 = arith.divf %799, %800 : vector<16x1xf32>
    %802 = vector.broadcast %794 : vector<16x1xf32> to vector<16x32xf32>
    %803 = arith.subf %788, %802 : vector<16x32xf32>
    %cst_202 = arith.constant 9.99999974E-6 : f32
    %804 = vector.broadcast %cst_202 : f32 to vector<16x1xf32>
    %805 = arith.addf %801, %804 : vector<16x1xf32>
    %806 = math.rsqrt %805 : vector<16x1xf32>
    %807 = vector.broadcast %806 : vector<16x1xf32> to vector<16x32xf32>
    %808 = arith.mulf %803, %807 : vector<16x32xf32>
    %809 = vector.broadcast %789 : vector<1x32xf32> to vector<16x32xf32>
    %810 = arith.mulf %808, %809 : vector<16x32xf32>
    %811 = vector.broadcast %790 : vector<1x32xf32> to vector<16x32xf32>
    %812 = arith.addf %810, %811 : vector<16x32xf32>
    %c0_203 = arith.constant 0 : index
    %c0_204 = arith.constant 0 : index
    %813 = vector.load %arg20[%c0_203, %c0_204] : memref<32x128xbf16, #tpu.memory_space<vmem>>, vector<32x128xbf16>
    %c0_205 = arith.constant 0 : index
    %c0_206 = arith.constant 0 : index
    %814 = vector.load %arg21[%c0_205, %c0_206] : memref<1x128xf32, #tpu.memory_space<vmem>>, vector<1x128xf32>
    %815 = arith.truncf %812 : vector<16x32xf32> to vector<16x32xbf16>
    %cst_207 = arith.constant dense<0.000000e+00> : vector<16x128xf32>
    %816 = tpu.matmul %815, %813, %cst_207 {dimension_numbers = #tpu.dot_dimension_numbers<[1], [0], [0], [1], [0, 0, 1, 1], [], []>} : vector<16x32xbf16>, vector<32x128xbf16>, vector<16x128xf32> -> vector<16x128xf32>
    %817 = vector.broadcast %814 : vector<1x128xf32> to vector<16x128xf32>
    %818 = arith.addf %816, %817 : vector<16x128xf32>
    %c0_208 = arith.constant 0 : index
    %c0_209 = arith.constant 0 : index
    %819 = vector.load %arg22[%c0_208, %c0_209] : memref<16x128xf32, #tpu.memory_space<vmem>>, vector<16x128xf32>
    tpu.vector_store %arg22[%c0_208, %c0_209], %818 {strides = array<i32>} : memref<16x128xf32, #tpu.memory_space<vmem>>, vector<16x128xf32>,
    return
  }
}

</mosaic_0001>

<llo_original>
// kernel: math_solver_forward.1
$region0: #{math_solver_forward.1}
  #allocation0 [shape = 'u32[]', space=smem, size = 0x4, offset = 0x4, fixed_abs, tag = 'smem constant byte address 0x4 - core index']
  #allocation1 [shape = 'u32[72,128]{1,0:T(1,128)}', space=vmem, size = 0x9000, scoped, tag = 'internal scratch']
  %s0 = inlined_call_operand.vmem [shape: f32[16,32], index: 0, kind: input, shape index: {}]
  %s1 = inlined_call_operand.vmem [shape: f32[16,32], index: 1, kind: input, shape index: {}]
  %s2 = inlined_call_operand.vmem [shape: f32[8,8], index: 2, kind: input, shape index: {}, may-alias: {2,4}]
  %s3 = inlined_call_operand.vmem [shape: f32[8,8], index: 3, kind: input, shape index: {}]
  %s4 = inlined_call_operand.vmem [shape: f32[8,8], index: 4, kind: input, shape index: {}, may-alias: {2,4}]
  %s5 = inlined_call_operand.hbm [shape: bf16[2,32,96], index: 5, kind: input, shape index: {}]
  %s6 = inlined_call_operand.hbm [shape: bf16[2,32,32], index: 6, kind: input, shape index: {}]
  %s7 = inlined_call_operand.hbm [shape: bf16[2,32,64], index: 7, kind: input, shape index: {}]
  %s8 = inlined_call_operand.vmem [shape: bf16[2,64,32], index: 8, kind: input, shape index: {}]
  %s9 = inlined_call_operand.hbm [shape: f32[2,8,96], index: 9, kind: input, shape index: {}]
  %s10 = inlined_call_operand.hbm [shape: bf16[2,32,96], index: 10, kind: input, shape index: {}]
  %s11 = inlined_call_operand.hbm [shape: bf16[2,32,32], index: 11, kind: input, shape index: {}]
  %s12 = inlined_call_operand.vmem [shape: bf16[2,32,32], index: 12, kind: input, shape index: {}]
  %s13 = inlined_call_operand.vmem [shape: bf16[2,32,64], index: 13, kind: input, shape index: {}]
  %s14 = inlined_call_operand.vmem [shape: bf16[2,32,32], index: 14, kind: input, shape index: {}]
  %s15 = inlined_call_operand.vmem [shape: bf16[2,32,64], index: 15, kind: input, shape index: {}]
  %s16 = inlined_call_operand.vmem [shape: bf16[2,64,32], index: 16, kind: input, shape index: {}]
  %s17 = inlined_call_operand.vmem [shape: f32[2,13,96], index: 17, kind: input, shape index: {}]
  %s18 = inlined_call_operand.vmem [shape: f32[2,32], index: 18, kind: input, shape index: {}, may-alias: {18,19}]
  %s19 = inlined_call_operand.vmem [shape: f32[2,32], index: 19, kind: input, shape index: {}, may-alias: {18,19}]
  %s20 = inlined_call_operand.vmem [shape: bf16[32,128], index: 20, kind: input, shape index: {}]
  %s21 = inlined_call_operand.vmem [shape: f32[1,128], index: 21, kind: input, shape index: {}]
  %s22 = inlined_call_operand.hbm [shape: f32[16,128], index: 22, kind: output, shape index: {}]
  %s23 = sld [smem:[#allocation0]]
  $region122: #{math_solver_forward.1} parent=0
    _
  %s25 = ssub.s32 1, %s23
  %s26 = scalar_select 0, %s25, %s23
  $region1: #{math_solver_forward.1} parent=0
    #allocation2 [shape = 'u8[16384]{0}', space=vmem, size = 0x4000, scoped, tag = 'input window, operand 5, single buffered']
    #allocation3 [shape = 's32[1]{0}', space=sflag, size = 0x4, scoped, tag = 'scoped memory for math_solver_forward.1']
    #allocation4 [shape = 's32[1]{0}', space=sflag, size = 0x4, scoped, tag = 'scoped memory for math_solver_forward.1']
    #allocation5 [shape = 'u8[16384]{0}', space=vmem, size = 0x4000, scoped, tag = 'input window, operand 6, single buffered']
    #allocation6 [shape = 's32[1]{0}', space=sflag, size = 0x4, scoped, tag = 'scoped memory for math_solver_forward.1']
    #allocation7 [shape = 'u8[16384]{0}', space=vmem, size = 0x4000, scoped, tag = 'input window, operand 7, single buffered']
    #allocation8 [shape = 'u8[8192]{0}', space=vmem, size = 0x2000, scoped, tag = 'input window, operand 9, single buffered']
    #allocation9 [shape = 's32[1]{0}', space=sflag, size = 0x4, scoped, tag = 'scoped memory for math_solver_forward.1']
    #allocation10 [shape = 'u8[16384]{0}', space=vmem, size = 0x4000, scoped, tag = 'input window, operand 10, single buffered']
    #allocation11 [shape = 'u8[16384]{0}', space=vmem, size = 0x4000, scoped, tag = 'input window, operand 11, single buffered']
    #allocation12 [shape = 's32[1]{0}', space=sflag, size = 0x4, scoped, tag = 'scoped memory for math_solver_forward.1']
    #allocation13 [shape = 'u8[8192]{0}', space=vmem, size = 0x2000, scoped, tag = 'output window, operand 0, single buffered']
    %27 = vsyncpa [#allocation3], 0
    %28 = vsyncpa [#allocation6], 0
    %29 = vsyncpa [#allocation9], 0
    %30 = vsyncpa [#allocation12], 0
    %31 = vsyncpa [#allocation4], 0
    // Predicated region
    $region2: #{math_solver_forward.1} parent=1 // pred_check
      _
    $region3: #{math_solver_forward.1} parent=1 // pred_check_branch
      %33 = sbr.rel (0) target = $region5
    $region4: #{math_solver_forward.1} parent=1 // pred_region
      _
    $region5: #{math_solver_forward.1} parent=1 // pred_fallthru
      _
    // Predicated region
    $region6: #{math_solver_forward.1} parent=1 // pred_check
      _
    $region7: #{math_solver_forward.1} parent=1 // pred_check_branch
      %35 = sbr.rel (0) target = $region9
    $region8: #{math_solver_forward.1} parent=1 // pred_region
      _
    $region9: #{math_solver_forward.1} parent=1 // pred_fallthru
      _
    // Predicated region
    $region10: #{math_solver_forward.1} parent=1 // pred_check
      _
    $region11: #{math_solver_forward.1} parent=1 // pred_check_branch
      %37 = sbr.rel (0) target = $region13
    $region12: #{math_solver_forward.1} parent=1 // pred_region
      _
    $region13: #{math_solver_forward.1} parent=1 // pred_fallthru
      _
    // Predicated region
    $region14: #{math_solver_forward.1} parent=1 // pred_check
      _
    $region15: #{math_solver_forward.1} parent=1 // pred_check_branch
      %39 = sbr.rel (0) target = $region17
    $region16: #{math_solver_forward.1} parent=1 // pred_region
      _
    $region17: #{math_solver_forward.1} parent=1 // pred_fallthru
      _
    // Predicated region
    $region18: #{math_solver_forward.1} parent=1 // pred_check
      _
    $region19: #{math_solver_forward.1} parent=1 // pred_check_branch
      %41 = sbr.rel (0) target = $region21
    $region20: #{math_solver_forward.1} parent=1 // pred_region
      _
    $region21: #{math_solver_forward.1} parent=1 // pred_fallthru
      _
    // Predicated region
    $region22: #{math_solver_forward.1} parent=1 // pred_check
      _
    $region23: #{math_solver_forward.1} parent=1 // pred_check_branch
      %43 = sbr.rel (0) target = $region25
    $region24: #{math_solver_forward.1} parent=1 // pred_region
      %45 = vsyncadd [#allocation3], 0
      %s46 = sshll.u32 %s5, 4
      %s47 = int_to_ptr.hbm [resolvable:$true] %s46
      %s48 = sshll.u32 [#allocation2], 4
      %s49 = int_to_ptr.vmem [resolvable:$true] %s48
      %54 = dma.hbm_to_vmem [thread:$0]  %s47, 512, %s49, [#allocation3], 64, 64, 4
    $region25: #{math_solver_forward.1} parent=1 // pred_fallthru
      _
    // Predicated region
    $region26: #{math_solver_forward.1} parent=1 // pred_check
      _
    $region27: #{math_solver_forward.1} parent=1 // pred_check_branch
      %56 = sbr.rel (0) target = $region29
    $region28: #{math_solver_forward.1} parent=1 // pred_region
      %58 = vsyncadd [#allocation6], 0
      %s59 = sshll.u32 %s6, 4
      %s60 = int_to_ptr.hbm [resolvable:$true] %s59
      %s61 = sshll.u32 [#allocation5], 4
      %s62 = int_to_ptr.vmem [resolvable:$true] %s61
      %67 = dma.hbm_to_vmem [thread:$0]  %s60, 512, %s62, [#allocation6], 64, 64, 4
    $region29: #{math_solver_forward.1} parent=1 // pred_fallthru
      _
    // Predicated region
    $region30: #{math_solver_forward.1} parent=1 // pred_check
      _
    $region31: #{math_solver_forward.1} parent=1 // pred_check_branch
      %69 = sbr.rel (0) target = $region33
    $region32: #{math_solver_forward.1} parent=1 // pred_region
      %71 = vsyncadd [#allocation6], 0
      %s72 = sshll.u32 %s7, 4
      %s73 = int_to_ptr.hbm [resolvable:$true] %s72
      %s74 = sshll.u32 [#allocation7], 4
      %s75 = int_to_ptr.vmem [resolvable:$true] %s74
      %80 = dma.hbm_to_vmem [thread:$0]  %s73, 512, %s75, [#allocation6], 64, 64, 4
    $region33: #{math_solver_forward.1} parent=1 // pred_fallthru
      _
    // Predicated region
    $region34: #{math_solver_forward.1} parent=1 // pred_check
      _
    $region35: #{math_solver_forward.1} parent=1 // pred_check_branch
      %82 = sbr.rel (0) target = $region37
    $region36: #{math_solver_forward.1} parent=1 // pred_region
      _
    $region37: #{math_solver_forward.1} parent=1 // pred_fallthru
      _
    // Predicated region
    $region38: #{math_solver_forward.1} parent=1 // pred_check
      _
    $region39: #{math_solver_forward.1} parent=1 // pred_check_branch
      %84 = sbr.rel (0) target = $region41
    $region40: #{math_solver_forward.1} parent=1 // pred_region
      %86 = vsyncadd [#allocation9], 0
      %s87 = sshll.u32 %s9, 4
      %s88 = int_to_ptr.hbm [resolvable:$true] %s87
      %s89 = sshll.u32 [#allocation8], 4
      %s90 = int_to_ptr.vmem [resolvable:$true] %s89
      %95 = dma.hbm_to_vmem [thread:$0]  %s88, 256, %s90, [#allocation9], 128, 128, 8
    $region41: #{math_solver_forward.1} parent=1 // pred_fallthru
      _
    // Predicated region
    $region42: #{math_solver_forward.1} parent=1 // pred_check
      _
    $region43: #{math_solver_forward.1} parent=1 // pred_check_branch
      %97 = sbr.rel (0) target = $region45
    $region44: #{math_solver_forward.1} parent=1 // pred_region
      %99 = vsyncadd [#allocation9], 0
      %s100 = sshll.u32 %s10, 4
      %s101 = int_to_ptr.hbm [resolvable:$true] %s100
      %s102 = sshll.u32 [#allocation10], 4
      %s103 = int_to_ptr.vmem [resolvable:$true] %s102
      %108 = dma.hbm_to_vmem [thread:$0]  %s101, 512, %s103, [#allocation9], 64, 64, 4
    $region45: #{math_solver_forward.1} parent=1 // pred_fallthru
      _
    // Predicated region
    $region46: #{math_solver_forward.1} parent=1 // pred_check
      _
    $region47: #{math_solver_forward.1} parent=1 // pred_check_branch
      %110 = sbr.rel (0) target = $region49
    $region48: #{math_solver_forward.1} parent=1 // pred_region
      %112 = vsyncadd [#allocation12], 0
      %s113 = sshll.u32 %s11, 4
      %s114 = int_to_ptr.hbm [resolvable:$true] %s113
      %s115 = sshll.u32 [#allocation11], 4
      %s116 = int_to_ptr.vmem [resolvable:$true] %s115
      %121 = dma.hbm_to_vmem [thread:$0]  %s114, 512, %s116, [#allocation12], 64, 64, 4
    $region49: #{math_solver_forward.1} parent=1 // pred_fallthru
      _
    // Predicated region
    $region50: #{math_solver_forward.1} parent=1 // pred_check
      _
    $region51: #{math_solver_forward.1} parent=1 // pred_check_branch
      %123 = sbr.rel (0) target = $region53
    $region52: #{math_solver_forward.1} parent=1 // pred_region
      _
    $region53: #{math_solver_forward.1} parent=1 // pred_fallthru
      _
    // Predicated region
    $region54: #{math_solver_forward.1} parent=1 // pred_check
      _
    $region55: #{math_solver_forward.1} parent=1 // pred_check_branch
      %125 = sbr.rel (0) target = $region57
    $region56: #{math_solver_forward.1} parent=1 // pred_region
      _
    $region57: #{math_solver_forward.1} parent=1 // pred_fallthru
      _
    // Predicated region
    $region58: #{math_solver_forward.1} parent=1 // pred_check
      _
    $region59: #{math_solver_forward.1} parent=1 // pred_check_branch
      %127 = sbr.rel (0) target = $region61
    $region60: #{math_solver_forward.1} parent=1 // pred_region
      _
    $region61: #{math_solver_forward.1} parent=1 // pred_fallthru
      _
    // Predicated region
    $region62: #{math_solver_forward.1} parent=1 // pred_check
      _
    $region63: #{math_solver_forward.1} parent=1 // pred_check_branch
      %129 = sbr.rel (0) target = $region65
    $region64: #{math_solver_forward.1} parent=1 // pred_region
      _
    $region65: #{math_solver_forward.1} parent=1 // pred_fallthru
      _
    // Predicated region
    $region66: #{math_solver_forward.1} parent=1 // pred_check
      _
    $region67: #{math_solver_forward.1} parent=1 // pred_check_branch
      %131 = sbr.rel (0) target = $region69
    $region68: #{math_solver_forward.1} parent=1 // pred_region
      _
    $region69: #{math_solver_forward.1} parent=1 // pred_fallthru
      _
    // Predicated region
    $region70: #{math_solver_forward.1} parent=1 // pred_check
      _
    $region71: #{math_solver_forward.1} parent=1 // pred_check_branch
      %133 = sbr.rel (0) target = $region73
    $region72: #{math_solver_forward.1} parent=1 // pred_region
      _
    $region73: #{math_solver_forward.1} parent=1 // pred_fallthru
      _
    // Predicated region
    $region74: #{math_solver_forward.1} parent=1 // pred_check
      _
    $region75: #{math_solver_forward.1} parent=1 // pred_check_branch
      %135 = sbr.rel (0) target = $region77
    $region76: #{math_solver_forward.1} parent=1 // pred_region
      _
    $region77: #{math_solver_forward.1} parent=1 // pred_fallthru
      _
    // Predicated region
    $region78: #{math_solver_forward.1} parent=1 // pred_check
      _
    $region79: #{math_solver_forward.1} parent=1 // pred_check_branch
      %137 = sbr.rel (0) target = $region81
    $region80: #{math_solver_forward.1} parent=1 // pred_region
      _
    $region81: #{math_solver_forward.1} parent=1 // pred_fallthru
      _
    // Predicated region
    $region82: #{math_solver_forward.1} parent=1 // pred_check
      _
    $region83: #{math_solver_forward.1} parent=1 // pred_check_branch
      %139 = sbr.rel (0) target = $region85
    $region84: #{math_solver_forward.1} parent=1 // pred_region
      _
    $region85: #{math_solver_forward.1} parent=1 // pred_fallthru
      _
    // Predicated region
    $region86: #{math_solver_forward.1} parent=1 // pred_check
      _
    $region87: #{math_solver_forward.1} parent=1 // pred_check_branch
      %141 = sbr.rel (0) target = $region89
    $region88: #{math_solver_forward.1} parent=1 // pred_region
      _
    $region89: #{math_solver_forward.1} parent=1 // pred_fallthru
      _
    // Predicated region
    $region90: #{math_solver_forward.1} parent=1 // pred_check
      _
    $region91: #{math_solver_forward.1} parent=1 // pred_check_branch
      %143 = sbr.rel (0) target = $region93
    $region92: #{math_solver_forward.1} parent=1 // pred_region
      %145 = dma.done [#allocation3], 512
    $region93: #{math_solver_forward.1} parent=1 // pred_fallthru
      _
    // Predicated region
    $region94: #{math_solver_forward.1} parent=1 // pred_check
      _
    $region95: #{math_solver_forward.1} parent=1 // pred_check_branch
      %147 = sbr.rel (0) target = $region97
    $region96: #{math_solver_forward.1} parent=1 // pred_region
      %149 = dma.done [#allocation6], 512
    $region97: #{math_solver_forward.1} parent=1 // pred_fallthru
      _
    // Predicated region
    $region98: #{math_solver_forward.1} parent=1 // pred_check
      _
    $region99: #{math_solver_forward.1} parent=1 // pred_check_branch
      %151 = sbr.rel (0) target = $region101
    $region100: #{math_solver_forward.1} parent=1 // pred_region
      %153 = dma.done [#allocation6], 512
    $region101: #{math_solver_forward.1} parent=1 // pred_fallthru
      _
    // Predicated region
    $region102: #{math_solver_forward.1} parent=1 // pred_check
      _
    $region103: #{math_solver_forward.1} parent=1 // pred_check_branch
      %155 = sbr.rel (0) target = $region105
    $region104: #{math_solver_forward.1} parent=1 // pred_region
      %157 = dma.done [#allocation9], 256
    $region105: #{math_solver_forward.1} parent=1 // pred_fallthru
      _
    // Predicated region
    $region106: #{math_solver_forward.1} parent=1 // pred_check
      _
    $region107: #{math_solver_forward.1} parent=1 // pred_check_branch
      %159 = sbr.rel (0) target = $region109
    $region108: #{math_solver_forward.1} parent=1 // pred_region
      %161 = dma.done [#allocation9], 512
    $region109: #{math_solver_forward.1} parent=1 // pred_fallthru
      _
    // Predicated region
    $region110: #{math_solver_forward.1} parent=1 // pred_check
      _
    $region111: #{math_solver_forward.1} parent=1 // pred_check_branch
      %163 = sbr.rel (0) target = $region113
    $region112: #{math_solver_forward.1} parent=1 // pred_region
      %165 = dma.done [#allocation12], 512
    $region113: #{math_solver_forward.1} parent=1 // pred_fallthru
      _
    %v167 = vld [vmem:[%s2] sm:$0xff]
    %v168 = vld [vmem:[%s3] sm:$0xff]
    %v169 = vld [vmem:[%s4] sm:$0xff]
    %v170 = vld [vmem:[%s0] sm:$0xff]
    %v171 = vld [vmem:[%s0 + $0x8] sm:$0xff]
    %v172 = vld [vmem:[#allocation8] sm:$0xff]
    %v173 = vld [vmem:[#allocation2] sm:$0xf]
    %v174 = vld [vmem:[#allocation2 + $0x4] sm:$0xf]
    %v175 = vld [vmem:[#allocation2 + $0x8] sm:$0xf]
    %v176 = vld [vmem:[#allocation2 + $0xc] sm:$0xf]
    %v177 = vpack.c.bf16 %v171, %v170
    %v178 = vperm.slane %v172, 0
    %v183 = vunpack.c.l.b16 %v173
    %v184 = vunpack.c.l.b16 %v174
    %v185 = vunpack.c.l.b16 %v175
    %v186 = vunpack.c.l.b16 %v176
    %v187 = vpack.c.b16 %v184, %v183
    %v188 = vpack.c.b16 %v186, %v185
    %vm191 = vcmask 261120
    %v193 = vsel %vm191, %v177, 0
    %195 = vmatpush.bf16.msra.mxu0 0
    %196 = vmatpush.bf16.msra.mxu0 0
    %197 = vmatpush.bf16.msra.mxu0 0
    %198 = vmatpush.bf16.msra.mxu0 0
    %199 = vmatpush.bf16.msra.mxu0 0
    %200 = vmatpush.bf16.msra.mxu0 0
    %201 = vmatpush.bf16.msra.mxu0 %v188
    %202 = vmatpush.bf16.msra.mxu0 %v187
    %203 = vmatmul.bf16.gmra.mxu0 %v193
    %v204 = vpop.f32.mrf.mxu0
    %v205 = vadd.f32 %v178, %v204
    %v206 = vpop.f32.mrf.mxu0
    %v207 = vadd.f32 %v178, %v206
    %208 = vdwg.mxu0
    %v209 = vld [vmem:[#allocation5] sm:$0xf]
    %v210 = vld [vmem:[#allocation5 + $0x4] sm:$0xf]
    %v211 = vld [vmem:[#allocation5 + $0x8] sm:$0xf]
    %v212 = vld [vmem:[#allocation5 + $0xc] sm:$0xf]
    %v213 = vpack.c.bf16 %v205, %v205
    %v214 = vpack.c.bf16 %v207, %v207
    %217 = vrot.lane.b32.xlu0 %v213, 120
    %v218 = vpop.permute.xlu0 %217
    %219 = vrot.lane.b32.xlu0 %v214, 120
    %v220 = vpop.permute.xlu0 %219
    %221 = vrot.lane.b32.xlu0 %v213, 112
    %v222 = vpop.permute.xlu0 %221
    %223 = vrot.lane.b32.xlu0 %v214, 112
    %v224 = vpop.permute.xlu0 %223
    %225 = vrot.lane.b32.xlu0 %v213, 104
    %v226 = vpop.permute.xlu0 %225
    %227 = vrot.lane.b32.xlu0 %v214, 104
    %v228 = vpop.permute.xlu0 %227
    %v229 = vunpack.c.l.b16 %v213
    %v230 = vpack.c.b16 %v229, %v229
    %231 = vrot.lane.b32.xlu0 %v230, 96
    %v232 = vpop.permute.xlu0 %231
    %vm233 = vcmask 64512
    %v235 = vsel %vm233, %v213, 0
    %v238 = vsel %vm233, %v232, 0
    %240 = vmatpush.bf16.xpose.msra.mxu0 0
    %241 = vmatpush.bf16.xpose.msra.mxu0 0
    %242 = vmatpush.bf16.xpose.msra.mxu0 0
    %243 = vmatpush.bf16.xpose.msra.mxu0 0
    %244 = vmatpush.bf16.xpose.msra.mxu0 0
    %245 = vmatpush.bf16.xpose.msra.mxu0 0
    %246 = vmatpush.bf16.xpose.msra.mxu0 0
    %247 = vmatpush.bf16.xpose.msra.mxu0 %v238
    %248 = vmatmul.bf16.gmra.mxu0 %v235
    %v249 = vpop.f32.mrf.mxu0
    %v250 = vadd.f32 %v167, %v249
    %v251 = vpop.f32.mrf.mxu0
    %252 = vdwg.mxu0
    %v253 = vunpack.c.l.b16 %v214
    %v254 = vpack.c.b16 %v253, %v253
    %255 = vrot.lane.b32.xlu0 %v254, 96
    %v256 = vpop.permute.xlu0 %255
    %v258 = vsel %vm233, %v214, 0
    %v261 = vsel %vm233, %v256, 0
    %263 = vmatpush.bf16.xpose.msra.mxu0 0
    %264 = vmatpush.bf16.xpose.msra.mxu0 0
    %265 = vmatpush.bf16.xpose.msra.mxu0 0
    %266 = vmatpush.bf16.xpose.msra.mxu0 0
    %267 = vmatpush.bf16.xpose.msra.mxu0 0
    %268 = vmatpush.bf16.xpose.msra.mxu0 0
    %269 = vmatpush.bf16.xpose.msra.mxu0 0
    %270 = vmatpush.bf16.xpose.msra.mxu0 %v261
    %271 = vmatmul.bf16.gmra.mxu0 %v258
    %v272 = vpop.f32.mrf.mxu0
    %v273 = vadd.f32 %v167, %v272
    %v274 = vpop.f32.mrf.mxu0
    %275 = vdwg.mxu0
    %v276 = vunpack.c.l.b16 %v218
    %v277 = vpack.c.b16 %v276, %v276
    %278 = vrot.lane.b32.xlu0 %v277, 96
    %v279 = vpop.permute.xlu0 %278
    %v281 = vsel %vm233, %v218, 0
    %v284 = vsel %vm233, %v279, 0
    %286 = vmatpush.bf16.xpose.msra.mxu0 0
    %287 = vmatpush.bf16.xpose.msra.mxu0 0
    %288 = vmatpush.bf16.xpose.msra.mxu0 0
    %289 = vmatpush.bf16.xpose.msra.mxu0 0
    %290 = vmatpush.bf16.xpose.msra.mxu0 0
    %291 = vmatpush.bf16.xpose.msra.mxu0 0
    %292 = vmatpush.bf16.xpose.msra.mxu0 0
    %293 = vmatpush.bf16.xpose.msra.mxu0 %v284
    %294 = vmatmul.bf16.gmra.mxu0 %v281
    %v295 = vpop.f32.mrf.mxu0
    %v296 = vadd.f32 %v167, %v295
    %v297 = vpop.f32.mrf.mxu0
    %298 = vdwg.mxu0
    %v299 = vunpack.c.l.b16 %v220
    %v300 = vpack.c.b16 %v299, %v299
    %301 = vrot.lane.b32.xlu0 %v300, 96
    %v302 = vpop.permute.xlu0 %301
    %v304 = vsel %vm233, %v220, 0
    %v307 = vsel %vm233, %v302, 0
    %309 = vmatpush.bf16.xpose.msra.mxu0 0
    %310 = vmatpush.bf16.xpose.msra.mxu0 0
    %311 = vmatpush.bf16.xpose.msra.mxu0 0
    %312 = vmatpush.bf16.xpose.msra.mxu0 0
    %313 = vmatpush.bf16.xpose.msra.mxu0 0
    %314 = vmatpush.bf16.xpose.msra.mxu0 0
    %315 = vmatpush.bf16.xpose.msra.mxu0 0
    %316 = vmatpush.bf16.xpose.msra.mxu0 %v307
    %317 = vmatmul.bf16.gmra.mxu0 %v304
    %v318 = vpop.f32.mrf.mxu0
    %v319 = vadd.f32 %v167, %v318
    %v320 = vpop.f32.mrf.mxu0
    %321 = vdwg.mxu0
    %v322 = vunpack.c.l.b16 %v222
    %v323 = vpack.c.b16 %v322, %v322
    %324 = vrot.lane.b32.xlu0 %v323, 96
    %v325 = vpop.permute.xlu0 %324
    %v327 = vsel %vm233, %v222, 0
    %v330 = vsel %vm233, %v325, 0
    %332 = vmatpush.bf16.xpose.msra.mxu0 0
    %333 = vmatpush.bf16.xpose.msra.mxu0 0
    %334 = vmatpush.bf16.xpose.msra.mxu0 0
    %335 = vmatpush.bf16.xpose.msra.mxu0 0
    %336 = vmatpush.bf16.xpose.msra.mxu0 0
    %337 = vmatpush.bf16.xpose.msra.mxu0 0
    %338 = vmatpush.bf16.xpose.msra.mxu0 0
    %339 = vmatpush.bf16.xpose.msra.mxu0 %v330
    %340 = vmatmul.bf16.gmra.mxu0 %v327
    %v341 = vpop.f32.mrf.mxu0
    %v342 = vadd.f32 %v167, %v341
    %v343 = vpop.f32.mrf.mxu0
    %344 = vdwg.mxu0
    %v345 = vunpack.c.l.b16 %v224
    %v346 = vpack.c.b16 %v345, %v345
    %347 = vrot.lane.b32.xlu0 %v346, 96
    %v348 = vpop.permute.xlu0 %347
    %v350 = vsel %vm233, %v224, 0
    %v353 = vsel %vm233, %v348, 0
    %355 = vmatpush.bf16.xpose.msra.mxu0 0
    %356 = vmatpush.bf16.xpose.msra.mxu0 0
    %357 = vmatpush.bf16.xpose.msra.mxu0 0
    %358 = vmatpush.bf16.xpose.msra.mxu0 0
    %359 = vmatpush.bf16.xpose.msra.mxu0 0
    %360 = vmatpush.bf16.xpose.msra.mxu0 0
    %361 = vmatpush.bf16.xpose.msra.mxu0 0
    %362 = vmatpush.bf16.xpose.msra.mxu0 %v353
    %363 = vmatmul.bf16.gmra.mxu0 %v350
    %v364 = vpop.f32.mrf.mxu0
    %v365 = vadd.f32 %v167, %v364
    %v366 = vpop.f32.mrf.mxu0
    %367 = vdwg.mxu0
    %v368 = vunpack.c.l.b16 %v226
    %v369 = vpack.c.b16 %v368, %v368
    %370 = vrot.lane.b32.xlu0 %v369, 96
    %v371 = vpop.permute.xlu0 %370
    %v373 = vsel %vm233, %v226, 0
    %v376 = vsel %vm233, %v371, 0
    %378 = vmatpush.bf16.xpose.msra.mxu0 0
    %379 = vmatpush.bf16.xpose.msra.mxu0 0
    %380 = vmatpush.bf16.xpose.msra.mxu0 0
    %381 = vmatpush.bf16.xpose.msra.mxu0 0
    %382 = vmatpush.bf16.xpose.msra.mxu0 0
    %383 = vmatpush.bf16.xpose.msra.mxu0 0
    %384 = vmatpush.bf16.xpose.msra.mxu0 0
    %385 = vmatpush.bf16.xpose.msra.mxu0 %v376
    %386 = vmatmul.bf16.gmra.mxu0 %v373
    %v387 = vpop.f32.mrf.mxu0
    %v388 = vadd.f32 %v167, %v387
    %v389 = vpop.f32.mrf.mxu0
    %390 = vdwg.mxu0
    %v391 = vunpack.c.l.b16 %v228
    %v392 = vpack.c.b16 %v391, %v391
    %393 = vrot.lane.b32.xlu0 %v392, 96
    %v394 = vpop.permute.xlu0 %393
    %v396 = vsel %vm233, %v228, 0
    %v399 = vsel %vm233, %v394, 0
    %401 = vmatpush.bf16.xpose.msra.mxu0 0
    %402 = vmatpush.bf16.xpose.msra.mxu0 0
    %403 = vmatpush.bf16.xpose.msra.mxu0 0
    %404 = vmatpush.bf16.xpose.msra.mxu0 0
    %405 = vmatpush.bf16.xpose.msra.mxu0 0
    %406 = vmatpush.bf16.xpose.msra.mxu0 0
    %407 = vmatpush.bf16.xpose.msra.mxu0 0
    %408 = vmatpush.bf16.xpose.msra.mxu0 %v399
    %409 = vmatmul.bf16.gmra.mxu0 %v396
    %v410 = vpop.f32.mrf.mxu0
    %v411 = vadd.f32 %v167, %v410
    %v412 = vpop.f32.mrf.mxu0
    %413 = vdwg.mxu0
    %v414 = vsel %vm233, %v250, -inf
    %415 = vmax.xlane.f32.xlu0 %v414
    %v416 = vpop.xlane.xlu0 %415
    %v417 = vsel %vm233, %v273, -inf
    %418 = vmax.xlane.f32.xlu0 %v417
    %v419 = vpop.xlane.xlu0 %418
    %v420 = vsel %vm233, %v296, -inf
    %421 = vmax.xlane.f32.xlu0 %v420
    %v422 = vpop.xlane.xlu0 %421
    %v423 = vsel %vm233, %v319, -inf
    %424 = vmax.xlane.f32.xlu0 %v423
    %v425 = vpop.xlane.xlu0 %424
    %v426 = vsel %vm233, %v342, -inf
    %427 = vmax.xlane.f32.xlu0 %v426
    %v428 = vpop.xlane.xlu0 %427
    %v429 = vsel %vm233, %v365, -inf
    %430 = vmax.xlane.f32.xlu0 %v429
    %v431 = vpop.xlane.xlu0 %430
    %v432 = vsel %vm233, %v388, -inf
    %433 = vmax.xlane.f32.xlu0 %v432
    %v434 = vpop.xlane.xlu0 %433
    %v435 = vsel %vm233, %v411, -inf
    %436 = vmax.xlane.f32.xlu0 %v435
    %v437 = vpop.xlane.xlu0 %436
    %v438 = vsub.f32 %v250, %v416
    %v439 = vsub.f32 %v273, %v419
    %v440 = vsub.f32 %v296, %v422
    %v441 = vsub.f32 %v319, %v425
    %v442 = vsub.f32 %v342, %v428
    %v443 = vsub.f32 %v365, %v431
    %v444 = vsub.f32 %v388, %v434
    %v445 = vsub.f32 %v411, %v437
    %v446 = vmul.f32 %v438, 1.442695
    %v447 = vpow.pop %v446
    %v448 = vmul.f32 %v439, 1.442695
    %v449 = vpow.pop %v448
    %v450 = vmul.f32 %v440, 1.442695
    %v451 = vpow.pop %v450
    %v452 = vmul.f32 %v441, 1.442695
    %v453 = vpow.pop %v452
    %v454 = vmul.f32 %v442, 1.442695
    %v455 = vpow.pop %v454
    %v456 = vmul.f32 %v443, 1.442695
    %v457 = vpow.pop %v456
    %v458 = vmul.f32 %v444, 1.442695
    %v459 = vpow.pop %v458
    %v460 = vmul.f32 %v445, 1.442695
    %v461 = vpow.pop %v460
    %v462 = vsel %vm233, %v447, 0.0
    %463 = vadd.xlane.f32.xlu0 %v462
    %v464 = vpop.xlane.xlu0 %463
    %v465 = vsel %vm233, %v449, 0.0
    %466 = vadd.xlane.f32.xlu0 %v465
    %v467 = vpop.xlane.xlu0 %466
    %v468 = vsel %vm233, %v451, 0.0
    %469 = vadd.xlane.f32.xlu0 %v468
    %v470 = vpop.xlane.xlu0 %469
    %v471 = vsel %vm233, %v453, 0.0
    %472 = vadd.xlane.f32.xlu0 %v471
    %v473 = vpop.xlane.xlu0 %472
    %v474 = vsel %vm233, %v455, 0.0
    %475 = vadd.xlane.f32.xlu0 %v474
    %v476 = vpop.xlane.xlu0 %475
    %v477 = vsel %vm233, %v457, 0.0
    %478 = vadd.xlane.f32.xlu0 %v477
    %v479 = vpop.xlane.xlu0 %478
    %v480 = vsel %vm233, %v459, 0.0
    %481 = vadd.xlane.f32.xlu0 %v480
    %v482 = vpop.xlane.xlu0 %481
    %v483 = vsel %vm233, %v461, 0.0
    %484 = vadd.xlane.f32.xlu0 %v483
    %v485 = vpop.xlane.xlu0 %484
    %v486 = vrcp.pop %v464
    %v487 = vrcp.pop %v467
    %v488 = vrcp.pop %v470
    %v489 = vrcp.pop %v473
    %v490 = vrcp.pop %v476
    %v491 = vrcp.pop %v479
    %v492 = vrcp.pop %v482
    %v493 = vrcp.pop %v485
    %v494 = vmul.f32 %v447, %v486
    %v495 = vmul.f32 %v449, %v487
    %v496 = vmul.f32 %v451, %v488
    %v497 = vmul.f32 %v453, %v489
    %v498 = vmul.f32 %v455, %v490
    %v499 = vmul.f32 %v457, %v491
    %v500 = vmul.f32 %v459, %v492
    %v501 = vmul.f32 %v461, %v493
    %v502 = vpack.c.bf16 %v494, %v494
    %v503 = vpack.c.bf16 %v495, %v495
    %v504 = vpack.c.bf16 %v496, %v496
    %v505 = vpack.c.bf16 %v497, %v497
    %v506 = vpack.c.bf16 %v498, %v498
    %v507 = vpack.c.bf16 %v499, %v499
    %v508 = vpack.c.bf16 %v500, %v500
    %v509 = vpack.c.bf16 %v501, %v501
    %510 = vrot.lane.b32.xlu0 %v230, 64
    %v511 = vpop.permute.xlu0 %510
    %v513 = vsel %vm233, %v502, 0
    %vm515 = vcmask 1043456
    %v517 = vsel %vm515, %v511, 0
    %519 = vmatpush.bf16.msra.mxu0 0
    %520 = vmatpush.bf16.msra.mxu0 0
    %521 = vmatpush.bf16.msra.mxu0 0
    %522 = vmatpush.bf16.msra.mxu0 0
    %523 = vmatpush.bf16.msra.mxu0 0
    %524 = vmatpush.bf16.msra.mxu0 0
    %525 = vmatpush.bf16.msra.mxu0 0
    %526 = vmatpush.bf16.msra.mxu0 %v517
    %527 = vmatmul.bf16.gmra.mxu0 %v513
    %v528 = vpop.f32.mrf.mxu0
    %v529 = vadd.f32 0.0, %v528
    %v530 = vpop.f32.mrf.mxu0
    %531 = vdwg.mxu0
    %532 = vrot.lane.b32.xlu0 %v254, 64
    %v533 = vpop.permute.xlu0 %532
    %v535 = vsel %vm233, %v503, 0
    %v538 = vsel %vm515, %v533, 0
    %540 = vmatpush.bf16.msra.mxu0 0
    %541 = vmatpush.bf16.msra.mxu0 0
    %542 = vmatpush.bf16.msra.mxu0 0
    %543 = vmatpush.bf16.msra.mxu0 0
    %544 = vmatpush.bf16.msra.mxu0 0
    %545 = vmatpush.bf16.msra.mxu0 0
    %546 = vmatpush.bf16.msra.mxu0 0
    %547 = vmatpush.bf16.msra.mxu0 %v538
    %548 = vmatmul.bf16.gmra.mxu0 %v535
    %v549 = vpop.f32.mrf.mxu0
    %v550 = vadd.f32 0.0, %v549
    %v551 = vpop.f32.mrf.mxu0
    %552 = vdwg.mxu0
    %553 = vrot.lane.b32.xlu0 %v277, 64
    %v554 = vpop.permute.xlu0 %553
    %v556 = vsel %vm233, %v504, 0
    %v559 = vsel %vm515, %v554, 0
    %561 = vmatpush.bf16.msra.mxu0 0
    %562 = vmatpush.bf16.msra.mxu0 0
    %563 = vmatpush.bf16.msra.mxu0 0
    %564 = vmatpush.bf16.msra.mxu0 0
    %565 = vmatpush.bf16.msra.mxu0 0
    %566 = vmatpush.bf16.msra.mxu0 0
    %567 = vmatpush.bf16.msra.mxu0 0
    %568 = vmatpush.bf16.msra.mxu0 %v559
    %569 = vmatmul.bf16.gmra.mxu0 %v556
    %v570 = vpop.f32.mrf.mxu0
    %v571 = vadd.f32 0.0, %v570
    %v572 = vpop.f32.mrf.mxu0
    %573 = vdwg.mxu0
    %574 = vrot.lane.b32.xlu0 %v300, 64
    %v575 = vpop.permute.xlu0 %574
    %v577 = vsel %vm233, %v505, 0
    %v580 = vsel %vm515, %v575, 0
    %582 = vmatpush.bf16.msra.mxu0 0
    %583 = vmatpush.bf16.msra.mxu0 0
    %584 = vmatpush.bf16.msra.mxu0 0
    %585 = vmatpush.bf16.msra.mxu0 0
    %586 = vmatpush.bf16.msra.mxu0 0
    %587 = vmatpush.bf16.msra.mxu0 0
    %588 = vmatpush.bf16.msra.mxu0 0
    %589 = vmatpush.bf16.msra.mxu0 %v580
    %590 = vmatmul.bf16.gmra.mxu0 %v577
    %v591 = vpop.f32.mrf.mxu0
    %v592 = vadd.f32 0.0, %v591
    %v593 = vpop.f32.mrf.mxu0
    %594 = vdwg.mxu0
    %595 = vrot.lane.b32.xlu0 %v323, 64
    %v596 = vpop.permute.xlu0 %595
    %v598 = vsel %vm233, %v506, 0
    %v601 = vsel %vm515, %v596, 0
    %603 = vmatpush.bf16.msra.mxu0 0
    %604 = vmatpush.bf16.msra.mxu0 0
    %605 = vmatpush.bf16.msra.mxu0 0
    %606 = vmatpush.bf16.msra.mxu0 0
    %607 = vmatpush.bf16.msra.mxu0 0
    %608 = vmatpush.bf16.msra.mxu0 0
    %609 = vmatpush.bf16.msra.mxu0 0
    %610 = vmatpush.bf16.msra.mxu0 %v601
    %611 = vmatmul.bf16.gmra.mxu0 %v598
    %v612 = vpop.f32.mrf.mxu0
    %v613 = vadd.f32 0.0, %v612
    %v614 = vpop.f32.mrf.mxu0
    %615 = vdwg.mxu0
    %616 = vrot.lane.b32.xlu0 %v346, 64
    %v617 = vpop.permute.xlu0 %616
    %v619 = vsel %vm233, %v507, 0
    %v622 = vsel %vm515, %v617, 0
    %624 = vmatpush.bf16.msra.mxu0 0
    %625 = vmatpush.bf16.msra.mxu0 0
    %626 = vmatpush.bf16.msra.mxu0 0
    %627 = vmatpush.bf16.msra.mxu0 0
    %628 = vmatpush.bf16.msra.mxu0 0
    %629 = vmatpush.bf16.msra.mxu0 0
    %630 = vmatpush.bf16.msra.mxu0 0
    %631 = vmatpush.bf16.msra.mxu0 %v622
    %632 = vmatmul.bf16.gmra.mxu0 %v619
    %v633 = vpop.f32.mrf.mxu0
    %v634 = vadd.f32 0.0, %v633
    %v635 = vpop.f32.mrf.mxu0
    %636 = vdwg.mxu0
    %637 = vrot.lane.b32.xlu0 %v369, 64
    %v638 = vpop.permute.xlu0 %637
    %v640 = vsel %vm233, %v508, 0
    %v643 = vsel %vm515, %v638, 0
    %645 = vmatpush.bf16.msra.mxu0 0
    %646 = vmatpush.bf16.msra.mxu0 0
    %647 = vmatpush.bf16.msra.mxu0 0
    %648 = vmatpush.bf16.msra.mxu0 0
    %649 = vmatpush.bf16.msra.mxu0 0
    %650 = vmatpush.bf16.msra.mxu0 0
    %651 = vmatpush.bf16.msra.mxu0 0
    %652 = vmatpush.bf16.msra.mxu0 %v643
    %653 = vmatmul.bf16.gmra.mxu0 %v640
    %v654 = vpop.f32.mrf.mxu0
    %v655 = vadd.f32 0.0, %v654
    %v656 = vpop.f32.mrf.mxu0
    %657 = vdwg.mxu0
    %658 = vrot.lane.b32.xlu0 %v392, 64
    %v659 = vpop.permute.xlu0 %658
    %v661 = vsel %vm233, %v509, 0
    %v664 = vsel %vm515, %v659, 0
    %666 = vmatpush.bf16.msra.mxu0 0
    %667 = vmatpush.bf16.msra.mxu0 0
    %668 = vmatpush.bf16.msra.mxu0 0
    %669 = vmatpush.bf16.msra.mxu0 0
    %670 = vmatpush.bf16.msra.mxu0 0
    %671 = vmatpush.bf16.msra.mxu0 0
    %672 = vmatpush.bf16.msra.mxu0 0
    %673 = vmatpush.bf16.msra.mxu0 %v664
    %674 = vmatmul.bf16.gmra.mxu0 %v661
    %v675 = vpop.f32.mrf.mxu0
    %v676 = vadd.f32 0.0, %v675
    %v677 = vpop.f32.mrf.mxu0
    %678 = vdwg.mxu0
    %681 = vrot.lane.b32.xlu0 %v571, 8
    %v682 = vpop.permute.xlu0 %681
    %683 = vrot.lane.b32.xlu0 %v592, 8
    %v684 = vpop.permute.xlu0 %683
    %689 = vrot.lane.b32.xlu0 %v613, 16
    %v690 = vpop.permute.xlu0 %689
    %691 = vrot.lane.b32.xlu0 %v634, 16
    %v692 = vpop.permute.xlu0 %691
    %697 = vrot.lane.b32.xlu0 %v655, 24
    %v698 = vpop.permute.xlu0 %697
    %699 = vrot.lane.b32.xlu0 %v676, 24
    %v700 = vpop.permute.xlu0 %699
    %v703 = vsel %vm233, %v529, %v682
    %v704 = vsel %vm233, %v550, %v684
    %vm705 = vcmask 130048
    %v706 = vsel %vm705, %v703, %v690
    %v707 = vsel %vm705, %v704, %v692
    %vm708 = vcmask 195584
    %v709 = vsel %vm708, %v706, %v698
    %v710 = vsel %vm708, %v707, %v700
    %v711 = vpack.c.bf16 %v710, %v709
    %v712 = vperm.slane %v172, 1
    %v717 = vunpack.c.l.b16 %v209
    %v718 = vunpack.c.l.b16 %v210
    %v719 = vunpack.c.l.b16 %v211
    %v720 = vunpack.c.l.b16 %v212
    %v721 = vpack.c.b16 %v718, %v717
    %v722 = vpack.c.b16 %v720, %v719
    %v726 = vsel %vm191, %v711, 0
    %728 = vmatpush.bf16.msra.mxu0 0
    %729 = vmatpush.bf16.msra.mxu0 0
    %730 = vmatpush.bf16.msra.mxu0 0
    %731 = vmatpush.bf16.msra.mxu0 0
    %732 = vmatpush.bf16.msra.mxu0 0
    %733 = vmatpush.bf16.msra.mxu0 0
    %734 = vmatpush.bf16.msra.mxu0 %v722
    %735 = vmatpush.bf16.msra.mxu0 %v721
    %736 = vmatmul.bf16.gmra.mxu0 %v726
    %v737 = vpop.f32.mrf.mxu0
    %v738 = vadd.f32 %v712, %v737
    %v739 = vpop.f32.mrf.mxu0
    %v740 = vadd.f32 %v712, %v739
    %741 = vdwg.mxu0
    %v742 = vadd.f32 %v170, %v738
    %v743 = vadd.f32 %v171, %v740
    %v744 = vsel %vm191, %v742, 0.0
    %745 = vadd.xlane.f32.xlu0 %v744
    %v746 = vpop.xlane.xlu0 %745
    %v747 = vsel %vm191, %v743, 0.0
    %748 = vadd.xlane.f32.xlu0 %v747
    %v749 = vpop.xlane.xlu0 %748
    %v750 = vrcp.pop 32.0
    %v751 = vmul.f32 32.0, %v750
    %v752 = vsub.f32 1.0, %v751
    %v753 = vmul.f32 %v750, %v752
    %v754 = vadd.f32 %v750, %v753
    %vm755 = vweird.f32 %v750
    %v756 = vsel %vm755, %v750, %v754
    %v757 = vmul.f32 %v746, %v756
    %v758 = vmul.f32 %v749, %v756
    %v759 = vsub.f32 %v742, %v757
    %v760 = vsub.f32 %v743, %v758
    %v761 = vmul.f32 %v759, %v759
    %v762 = vmul.f32 %v760, %v760
    %v763 = vsel %vm191, %v761, 0.0
    %764 = vadd.xlane.f32.xlu0 %v763
    %v765 = vpop.xlane.xlu0 %764
    %v766 = vsel %vm191, %v762, 0.0
    %767 = vadd.xlane.f32.xlu0 %v766
    %v768 = vpop.xlane.xlu0 %767
    %v769 = vmul.f32 %v765, %v756
    %v770 = vmul.f32 %v768, %v756
    %v771 = vadd.f32 %v769, 1e-05
    %v772 = vadd.f32 %v770, 1e-05
    %v773 = vrsqrt.pop %v771
    %v774 = vmul.f32 %v773, %v771
    %v775 = vmul.f32 %v774, %v773
    %v776 = vmul.f32 0.5, %v775
    %v777 = vsub.f32 1.5, %v776
    %v778 = vmul.f32 %v773, %v777
    %vm779 = vweird.f32 %v771
    %vm780 = vweird.f32 %v773
    %vm781 = vmor %vm779, %vm780
    %v782 = vsel %vm781, %v773, %v778
    %v783 = vrsqrt.pop %v772
    %v784 = vmul.f32 %v783, %v772
    %v785 = vmul.f32 %v784, %v783
    %v786 = vmul.f32 0.5, %v785
    %v787 = vsub.f32 1.5, %v786
    %v788 = vmul.f32 %v783, %v787
    %vm789 = vweird.f32 %v772
    %vm790 = vweird.f32 %v783
    %vm791 = vmor %vm789, %vm790
    %v792 = vsel %vm791, %v783, %v788
    %v793 = vmul.f32 %v759, %v782
    %v794 = vmul.f32 %v760, %v792
    %v795 = vperm.slane %v172, 4
    %v796 = vmul.f32 %v793, %v795
    %v797 = vmul.f32 %v794, %v795
    %v798 = vperm.slane %v172, 5
    %v799 = vadd.f32 %v796, %v798
    %v800 = vadd.f32 %v797, %v798
    %v801 = vld [vmem:[#allocation7] sm:$0xf]
    %v802 = vld [vmem:[#allocation7 + $0x4] sm:$0xf]
    %v803 = vld [vmem:[#allocation7 + $0x8] sm:$0xf]
    %v804 = vld [vmem:[#allocation7 + $0xc] sm:$0xf]
    %v805 = vpack.c.bf16 %v800, %v799
    %v806 = vperm.slane %v172, 2
    %v811 = vunpack.c.l.b16 %v801
    %v812 = vunpack.c.l.b16 %v802
    %v813 = vunpack.c.l.b16 %v803
    %v814 = vunpack.c.l.b16 %v804
    %v815 = vpack.c.b16 %v812, %v811
    %v816 = vpack.c.b16 %v814, %v813
    %v820 = vsel %vm191, %v805, 0
    %822 = vmatpush.bf16.msra.mxu0 0
    %823 = vmatpush.bf16.msra.mxu0 0
    %824 = vmatpush.bf16.msra.mxu0 0
    %825 = vmatpush.bf16.msra.mxu0 0
    %826 = vmatpush.bf16.msra.mxu0 0
    %827 = vmatpush.bf16.msra.mxu0 0
    %828 = vmatpush.bf16.msra.mxu0 %v816
    %829 = vmatpush.bf16.msra.mxu0 %v815
    %830 = vmatmul.bf16.gmra.mxu0 %v820
    %v831 = vpop.f32.mrf.mxu0
    %v832 = vadd.f32 %v806, %v831
    %v833 = vpop.f32.mrf.mxu0
    %v834 = vadd.f32 %v806, %v833
    %835 = vdwg.mxu0
    %v836 = vmax.f32 %v832, 0.0
    %v837 = vmax.f32 %v834, 0.0
    %v838 = vld [vmem:[%s8] sm:$0xf]
    %v839 = vld [vmem:[%s8 + $0x4] sm:$0xf]
    %v840 = vld [vmem:[%s8 + $0x8] sm:$0xf]
    %v841 = vld [vmem:[%s8 + $0xc] sm:$0xf]
    %v842 = vld [vmem:[%s8 + $0x10] sm:$0xf]
    %v843 = vld [vmem:[%s8 + $0x14] sm:$0xf]
    %v844 = vld [vmem:[%s8 + $0x18] sm:$0xf]
    %v845 = vld [vmem:[%s8 + $0x1c] sm:$0xf]
    %v846 = vpack.c.bf16 %v837, %v836
    %v847 = vperm.slane %v172, 3
    %v856 = vunpack.c.l.b16 %v838
    %v857 = vunpack.c.l.b16 %v839
    %v858 = vunpack.c.l.b16 %v840
    %v859 = vunpack.c.l.b16 %v841
    %v860 = vunpack.c.l.b16 %v842
    %v861 = vunpack.c.l.b16 %v843
    %v862 = vunpack.c.l.b16 %v844
    %v863 = vunpack.c.l.b16 %v845
    %v864 = vpack.c.b16 %v857, %v856
    %v865 = vpack.c.b16 %v859, %v858
    %v866 = vpack.c.b16 %v861, %v860
    %v867 = vpack.c.b16 %v863, %v862
    %vm872 = vcmask 523264
    %v874 = vsel %vm872, %v846, 0
    %876 = vmatpush.bf16.msra.mxu0 0
    %877 = vmatpush.bf16.msra.mxu0 0
    %878 = vmatpush.bf16.msra.mxu0 0
    %879 = vmatpush.bf16.msra.mxu0 0
    %880 = vmatpush.bf16.msra.mxu0 %v867
    %881 = vmatpush.bf16.msra.mxu0 %v866
    %882 = vmatpush.bf16.msra.mxu0 %v865
    %883 = vmatpush.bf16.msra.mxu0 %v864
    %884 = vmatmul.bf16.gmra.mxu0 %v874
    %v885 = vpop.f32.mrf.mxu0
    %v886 = vadd.f32 %v847, %v885
    %v887 = vpop.f32.mrf.mxu0
    %v888 = vadd.f32 %v847, %v887
    %889 = vdwg.mxu0
    %v890 = vadd.f32 %v799, %v886
    %v891 = vadd.f32 %v800, %v888
    %v892 = vsel %vm191, %v890, 0.0
    %893 = vadd.xlane.f32.xlu0 %v892
    %v894 = vpop.xlane.xlu0 %893
    %v895 = vsel %vm191, %v891, 0.0
    %896 = vadd.xlane.f32.xlu0 %v895
    %v897 = vpop.xlane.xlu0 %896
    %v898 = vmul.f32 %v894, %v756
    %v899 = vmul.f32 %v897, %v756
    %v900 = vsub.f32 %v890, %v898
    %v901 = vsub.f32 %v891, %v899
    %v902 = vmul.f32 %v900, %v900
    %v903 = vmul.f32 %v901, %v901
    %v904 = vsel %vm191, %v902, 0.0
    %905 = vadd.xlane.f32.xlu0 %v904
    %v906 = vpop.xlane.xlu0 %905
    %v907 = vsel %vm191, %v903, 0.0
    %908 = vadd.xlane.f32.xlu0 %v907
    %v909 = vpop.xlane.xlu0 %908
    %v910 = vmul.f32 %v906, %v756
    %v911 = vmul.f32 %v909, %v756
    %v912 = vadd.f32 %v910, 1e-05
    %v913 = vadd.f32 %v911, 1e-05
    %v914 = vrsqrt.pop %v912
    %v915 = vmul.f32 %v914, %v912
    %v916 = vmul.f32 %v915, %v914
    %v917 = vmul.f32 0.5, %v916
    %v918 = vsub.f32 1.5, %v917
    %v919 = vmul.f32 %v914, %v918
    %vm920 = vweird.f32 %v912
    %vm921 = vweird.f32 %v914
    %vm922 = vmor %vm920, %vm921
    %v923 = vsel %vm922, %v914, %v919
    %v924 = vrsqrt.pop %v913
    %v925 = vmul.f32 %v924, %v913
    %v926 = vmul.f32 %v925, %v924
    %v927 = vmul.f32 0.5, %v926
    %v928 = vsub.f32 1.5, %v927
    %v929 = vmul.f32 %v924, %v928
    %vm930 = vweird.f32 %v913
    %vm931 = vweird.f32 %v924
    %vm932 = vmor %vm930, %vm931
    %v933 = vsel %vm932, %v924, %v929
    %v934 = vmul.f32 %v900, %v923
    %v935 = vmul.f32 %v901, %v933
    %v936 = vperm.slane %v172, 6
    %v937 = vmul.f32 %v934, %v936
    %v938 = vmul.f32 %v935, %v936
    %v939 = vperm.slane %v172, 7
    %v940 = vadd.f32 %v937, %v939
    %v941 = vadd.f32 %v938, %v939
    %s942 = scalar_lea.vmem [#allocation8], 8
    %v943 = vld [vmem:[%s942] sm:$0xff]
    %s944 = scalar_lea.vmem [#allocation2], 16
    %v945 = vld [vmem:[%s944] sm:$0xf]
    %v946 = vld [vmem:[%s944 + $0x4] sm:$0xf]
    %v947 = vld [vmem:[%s944 + $0x8] sm:$0xf]
    %v948 = vld [vmem:[%s944 + $0xc] sm:$0xf]
    %v949 = vpack.c.bf16 %v941, %v940
    %v950 = vperm.slane %v943, 0
    %v955 = vunpack.c.l.b16 %v945
    %v956 = vunpack.c.l.b16 %v946
    %v957 = vunpack.c.l.b16 %v947
    %v958 = vunpack.c.l.b16 %v948
    %v959 = vpack.c.b16 %v956, %v955
    %v960 = vpack.c.b16 %v958, %v957
    %v964 = vsel %vm191, %v949, 0
    %966 = vmatpush.bf16.msra.mxu0 0
    %967 = vmatpush.bf16.msra.mxu0 0
    %968 = vmatpush.bf16.msra.mxu0 0
    %969 = vmatpush.bf16.msra.mxu0 0
    %970 = vmatpush.bf16.msra.mxu0 0
    %971 = vmatpush.bf16.msra.mxu0 0
    %972 = vmatpush.bf16.msra.mxu0 %v960
    %973 = vmatpush.bf16.msra.mxu0 %v959
    %974 = vmatmul.bf16.gmra.mxu0 %v964
    %v975 = vpop.f32.mrf.mxu0
    %v976 = vadd.f32 %v950, %v975
    %v977 = vpop.f32.mrf.mxu0
    %v978 = vadd.f32 %v950, %v977
    %979 = vdwg.mxu0
    %s980 = scalar_lea.vmem [#allocation5], 16
    %v981 = vld [vmem:[%s980] sm:$0xf]
    %v982 = vld [vmem:[%s980 + $0x4] sm:$0xf]
    %v983 = vld [vmem:[%s980 + $0x8] sm:$0xf]
    %v984 = vld [vmem:[%s980 + $0xc] sm:$0xf]
    %v985 = vpack.c.bf16 %v976, %v976
    %v986 = vpack.c.bf16 %v978, %v978
    %989 = vrot.lane.b32.xlu0 %v985, 120
    %v990 = vpop.permute.xlu0 %989
    %991 = vrot.lane.b32.xlu0 %v986, 120
    %v992 = vpop.permute.xlu0 %991
    %993 = vrot.lane.b32.xlu0 %v985, 112
    %v994 = vpop.permute.xlu0 %993
    %995 = vrot.lane.b32.xlu0 %v986, 112
    %v996 = vpop.permute.xlu0 %995
    %997 = vrot.lane.b32.xlu0 %v985, 104
    %v998 = vpop.permute.xlu0 %997
    %999 = vrot.lane.b32.xlu0 %v986, 104
    %v1000 = vpop.permute.xlu0 %999
    %v1001 = vunpack.c.l.b16 %v985
    %v1002 = vpack.c.b16 %v1001, %v1001
    %1003 = vrot.lane.b32.xlu0 %v1002, 96
    %v1004 = vpop.permute.xlu0 %1003
    %v1006 = vsel %vm233, %v985, 0
    %v1009 = vsel %vm233, %v1004, 0
    %1011 = vmatpush.bf16.xpose.msra.mxu0 0
    %1012 = vmatpush.bf16.xpose.msra.mxu0 0
    %1013 = vmatpush.bf16.xpose.msra.mxu0 0
    %1014 = vmatpush.bf16.xpose.msra.mxu0 0
    %1015 = vmatpush.bf16.xpose.msra.mxu0 0
    %1016 = vmatpush.bf16.xpose.msra.mxu0 0
    %1017 = vmatpush.bf16.xpose.msra.mxu0 0
    %1018 = vmatpush.bf16.xpose.msra.mxu0 %v1009
    %1019 = vmatmul.bf16.gmra.mxu0 %v1006
    %v1020 = vpop.f32.mrf.mxu0
    %v1021 = vadd.f32 %v167, %v1020
    %v1022 = vpop.f32.mrf.mxu0
    %1023 = vdwg.mxu0
    %v1024 = vunpack.c.l.b16 %v986
    %v1025 = vpack.c.b16 %v1024, %v1024
    %1026 = vrot.lane.b32.xlu0 %v1025, 96
    %v1027 = vpop.permute.xlu0 %1026
    %v1029 = vsel %vm233, %v986, 0
    %v1032 = vsel %vm233, %v1027, 0
    %1034 = vmatpush.bf16.xpose.msra.mxu0 0
    %1035 = vmatpush.bf16.xpose.msra.mxu0 0
    %1036 = vmatpush.bf16.xpose.msra.mxu0 0
    %1037 = vmatpush.bf16.xpose.msra.mxu0 0
    %1038 = vmatpush.bf16.xpose.msra.mxu0 0
    %1039 = vmatpush.bf16.xpose.msra.mxu0 0
    %1040 = vmatpush.bf16.xpose.msra.mxu0 0
    %1041 = vmatpush.bf16.xpose.msra.mxu0 %v1032
    %1042 = vmatmul.bf16.gmra.mxu0 %v1029
    %v1043 = vpop.f32.mrf.mxu0
    %v1044 = vadd.f32 %v167, %v1043
    %v1045 = vpop.f32.mrf.mxu0
    %1046 = vdwg.mxu0
    %v1047 = vunpack.c.l.b16 %v990
    %v1048 = vpack.c.b16 %v1047, %v1047
    %1049 = vrot.lane.b32.xlu0 %v1048, 96
    %v1050 = vpop.permute.xlu0 %1049
    %v1052 = vsel %vm233, %v990, 0
    %v1055 = vsel %vm233, %v1050, 0
    %1057 = vmatpush.bf16.xpose.msra.mxu0 0
    %1058 = vmatpush.bf16.xpose.msra.mxu0 0
    %1059 = vmatpush.bf16.xpose.msra.mxu0 0
    %1060 = vmatpush.bf16.xpose.msra.mxu0 0
    %1061 = vmatpush.bf16.xpose.msra.mxu0 0
    %1062 = vmatpush.bf16.xpose.msra.mxu0 0
    %1063 = vmatpush.bf16.xpose.msra.mxu0 0
    %1064 = vmatpush.bf16.xpose.msra.mxu0 %v1055
    %1065 = vmatmul.bf16.gmra.mxu0 %v1052
    %v1066 = vpop.f32.mrf.mxu0
    %v1067 = vadd.f32 %v167, %v1066
    %v1068 = vpop.f32.mrf.mxu0
    %1069 = vdwg.mxu0
    %v1070 = vunpack.c.l.b16 %v992
    %v1071 = vpack.c.b16 %v1070, %v1070
    %1072 = vrot.lane.b32.xlu0 %v1071, 96
    %v1073 = vpop.permute.xlu0 %1072
    %v1075 = vsel %vm233, %v992, 0
    %v1078 = vsel %vm233, %v1073, 0
    %1080 = vmatpush.bf16.xpose.msra.mxu0 0
    %1081 = vmatpush.bf16.xpose.msra.mxu0 0
    %1082 = vmatpush.bf16.xpose.msra.mxu0 0
    %1083 = vmatpush.bf16.xpose.msra.mxu0 0
    %1084 = vmatpush.bf16.xpose.msra.mxu0 0
    %1085 = vmatpush.bf16.xpose.msra.mxu0 0
    %1086 = vmatpush.bf16.xpose.msra.mxu0 0
    %1087 = vmatpush.bf16.xpose.msra.mxu0 %v1078
    %1088 = vmatmul.bf16.gmra.mxu0 %v1075
    %v1089 = vpop.f32.mrf.mxu0
    %v1090 = vadd.f32 %v167, %v1089
    %v1091 = vpop.f32.mrf.mxu0
    %1092 = vdwg.mxu0
    %v1093 = vunpack.c.l.b16 %v994
    %v1094 = vpack.c.b16 %v1093, %v1093
    %1095 = vrot.lane.b32.xlu0 %v1094, 96
    %v1096 = vpop.permute.xlu0 %1095
    %v1098 = vsel %vm233, %v994, 0
    %v1101 = vsel %vm233, %v1096, 0
    %1103 = vmatpush.bf16.xpose.msra.mxu0 0
    %1104 = vmatpush.bf16.xpose.msra.mxu0 0
    %1105 = vmatpush.bf16.xpose.msra.mxu0 0
    %1106 = vmatpush.bf16.xpose.msra.mxu0 0
    %1107 = vmatpush.bf16.xpose.msra.mxu0 0
    %1108 = vmatpush.bf16.xpose.msra.mxu0 0
    %1109 = vmatpush.bf16.xpose.msra.mxu0 0
    %1110 = vmatpush.bf16.xpose.msra.mxu0 %v1101
    %1111 = vmatmul.bf16.gmra.mxu0 %v1098
    %v1112 = vpop.f32.mrf.mxu0
    %v1113 = vadd.f32 %v167, %v1112
    %v1114 = vpop.f32.mrf.mxu0
    %1115 = vdwg.mxu0
    %v1116 = vunpack.c.l.b16 %v996
    %v1117 = vpack.c.b16 %v1116, %v1116
    %1118 = vrot.lane.b32.xlu0 %v1117, 96
    %v1119 = vpop.permute.xlu0 %1118
    %v1121 = vsel %vm233, %v996, 0
    %v1124 = vsel %vm233, %v1119, 0
    %1126 = vmatpush.bf16.xpose.msra.mxu0 0
    %1127 = vmatpush.bf16.xpose.msra.mxu0 0
    %1128 = vmatpush.bf16.xpose.msra.mxu0 0
    %1129 = vmatpush.bf16.xpose.msra.mxu0 0
    %1130 = vmatpush.bf16.xpose.msra.mxu0 0
    %1131 = vmatpush.bf16.xpose.msra.mxu0 0
    %1132 = vmatpush.bf16.xpose.msra.mxu0 0
    %1133 = vmatpush.bf16.xpose.msra.mxu0 %v1124
    %1134 = vmatmul.bf16.gmra.mxu0 %v1121
    %v1135 = vpop.f32.mrf.mxu0
    %v1136 = vadd.f32 %v167, %v1135
    %v1137 = vpop.f32.mrf.mxu0
    %1138 = vdwg.mxu0
    %v1139 = vunpack.c.l.b16 %v998
    %v1140 = vpack.c.b16 %v1139, %v1139
    %1141 = vrot.lane.b32.xlu0 %v1140, 96
    %v1142 = vpop.permute.xlu0 %1141
    %v1144 = vsel %vm233, %v998, 0
    %v1147 = vsel %vm233, %v1142, 0
    %1149 = vmatpush.bf16.xpose.msra.mxu0 0
    %1150 = vmatpush.bf16.xpose.msra.mxu0 0
    %1151 = vmatpush.bf16.xpose.msra.mxu0 0
    %1152 = vmatpush.bf16.xpose.msra.mxu0 0
    %1153 = vmatpush.bf16.xpose.msra.mxu0 0
    %1154 = vmatpush.bf16.xpose.msra.mxu0 0
    %1155 = vmatpush.bf16.xpose.msra.mxu0 0
    %1156 = vmatpush.bf16.xpose.msra.mxu0 %v1147
    %1157 = vmatmul.bf16.gmra.mxu0 %v1144
    %v1158 = vpop.f32.mrf.mxu0
    %v1159 = vadd.f32 %v167, %v1158
    %v1160 = vpop.f32.mrf.mxu0
    %1161 = vdwg.mxu0
    %v1162 = vunpack.c.l.b16 %v1000
    %v1163 = vpack.c.b16 %v1162, %v1162
    %1164 = vrot.lane.b32.xlu0 %v1163, 96
    %v1165 = vpop.permute.xlu0 %1164
    %v1167 = vsel %vm233, %v1000, 0
    %v1170 = vsel %vm233, %v1165, 0
    %1172 = vmatpush.bf16.xpose.msra.mxu0 0
    %1173 = vmatpush.bf16.xpose.msra.mxu0 0
    %1174 = vmatpush.bf16.xpose.msra.mxu0 0
    %1175 = vmatpush.bf16.xpose.msra.mxu0 0
    %1176 = vmatpush.bf16.xpose.msra.mxu0 0
    %1177 = vmatpush.bf16.xpose.msra.mxu0 0
    %1178 = vmatpush.bf16.xpose.msra.mxu0 0
    %1179 = vmatpush.bf16.xpose.msra.mxu0 %v1170
    %1180 = vmatmul.bf16.gmra.mxu0 %v1167
    %v1181 = vpop.f32.mrf.mxu0
    %v1182 = vadd.f32 %v167, %v1181
    %v1183 = vpop.f32.mrf.mxu0
    %1184 = vdwg.mxu0
    %v1185 = vsel %vm233, %v1021, -inf
    %1186 = vmax.xlane.f32.xlu0 %v1185
    %v1187 = vpop.xlane.xlu0 %1186
    %v1188 = vsel %vm233, %v1044, -inf
    %1189 = vmax.xlane.f32.xlu0 %v1188
    %v1190 = vpop.xlane.xlu0 %1189
    %v1191 = vsel %vm233, %v1067, -inf
    %1192 = vmax.xlane.f32.xlu0 %v1191
    %v1193 = vpop.xlane.xlu0 %1192
    %v1194 = vsel %vm233, %v1090, -inf
    %1195 = vmax.xlane.f32.xlu0 %v1194
    %v1196 = vpop.xlane.xlu0 %1195
    %v1197 = vsel %vm233, %v1113, -inf
    %1198 = vmax.xlane.f32.xlu0 %v1197
    %v1199 = vpop.xlane.xlu0 %1198
    %v1200 = vsel %vm233, %v1136, -inf
    %1201 = vmax.xlane.f32.xlu0 %v1200
    %v1202 = vpop.xlane.xlu0 %1201
    %v1203 = vsel %vm233, %v1159, -inf
    %1204 = vmax.xlane.f32.xlu0 %v1203
    %v1205 = vpop.xlane.xlu0 %1204
    %v1206 = vsel %vm233, %v1182, -inf
    %1207 = vmax.xlane.f32.xlu0 %v1206
    %v1208 = vpop.xlane.xlu0 %1207
    %v1209 = vsub.f32 %v1021, %v1187
    %v1210 = vsub.f32 %v1044, %v1190
    %v1211 = vsub.f32 %v1067, %v1193
    %v1212 = vsub.f32 %v1090, %v1196
    %v1213 = vsub.f32 %v1113, %v1199
    %v1214 = vsub.f32 %v1136, %v1202
    %v1215 = vsub.f32 %v1159, %v1205
    %v1216 = vsub.f32 %v1182, %v1208
    %v1217 = vmul.f32 %v1209, 1.442695
    %v1218 = vpow.pop %v1217
    %v1219 = vmul.f32 %v1210, 1.442695
    %v1220 = vpow.pop %v1219
    %v1221 = vmul.f32 %v1211, 1.442695
    %v1222 = vpow.pop %v1221
    %v1223 = vmul.f32 %v1212, 1.442695
    %v1224 = vpow.pop %v1223
    %v1225 = vmul.f32 %v1213, 1.442695
    %v1226 = vpow.pop %v1225
    %v1227 = vmul.f32 %v1214, 1.442695
    %v1228 = vpow.pop %v1227
    %v1229 = vmul.f32 %v1215, 1.442695
    %v1230 = vpow.pop %v1229
    %v1231 = vmul.f32 %v1216, 1.442695
    %v1232 = vpow.pop %v1231
    %v1233 = vsel %vm233, %v1218, 0.0
    %1234 = vadd.xlane.f32.xlu0 %v1233
    %v1235 = vpop.xlane.xlu0 %1234
    %v1236 = vsel %vm233, %v1220, 0.0
    %1237 = vadd.xlane.f32.xlu0 %v1236
    %v1238 = vpop.xlane.xlu0 %1237
    %v1239 = vsel %vm233, %v1222, 0.0
    %1240 = vadd.xlane.f32.xlu0 %v1239
    %v1241 = vpop.xlane.xlu0 %1240
    %v1242 = vsel %vm233, %v1224, 0.0
    %1243 = vadd.xlane.f32.xlu0 %v1242
    %v1244 = vpop.xlane.xlu0 %1243
    %v1245 = vsel %vm233, %v1226, 0.0
    %1246 = vadd.xlane.f32.xlu0 %v1245
    %v1247 = vpop.xlane.xlu0 %1246
    %v1248 = vsel %vm233, %v1228, 0.0
    %1249 = vadd.xlane.f32.xlu0 %v1248
    %v1250 = vpop.xlane.xlu0 %1249
    %v1251 = vsel %vm233, %v1230, 0.0
    %1252 = vadd.xlane.f32.xlu0 %v1251
    %v1253 = vpop.xlane.xlu0 %1252
    %v1254 = vsel %vm233, %v1232, 0.0
    %1255 = vadd.xlane.f32.xlu0 %v1254
    %v1256 = vpop.xlane.xlu0 %1255
    %v1257 = vrcp.pop %v1235
    %v1258 = vrcp.pop %v1238
    %v1259 = vrcp.pop %v1241
    %v1260 = vrcp.pop %v1244
    %v1261 = vrcp.pop %v1247
    %v1262 = vrcp.pop %v1250
    %v1263 = vrcp.pop %v1253
    %v1264 = vrcp.pop %v1256
    %v1265 = vmul.f32 %v1218, %v1257
    %v1266 = vmul.f32 %v1220, %v1258
    %v1267 = vmul.f32 %v1222, %v1259
    %v1268 = vmul.f32 %v1224, %v1260
    %v1269 = vmul.f32 %v1226, %v1261
    %v1270 = vmul.f32 %v1228, %v1262
    %v1271 = vmul.f32 %v1230, %v1263
    %v1272 = vmul.f32 %v1232, %v1264
    %v1273 = vpack.c.bf16 %v1265, %v1265
    %v1274 = vpack.c.bf16 %v1266, %v1266
    %v1275 = vpack.c.bf16 %v1267, %v1267
    %v1276 = vpack.c.bf16 %v1268, %v1268
    %v1277 = vpack.c.bf16 %v1269, %v1269
    %v1278 = vpack.c.bf16 %v1270, %v1270
    %v1279 = vpack.c.bf16 %v1271, %v1271
    %v1280 = vpack.c.bf16 %v1272, %v1272
    %1281 = vrot.lane.b32.xlu0 %v1002, 64
    %v1282 = vpop.permute.xlu0 %1281
    %v1284 = vsel %vm233, %v1273, 0
    %v1287 = vsel %vm515, %v1282, 0
    %1289 = vmatpush.bf16.msra.mxu0 0
    %1290 = vmatpush.bf16.msra.mxu0 0
    %1291 = vmatpush.bf16.msra.mxu0 0
    %1292 = vmatpush.bf16.msra.mxu0 0
    %1293 = vmatpush.bf16.msra.mxu0 0
    %1294 = vmatpush.bf16.msra.mxu0 0
    %1295 = vmatpush.bf16.msra.mxu0 0
    %1296 = vmatpush.bf16.msra.mxu0 %v1287
    %1297 = vmatmul.bf16.gmra.mxu0 %v1284
    %v1298 = vpop.f32.mrf.mxu0
    %v1299 = vadd.f32 0.0, %v1298
    %v1300 = vpop.f32.mrf.mxu0
    %1301 = vdwg.mxu0
    %1302 = vrot.lane.b32.xlu0 %v1025, 64
    %v1303 = vpop.permute.xlu0 %1302
    %v1305 = vsel %vm233, %v1274, 0
    %v1308 = vsel %vm515, %v1303, 0
    %1310 = vmatpush.bf16.msra.mxu0 0
    %1311 = vmatpush.bf16.msra.mxu0 0
    %1312 = vmatpush.bf16.msra.mxu0 0
    %1313 = vmatpush.bf16.msra.mxu0 0
    %1314 = vmatpush.bf16.msra.mxu0 0
    %1315 = vmatpush.bf16.msra.mxu0 0
    %1316 = vmatpush.bf16.msra.mxu0 0
    %1317 = vmatpush.bf16.msra.mxu0 %v1308
    %1318 = vmatmul.bf16.gmra.mxu0 %v1305
    %v1319 = vpop.f32.mrf.mxu0
    %v1320 = vadd.f32 0.0, %v1319
    %v1321 = vpop.f32.mrf.mxu0
    %1322 = vdwg.mxu0
    %1323 = vrot.lane.b32.xlu0 %v1048, 64
    %v1324 = vpop.permute.xlu0 %1323
    %v1326 = vsel %vm233, %v1275, 0
    %v1329 = vsel %vm515, %v1324, 0
    %1331 = vmatpush.bf16.msra.mxu0 0
    %1332 = vmatpush.bf16.msra.mxu0 0
    %1333 = vmatpush.bf16.msra.mxu0 0
    %1334 = vmatpush.bf16.msra.mxu0 0
    %1335 = vmatpush.bf16.msra.mxu0 0
    %1336 = vmatpush.bf16.msra.mxu0 0
    %1337 = vmatpush.bf16.msra.mxu0 0
    %1338 = vmatpush.bf16.msra.mxu0 %v1329
    %1339 = vmatmul.bf16.gmra.mxu0 %v1326
    %v1340 = vpop.f32.mrf.mxu0
    %v1341 = vadd.f32 0.0, %v1340
    %v1342 = vpop.f32.mrf.mxu0
    %1343 = vdwg.mxu0
    %1344 = vrot.lane.b32.xlu0 %v1071, 64
    %v1345 = vpop.permute.xlu0 %1344
    %v1347 = vsel %vm233, %v1276, 0
    %v1350 = vsel %vm515, %v1345, 0
    %1352 = vmatpush.bf16.msra.mxu0 0
    %1353 = vmatpush.bf16.msra.mxu0 0
    %1354 = vmatpush.bf16.msra.mxu0 0
    %1355 = vmatpush.bf16.msra.mxu0 0
    %1356 = vmatpush.bf16.msra.mxu0 0
    %1357 = vmatpush.bf16.msra.mxu0 0
    %1358 = vmatpush.bf16.msra.mxu0 0
    %1359 = vmatpush.bf16.msra.mxu0 %v1350
    %1360 = vmatmul.bf16.gmra.mxu0 %v1347
    %v1361 = vpop.f32.mrf.mxu0
    %v1362 = vadd.f32 0.0, %v1361
    %v1363 = vpop.f32.mrf.mxu0
    %1364 = vdwg.mxu0
    %1365 = vrot.lane.b32.xlu0 %v1094, 64
    %v1366 = vpop.permute.xlu0 %1365
    %v1368 = vsel %vm233, %v1277, 0
    %v1371 = vsel %vm515, %v1366, 0
    %1373 = vmatpush.bf16.msra.mxu0 0
    %1374 = vmatpush.bf16.msra.mxu0 0
    %1375 = vmatpush.bf16.msra.mxu0 0
    %1376 = vmatpush.bf16.msra.mxu0 0
    %1377 = vmatpush.bf16.msra.mxu0 0
    %1378 = vmatpush.bf16.msra.mxu0 0
    %1379 = vmatpush.bf16.msra.mxu0 0
    %1380 = vmatpush.bf16.msra.mxu0 %v1371
    %1381 = vmatmul.bf16.gmra.mxu0 %v1368
    %v1382 = vpop.f32.mrf.mxu0
    %v1383 = vadd.f32 0.0, %v1382
    %v1384 = vpop.f32.mrf.mxu0
    %1385 = vdwg.mxu0
    %1386 = vrot.lane.b32.xlu0 %v1117, 64
    %v1387 = vpop.permute.xlu0 %1386
    %v1389 = vsel %vm233, %v1278, 0
    %v1392 = vsel %vm515, %v1387, 0
    %1394 = vmatpush.bf16.msra.mxu0 0
    %1395 = vmatpush.bf16.msra.mxu0 0
    %1396 = vmatpush.bf16.msra.mxu0 0
    %1397 = vmatpush.bf16.msra.mxu0 0
    %1398 = vmatpush.bf16.msra.mxu0 0
    %1399 = vmatpush.bf16.msra.mxu0 0
    %1400 = vmatpush.bf16.msra.mxu0 0
    %1401 = vmatpush.bf16.msra.mxu0 %v1392
    %1402 = vmatmul.bf16.gmra.mxu0 %v1389
    %v1403 = vpop.f32.mrf.mxu0
    %v1404 = vadd.f32 0.0, %v1403
    %v1405 = vpop.f32.mrf.mxu0
    %1406 = vdwg.mxu0
    %1407 = vrot.lane.b32.xlu0 %v1140, 64
    %v1408 = vpop.permute.xlu0 %1407
    %v1410 = vsel %vm233, %v1279, 0
    %v1413 = vsel %vm515, %v1408, 0
    %1415 = vmatpush.bf16.msra.mxu0 0
    %1416 = vmatpush.bf16.msra.mxu0 0
    %1417 = vmatpush.bf16.msra.mxu0 0
    %1418 = vmatpush.bf16.msra.mxu0 0
    %1419 = vmatpush.bf16.msra.mxu0 0
    %1420 = vmatpush.bf16.msra.mxu0 0
    %1421 = vmatpush.bf16.msra.mxu0 0
    %1422 = vmatpush.bf16.msra.mxu0 %v1413
    %1423 = vmatmul.bf16.gmra.mxu0 %v1410
    %v1424 = vpop.f32.mrf.mxu0
    %v1425 = vadd.f32 0.0, %v1424
    %v1426 = vpop.f32.mrf.mxu0
    %1427 = vdwg.mxu0
    %1428 = vrot.lane.b32.xlu0 %v1163, 64
    %v1429 = vpop.permute.xlu0 %1428
    %v1431 = vsel %vm233, %v1280, 0
    %v1434 = vsel %vm515, %v1429, 0
    %1436 = vmatpush.bf16.msra.mxu0 0
    %1437 = vmatpush.bf16.msra.mxu0 0
    %1438 = vmatpush.bf16.msra.mxu0 0
    %1439 = vmatpush.bf16.msra.mxu0 0
    %1440 = vmatpush.bf16.msra.mxu0 0
    %1441 = vmatpush.bf16.msra.mxu0 0
    %1442 = vmatpush.bf16.msra.mxu0 0
    %1443 = vmatpush.bf16.msra.mxu0 %v1434
    %1444 = vmatmul.bf16.gmra.mxu0 %v1431
    %v1445 = vpop.f32.mrf.mxu0
    %v1446 = vadd.f32 0.0, %v1445
    %v1447 = vpop.f32.mrf.mxu0
    %1448 = vdwg.mxu0
    %1451 = vrot.lane.b32.xlu0 %v1341, 8
    %v1452 = vpop.permute.xlu0 %1451
    %1453 = vrot.lane.b32.xlu0 %v1362, 8
    %v1454 = vpop.permute.xlu0 %1453
    %1459 = vrot.lane.b32.xlu0 %v1383, 16
    %v1460 = vpop.permute.xlu0 %1459
    %1461 = vrot.lane.b32.xlu0 %v1404, 16
    %v1462 = vpop.permute.xlu0 %1461
    %1467 = vrot.lane.b32.xlu0 %v1425, 24
    %v1468 = vpop.permute.xlu0 %1467
    %1469 = vrot.lane.b32.xlu0 %v1446, 24
    %v1470 = vpop.permute.xlu0 %1469
    %v1473 = vsel %vm233, %v1299, %v1452
    %v1474 = vsel %vm233, %v1320, %v1454
    %v1475 = vsel %vm705, %v1473, %v1460
    %v1476 = vsel %vm705, %v1474, %v1462
    %v1477 = vsel %vm708, %v1475, %v1468
    %v1478 = vsel %vm708, %v1476, %v1470
    %v1479 = vpack.c.bf16 %v1478, %v1477
    %v1480 = vperm.slane %v943, 1
    %v1485 = vunpack.c.l.b16 %v981
    %v1486 = vunpack.c.l.b16 %v982
    %v1487 = vunpack.c.l.b16 %v983
    %v1488 = vunpack.c.l.b16 %v984
    %v1489 = vpack.c.b16 %v1486, %v1485
    %v1490 = vpack.c.b16 %v1488, %v1487
    %v1494 = vsel %vm191, %v1479, 0
    %1496 = vmatpush.bf16.msra.mxu0 0
    %1497 = vmatpush.bf16.msra.mxu0 0
    %1498 = vmatpush.bf16.msra.mxu0 0
    %1499 = vmatpush.bf16.msra.mxu0 0
    %1500 = vmatpush.bf16.msra.mxu0 0
    %1501 = vmatpush.bf16.msra.mxu0 0
    %1502 = vmatpush.bf16.msra.mxu0 %v1490
    %1503 = vmatpush.bf16.msra.mxu0 %v1489
    %1504 = vmatmul.bf16.gmra.mxu0 %v1494
    %v1505 = vpop.f32.mrf.mxu0
    %v1506 = vadd.f32 %v1480, %v1505
    %v1507 = vpop.f32.mrf.mxu0
    %v1508 = vadd.f32 %v1480, %v1507
    %1509 = vdwg.mxu0
    %v1510 = vadd.f32 %v940, %v1506
    %v1511 = vadd.f32 %v941, %v1508
    %v1512 = vsel %vm191, %v1510, 0.0
    %1513 = vadd.xlane.f32.xlu0 %v1512
    %v1514 = vpop.xlane.xlu0 %1513
    %v1515 = vsel %vm191, %v1511, 0.0
    %1516 = vadd.xlane.f32.xlu0 %v1515
    %v1517 = vpop.xlane.xlu0 %1516
    %v1518 = vmul.f32 %v1514, %v756
    %v1519 = vmul.f32 %v1517, %v756
    %v1520 = vsub.f32 %v1510, %v1518
    %v1521 = vsub.f32 %v1511, %v1519
    %v1522 = vmul.f32 %v1520, %v1520
    %v1523 = vmul.f32 %v1521, %v1521
    %v1524 = vsel %vm191, %v1522, 0.0
    %1525 = vadd.xlane.f32.xlu0 %v1524
    %v1526 = vpop.xlane.xlu0 %1525
    %v1527 = vsel %vm191, %v1523, 0.0
    %1528 = vadd.xlane.f32.xlu0 %v1527
    %v1529 = vpop.xlane.xlu0 %1528
    %v1530 = vmul.f32 %v1526, %v756
    %v1531 = vmul.f32 %v1529, %v756
    %v1532 = vadd.f32 %v1530, 1e-05
    %v1533 = vadd.f32 %v1531, 1e-05
    %v1534 = vrsqrt.pop %v1532
    %v1535 = vmul.f32 %v1534, %v1532
    %v1536 = vmul.f32 %v1535, %v1534
    %v1537 = vmul.f32 0.5, %v1536
    %v1538 = vsub.f32 1.5, %v1537
    %v1539 = vmul.f32 %v1534, %v1538
    %vm1540 = vweird.f32 %v1532
    %vm1541 = vweird.f32 %v1534
    %vm1542 = vmor %vm1540, %vm1541
    %v1543 = vsel %vm1542, %v1534, %v1539
    %v1544 = vrsqrt.pop %v1533
    %v1545 = vmul.f32 %v1544, %v1533
    %v1546 = vmul.f32 %v1545, %v1544
    %v1547 = vmul.f32 0.5, %v1546
    %v1548 = vsub.f32 1.5, %v1547
    %v1549 = vmul.f32 %v1544, %v1548
    %vm1550 = vweird.f32 %v1533
    %vm1551 = vweird.f32 %v1544
    %vm1552 = vmor %vm1550, %vm1551
    %v1553 = vsel %vm1552, %v1544, %v1549
    %v1554 = vmul.f32 %v1520, %v1543
    %v1555 = vmul.f32 %v1521, %v1553
    %v1556 = vperm.slane %v943, 4
    %v1557 = vmul.f32 %v1554, %v1556
    %v1558 = vmul.f32 %v1555, %v1556
    %v1559 = vperm.slane %v943, 5
    %v1560 = vadd.f32 %v1557, %v1559
    %v1561 = vadd.f32 %v1558, %v1559
    %s1562 = scalar_lea.vmem [#allocation7], 16
    %v1563 = vld [vmem:[%s1562] sm:$0xf]
    %v1564 = vld [vmem:[%s1562 + $0x4] sm:$0xf]
    %v1565 = vld [vmem:[%s1562 + $0x8] sm:$0xf]
    %v1566 = vld [vmem:[%s1562 + $0xc] sm:$0xf]
    %v1567 = vpack.c.bf16 %v1561, %v1560
    %v1568 = vperm.slane %v943, 2
    %v1573 = vunpack.c.l.b16 %v1563
    %v1574 = vunpack.c.l.b16 %v1564
    %v1575 = vunpack.c.l.b16 %v1565
    %v1576 = vunpack.c.l.b16 %v1566
    %v1577 = vpack.c.b16 %v1574, %v1573
    %v1578 = vpack.c.b16 %v1576, %v1575
    %v1582 = vsel %vm191, %v1567, 0
    %1584 = vmatpush.bf16.msra.mxu0 0
    %1585 = vmatpush.bf16.msra.mxu0 0
    %1586 = vmatpush.bf16.msra.mxu0 0
    %1587 = vmatpush.bf16.msra.mxu0 0
    %1588 = vmatpush.bf16.msra.mxu0 0
    %1589 = vmatpush.bf16.msra.mxu0 0
    %1590 = vmatpush.bf16.msra.mxu0 %v1578
    %1591 = vmatpush.bf16.msra.mxu0 %v1577
    %1592 = vmatmul.bf16.gmra.mxu0 %v1582
    %v1593 = vpop.f32.mrf.mxu0
    %v1594 = vadd.f32 %v1568, %v1593
    %v1595 = vpop.f32.mrf.mxu0
    %v1596 = vadd.f32 %v1568, %v1595
    %1597 = vdwg.mxu0
    %v1598 = vmax.f32 %v1594, 0.0
    %v1599 = vmax.f32 %v1596, 0.0
    %s1600 = scalar_lea.vmem %s8, 32
    %v1601 = vld [vmem:[%s1600] sm:$0xf]
    %v1602 = vld [vmem:[%s1600 + $0x4] sm:$0xf]
    %v1603 = vld [vmem:[%s1600 + $0x8] sm:$0xf]
    %v1604 = vld [vmem:[%s1600 + $0xc] sm:$0xf]
    %v1605 = vld [vmem:[%s1600 + $0x10] sm:$0xf]
    %v1606 = vld [vmem:[%s1600 + $0x14] sm:$0xf]
    %v1607 = vld [vmem:[%s1600 + $0x18] sm:$0xf]
    %v1608 = vld [vmem:[%s1600 + $0x1c] sm:$0xf]
    %v1609 = vpack.c.bf16 %v1599, %v1598
    %v1610 = vperm.slane %v943, 3
    %v1619 = vunpack.c.l.b16 %v1601
    %v1620 = vunpack.c.l.b16 %v1602
    %v1621 = vunpack.c.l.b16 %v1603
    %v1622 = vunpack.c.l.b16 %v1604
    %v1623 = vunpack.c.l.b16 %v1605
    %v1624 = vunpack.c.l.b16 %v1606
    %v1625 = vunpack.c.l.b16 %v1607
    %v1626 = vunpack.c.l.b16 %v1608
    %v1627 = vpack.c.b16 %v1620, %v1619
    %v1628 = vpack.c.b16 %v1622, %v1621
    %v1629 = vpack.c.b16 %v1624, %v1623
    %v1630 = vpack.c.b16 %v1626, %v1625
    %v1636 = vsel %vm872, %v1609, 0
    %1638 = vmatpush.bf16.msra.mxu0 0
    %1639 = vmatpush.bf16.msra.mxu0 0
    %1640 = vmatpush.bf16.msra.mxu0 0
    %1641 = vmatpush.bf16.msra.mxu0 0
    %1642 = vmatpush.bf16.msra.mxu0 %v1630
    %1643 = vmatpush.bf16.msra.mxu0 %v1629
    %1644 = vmatpush.bf16.msra.mxu0 %v1628
    %1645 = vmatpush.bf16.msra.mxu0 %v1627
    %1646 = vmatmul.bf16.gmra.mxu0 %v1636
    %v1647 = vpop.f32.mrf.mxu0
    %v1648 = vadd.f32 %v1610, %v1647
    %v1649 = vpop.f32.mrf.mxu0
    %v1650 = vadd.f32 %v1610, %v1649
    %1651 = vdwg.mxu0
    %v1652 = vadd.f32 %v1560, %v1648
    %v1653 = vadd.f32 %v1561, %v1650
    %v1654 = vsel %vm191, %v1652, 0.0
    %1655 = vadd.xlane.f32.xlu0 %v1654
    %v1656 = vpop.xlane.xlu0 %1655
    %v1657 = vsel %vm191, %v1653, 0.0
    %1658 = vadd.xlane.f32.xlu0 %v1657
    %v1659 = vpop.xlane.xlu0 %1658
    %v1660 = vmul.f32 %v1656, %v756
    %v1661 = vmul.f32 %v1659, %v756
    %v1662 = vsub.f32 %v1652, %v1660
    %v1663 = vsub.f32 %v1653, %v1661
    %v1664 = vmul.f32 %v1662, %v1662
    %v1665 = vmul.f32 %v1663, %v1663
    %v1666 = vsel %vm191, %v1664, 0.0
    %1667 = vadd.xlane.f32.xlu0 %v1666
    %v1668 = vpop.xlane.xlu0 %1667
    %v1669 = vsel %vm191, %v1665, 0.0
    %1670 = vadd.xlane.f32.xlu0 %v1669
    %v1671 = vpop.xlane.xlu0 %1670
    %v1672 = vmul.f32 %v1668, %v756
    %v1673 = vmul.f32 %v1671, %v756
    %v1674 = vadd.f32 %v1672, 1e-05
    %v1675 = vadd.f32 %v1673, 1e-05
    %v1676 = vrsqrt.pop %v1674
    %v1677 = vmul.f32 %v1676, %v1674
    %v1678 = vmul.f32 %v1677, %v1676
    %v1679 = vmul.f32 0.5, %v1678
    %v1680 = vsub.f32 1.5, %v1679
    %v1681 = vmul.f32 %v1676, %v1680
    %vm1682 = vweird.f32 %v1674
    %vm1683 = vweird.f32 %v1676
    %vm1684 = vmor %vm1682, %vm1683
    %v1685 = vsel %vm1684, %v1676, %v1681
    %v1686 = vrsqrt.pop %v1675
    %v1687 = vmul.f32 %v1686, %v1675
    %v1688 = vmul.f32 %v1687, %v1686
    %v1689 = vmul.f32 0.5, %v1688
    %v1690 = vsub.f32 1.5, %v1689
    %v1691 = vmul.f32 %v1686, %v1690
    %vm1692 = vweird.f32 %v1675
    %vm1693 = vweird.f32 %v1686
    %vm1694 = vmor %vm1692, %vm1693
    %v1695 = vsel %vm1694, %v1686, %v1691
    %v1696 = vmul.f32 %v1662, %v1685
    %v1697 = vmul.f32 %v1663, %v1695
    %v1698 = vperm.slane %v943, 6
    %v1699 = vmul.f32 %v1696, %v1698
    %v1700 = vmul.f32 %v1697, %v1698
    %v1701 = vperm.slane %v943, 7
    %v1702 = vadd.f32 %v1699, %v1701
    %v1703 = vadd.f32 %v1700, %v1701
    %v1704 = vld [vmem:[%s18] sm:$0x1]
    %v1705 = vld [vmem:[%s18 + $0x1] sm:$0x1]
    %v1706 = vsel %vm191, %v1702, 0.0
    %1707 = vadd.xlane.f32.xlu0 %v1706
    %v1708 = vpop.xlane.xlu0 %1707
    %v1709 = vsel %vm191, %v1703, 0.0
    %1710 = vadd.xlane.f32.xlu0 %v1709
    %v1711 = vpop.xlane.xlu0 %1710
    %v1712 = vmul.f32 %v1708, %v756
    %v1713 = vmul.f32 %v1711, %v756
    %v1714 = vsub.f32 %v1702, %v1712
    %v1715 = vsub.f32 %v1703, %v1713
    %v1716 = vmul.f32 %v1714, %v1714
    %v1717 = vmul.f32 %v1715, %v1715
    %v1718 = vsel %vm191, %v1716, 0.0
    %1719 = vadd.xlane.f32.xlu0 %v1718
    %v1720 = vpop.xlane.xlu0 %1719
    %v1721 = vsel %vm191, %v1717, 0.0
    %1722 = vadd.xlane.f32.xlu0 %v1721
    %v1723 = vpop.xlane.xlu0 %1722
    %v1724 = vmul.f32 %v1720, %v756
    %v1725 = vmul.f32 %v1723, %v756
    %v1726 = vadd.f32 %v1724, 1e-05
    %v1727 = vadd.f32 %v1725, 1e-05
    %v1728 = vrsqrt.pop %v1726
    %v1729 = vmul.f32 %v1728, %v1726
    %v1730 = vmul.f32 %v1729, %v1728
    %v1731 = vmul.f32 0.5, %v1730
    %v1732 = vsub.f32 1.5, %v1731
    %v1733 = vmul.f32 %v1728, %v1732
    %vm1734 = vweird.f32 %v1726
    %vm1735 = vweird.f32 %v1728
    %vm1736 = vmor %vm1734, %vm1735
    %v1737 = vsel %vm1736, %v1728, %v1733
    %v1738 = vrsqrt.pop %v1727
    %v1739 = vmul.f32 %v1738, %v1727
    %v1740 = vmul.f32 %v1739, %v1738
    %v1741 = vmul.f32 0.5, %v1740
    %v1742 = vsub.f32 1.5, %v1741
    %v1743 = vmul.f32 %v1738, %v1742
    %vm1744 = vweird.f32 %v1727
    %vm1745 = vweird.f32 %v1738
    %vm1746 = vmor %vm1744, %vm1745
    %v1747 = vsel %vm1746, %v1738, %v1743
    %v1748 = vmul.f32 %v1714, %v1737
    %v1749 = vmul.f32 %v1715, %v1747
    %v1750 = vperm.slane %v1704, 0
    %v1751 = vmul.f32 %v1748, %v1750
    %v1752 = vmul.f32 %v1749, %v1750
    %v1753 = vperm.slane %v1705, 0
    %v1754 = vadd.f32 %v1751, %v1753
    %v1755 = vadd.f32 %v1752, %v1753
    %v1756 = vpack.c.bf16 %v1755, %v1754
    %v1757 = vld [vmem:[%s1] sm:$0xff]
    %v1758 = vld [vmem:[%s1 + $0x8] sm:$0xff]
    %v1759 = vld [vmem:[%s17] sm:$0xff]
    %v1760 = vld [vmem:[%s17 + $0x8] sm:$0x1f]
    %v1761 = vld [vmem:[#allocation10] sm:$0xf]
    %v1762 = vld [vmem:[#allocation10 + $0x4] sm:$0xf]
    %v1763 = vld [vmem:[#allocation10 + $0x8] sm:$0xf]
    %v1764 = vld [vmem:[#allocation10 + $0xc] sm:$0xf]
    %v1765 = vpack.c.bf16 %v1758, %v1757
    %v1766 = vperm.slane %v1759, 0
    %v1771 = vunpack.c.l.b16 %v1761
    %v1772 = vunpack.c.l.b16 %v1762
    %v1773 = vunpack.c.l.b16 %v1763
    %v1774 = vunpack.c.l.b16 %v1764
    %v1775 = vpack.c.b16 %v1772, %v1771
    %v1776 = vpack.c.b16 %v1774, %v1773
    %v1780 = vsel %vm191, %v1765, 0
    %1782 = vmatpush.bf16.msra.mxu0 0
    %1783 = vmatpush.bf16.msra.mxu0 0
    %1784 = vmatpush.bf16.msra.mxu0 0
    %1785 = vmatpush.bf16.msra.mxu0 0
    %1786 = vmatpush.bf16.msra.mxu0 0
    %1787 = vmatpush.bf16.msra.mxu0 0
    %1788 = vmatpush.bf16.msra.mxu0 %v1776
    %1789 = vmatpush.bf16.msra.mxu0 %v1775
    %1790 = vmatmul.bf16.gmra.mxu0 %v1780
    %v1791 = vpop.f32.mrf.mxu0
    %v1792 = vadd.f32 %v1766, %v1791
    %v1793 = vpop.f32.mrf.mxu0
    %v1794 = vadd.f32 %v1766, %v1793
    %1795 = vdwg.mxu0
    %v1796 = vld [vmem:[#allocation11] sm:$0xf]
    %v1797 = vld [vmem:[#allocation11 + $0x4] sm:$0xf]
    %v1798 = vld [vmem:[#allocation11 + $0x8] sm:$0xf]
    %v1799 = vld [vmem:[#allocation11 + $0xc] sm:$0xf]
    %v1800 = vpack.c.bf16 %v1792, %v1792
    %v1801 = vpack.c.bf16 %v1794, %v1794
    %1804 = vrot.lane.b32.xlu0 %v1800, 120
    %v1805 = vpop.permute.xlu0 %1804
    %1806 = vrot.lane.b32.xlu0 %v1801, 120
    %v1807 = vpop.permute.xlu0 %1806
    %1808 = vrot.lane.b32.xlu0 %v1800, 112
    %v1809 = vpop.permute.xlu0 %1808
    %1810 = vrot.lane.b32.xlu0 %v1801, 112
    %v1811 = vpop.permute.xlu0 %1810
    %1812 = vrot.lane.b32.xlu0 %v1800, 104
    %v1813 = vpop.permute.xlu0 %1812
    %1814 = vrot.lane.b32.xlu0 %v1801, 104
    %v1815 = vpop.permute.xlu0 %1814
    %v1816 = vunpack.c.l.b16 %v1800
    %v1817 = vpack.c.b16 %v1816, %v1816
    %1818 = vrot.lane.b32.xlu0 %v1817, 96
    %v1819 = vpop.permute.xlu0 %1818
    %v1821 = vsel %vm233, %v1800, 0
    %v1824 = vsel %vm233, %v1819, 0
    %1826 = vmatpush.bf16.xpose.msra.mxu0 0
    %1827 = vmatpush.bf16.xpose.msra.mxu0 0
    %1828 = vmatpush.bf16.xpose.msra.mxu0 0
    %1829 = vmatpush.bf16.xpose.msra.mxu0 0
    %1830 = vmatpush.bf16.xpose.msra.mxu0 0
    %1831 = vmatpush.bf16.xpose.msra.mxu0 0
    %1832 = vmatpush.bf16.xpose.msra.mxu0 0
    %1833 = vmatpush.bf16.xpose.msra.mxu0 %v1824
    %1834 = vmatmul.bf16.gmra.mxu0 %v1821
    %v1835 = vpop.f32.mrf.mxu0
    %v1836 = vadd.f32 %v168, %v1835
    %v1837 = vpop.f32.mrf.mxu0
    %1838 = vdwg.mxu0
    %v1839 = vunpack.c.l.b16 %v1801
    %v1840 = vpack.c.b16 %v1839, %v1839
    %1841 = vrot.lane.b32.xlu0 %v1840, 96
    %v1842 = vpop.permute.xlu0 %1841
    %v1844 = vsel %vm233, %v1801, 0
    %v1847 = vsel %vm233, %v1842, 0
    %1849 = vmatpush.bf16.xpose.msra.mxu0 0
    %1850 = vmatpush.bf16.xpose.msra.mxu0 0
    %1851 = vmatpush.bf16.xpose.msra.mxu0 0
    %1852 = vmatpush.bf16.xpose.msra.mxu0 0
    %1853 = vmatpush.bf16.xpose.msra.mxu0 0
    %1854 = vmatpush.bf16.xpose.msra.mxu0 0
    %1855 = vmatpush.bf16.xpose.msra.mxu0 0
    %1856 = vmatpush.bf16.xpose.msra.mxu0 %v1847
    %1857 = vmatmul.bf16.gmra.mxu0 %v1844
    %v1858 = vpop.f32.mrf.mxu0
    %v1859 = vadd.f32 %v168, %v1858
    %v1860 = vpop.f32.mrf.mxu0
    %1861 = vdwg.mxu0
    %v1862 = vunpack.c.l.b16 %v1805
    %v1863 = vpack.c.b16 %v1862, %v1862
    %1864 = vrot.lane.b32.xlu0 %v1863, 96
    %v1865 = vpop.permute.xlu0 %1864
    %v1867 = vsel %vm233, %v1805, 0
    %v1870 = vsel %vm233, %v1865, 0
    %1872 = vmatpush.bf16.xpose.msra.mxu0 0
    %1873 = vmatpush.bf16.xpose.msra.mxu0 0
    %1874 = vmatpush.bf16.xpose.msra.mxu0 0
    %1875 = vmatpush.bf16.xpose.msra.mxu0 0
    %1876 = vmatpush.bf16.xpose.msra.mxu0 0
    %1877 = vmatpush.bf16.xpose.msra.mxu0 0
    %1878 = vmatpush.bf16.xpose.msra.mxu0 0
    %1879 = vmatpush.bf16.xpose.msra.mxu0 %v1870
    %1880 = vmatmul.bf16.gmra.mxu0 %v1867
    %v1881 = vpop.f32.mrf.mxu0
    %v1882 = vadd.f32 %v168, %v1881
    %v1883 = vpop.f32.mrf.mxu0
    %1884 = vdwg.mxu0
    %v1885 = vunpack.c.l.b16 %v1807
    %v1886 = vpack.c.b16 %v1885, %v1885
    %1887 = vrot.lane.b32.xlu0 %v1886, 96
    %v1888 = vpop.permute.xlu0 %1887
    %v1890 = vsel %vm233, %v1807, 0
    %v1893 = vsel %vm233, %v1888, 0
    %1895 = vmatpush.bf16.xpose.msra.mxu0 0
    %1896 = vmatpush.bf16.xpose.msra.mxu0 0
    %1897 = vmatpush.bf16.xpose.msra.mxu0 0
    %1898 = vmatpush.bf16.xpose.msra.mxu0 0
    %1899 = vmatpush.bf16.xpose.msra.mxu0 0
    %1900 = vmatpush.bf16.xpose.msra.mxu0 0
    %1901 = vmatpush.bf16.xpose.msra.mxu0 0
    %1902 = vmatpush.bf16.xpose.msra.mxu0 %v1893
    %1903 = vmatmul.bf16.gmra.mxu0 %v1890
    %v1904 = vpop.f32.mrf.mxu0
    %v1905 = vadd.f32 %v168, %v1904
    %v1906 = vpop.f32.mrf.mxu0
    %1907 = vdwg.mxu0
    %v1908 = vunpack.c.l.b16 %v1809
    %v1909 = vpack.c.b16 %v1908, %v1908
    %1910 = vrot.lane.b32.xlu0 %v1909, 96
    %v1911 = vpop.permute.xlu0 %1910
    %v1913 = vsel %vm233, %v1809, 0
    %v1916 = vsel %vm233, %v1911, 0
    %1918 = vmatpush.bf16.xpose.msra.mxu0 0
    %1919 = vmatpush.bf16.xpose.msra.mxu0 0
    %1920 = vmatpush.bf16.xpose.msra.mxu0 0
    %1921 = vmatpush.bf16.xpose.msra.mxu0 0
    %1922 = vmatpush.bf16.xpose.msra.mxu0 0
    %1923 = vmatpush.bf16.xpose.msra.mxu0 0
    %1924 = vmatpush.bf16.xpose.msra.mxu0 0
    %1925 = vmatpush.bf16.xpose.msra.mxu0 %v1916
    %1926 = vmatmul.bf16.gmra.mxu0 %v1913
    %v1927 = vpop.f32.mrf.mxu0
    %v1928 = vadd.f32 %v168, %v1927
    %v1929 = vpop.f32.mrf.mxu0
    %1930 = vdwg.mxu0
    %v1931 = vunpack.c.l.b16 %v1811
    %v1932 = vpack.c.b16 %v1931, %v1931
    %1933 = vrot.lane.b32.xlu0 %v1932, 96
    %v1934 = vpop.permute.xlu0 %1933
    %v1936 = vsel %vm233, %v1811, 0
    %v1939 = vsel %vm233, %v1934, 0
    %1941 = vmatpush.bf16.xpose.msra.mxu0 0
    %1942 = vmatpush.bf16.xpose.msra.mxu0 0
    %1943 = vmatpush.bf16.xpose.msra.mxu0 0
    %1944 = vmatpush.bf16.xpose.msra.mxu0 0
    %1945 = vmatpush.bf16.xpose.msra.mxu0 0
    %1946 = vmatpush.bf16.xpose.msra.mxu0 0
    %1947 = vmatpush.bf16.xpose.msra.mxu0 0
    %1948 = vmatpush.bf16.xpose.msra.mxu0 %v1939
    %1949 = vmatmul.bf16.gmra.mxu0 %v1936
    %v1950 = vpop.f32.mrf.mxu0
    %v1951 = vadd.f32 %v168, %v1950
    %v1952 = vpop.f32.mrf.mxu0
    %1953 = vdwg.mxu0
    %v1954 = vunpack.c.l.b16 %v1813
    %v1955 = vpack.c.b16 %v1954, %v1954
    %1956 = vrot.lane.b32.xlu0 %v1955, 96
    %v1957 = vpop.permute.xlu0 %1956
    %v1959 = vsel %vm233, %v1813, 0
    %v1962 = vsel %vm233, %v1957, 0
    %1964 = vmatpush.bf16.xpose.msra.mxu0 0
    %1965 = vmatpush.bf16.xpose.msra.mxu0 0
    %1966 = vmatpush.bf16.xpose.msra.mxu0 0
    %1967 = vmatpush.bf16.xpose.msra.mxu0 0
    %1968 = vmatpush.bf16.xpose.msra.mxu0 0
    %1969 = vmatpush.bf16.xpose.msra.mxu0 0
    %1970 = vmatpush.bf16.xpose.msra.mxu0 0
    %1971 = vmatpush.bf16.xpose.msra.mxu0 %v1962
    %1972 = vmatmul.bf16.gmra.mxu0 %v1959
    %v1973 = vpop.f32.mrf.mxu0
    %v1974 = vadd.f32 %v168, %v1973
    %v1975 = vpop.f32.mrf.mxu0
    %1976 = vdwg.mxu0
    %v1977 = vunpack.c.l.b16 %v1815
    %v1978 = vpack.c.b16 %v1977, %v1977
    %1979 = vrot.lane.b32.xlu0 %v1978, 96
    %v1980 = vpop.permute.xlu0 %1979
    %v1982 = vsel %vm233, %v1815, 0
    %v1985 = vsel %vm233, %v1980, 0
    %1987 = vmatpush.bf16.xpose.msra.mxu0 0
    %1988 = vmatpush.bf16.xpose.msra.mxu0 0
    %1989 = vmatpush.bf16.xpose.msra.mxu0 0
    %1990 = vmatpush.bf16.xpose.msra.mxu0 0
    %1991 = vmatpush.bf16.xpose.msra.mxu0 0
    %1992 = vmatpush.bf16.xpose.msra.mxu0 0
    %1993 = vmatpush.bf16.xpose.msra.mxu0 0
    %1994 = vmatpush.bf16.xpose.msra.mxu0 %v1985
    %1995 = vmatmul.bf16.gmra.mxu0 %v1982
    %v1996 = vpop.f32.mrf.mxu0
    %v1997 = vadd.f32 %v168, %v1996
    %v1998 = vpop.f32.mrf.mxu0
    %1999 = vdwg.mxu0
    %v2000 = vsel %vm233, %v1836, -inf
    %2001 = vmax.xlane.f32.xlu0 %v2000
    %v2002 = vpop.xlane.xlu0 %2001
    %v2003 = vsel %vm233, %v1859, -inf
    %2004 = vmax.xlane.f32.xlu0 %v2003
    %v2005 = vpop.xlane.xlu0 %2004
    %v2006 = vsel %vm233, %v1882, -inf
    %2007 = vmax.xlane.f32.xlu0 %v2006
    %v2008 = vpop.xlane.xlu0 %2007
    %v2009 = vsel %vm233, %v1905, -inf
    %2010 = vmax.xlane.f32.xlu0 %v2009
    %v2011 = vpop.xlane.xlu0 %2010
    %v2012 = vsel %vm233, %v1928, -inf
    %2013 = vmax.xlane.f32.xlu0 %v2012
    %v2014 = vpop.xlane.xlu0 %2013
    %v2015 = vsel %vm233, %v1951, -inf
    %2016 = vmax.xlane.f32.xlu0 %v2015
    %v2017 = vpop.xlane.xlu0 %2016
    %v2018 = vsel %vm233, %v1974, -inf
    %2019 = vmax.xlane.f32.xlu0 %v2018
    %v2020 = vpop.xlane.xlu0 %2019
    %v2021 = vsel %vm233, %v1997, -inf
    %2022 = vmax.xlane.f32.xlu0 %v2021
    %v2023 = vpop.xlane.xlu0 %2022
    %v2024 = vsub.f32 %v1836, %v2002
    %v2025 = vsub.f32 %v1859, %v2005
    %v2026 = vsub.f32 %v1882, %v2008
    %v2027 = vsub.f32 %v1905, %v2011
    %v2028 = vsub.f32 %v1928, %v2014
    %v2029 = vsub.f32 %v1951, %v2017
    %v2030 = vsub.f32 %v1974, %v2020
    %v2031 = vsub.f32 %v1997, %v2023
    %v2032 = vmul.f32 %v2024, 1.442695
    %v2033 = vpow.pop %v2032
    %v2034 = vmul.f32 %v2025, 1.442695
    %v2035 = vpow.pop %v2034
    %v2036 = vmul.f32 %v2026, 1.442695
    %v2037 = vpow.pop %v2036
    %v2038 = vmul.f32 %v2027, 1.442695
    %v2039 = vpow.pop %v2038
    %v2040 = vmul.f32 %v2028, 1.442695
    %v2041 = vpow.pop %v2040
    %v2042 = vmul.f32 %v2029, 1.442695
    %v2043 = vpow.pop %v2042
    %v2044 = vmul.f32 %v2030, 1.442695
    %v2045 = vpow.pop %v2044
    %v2046 = vmul.f32 %v2031, 1.442695
    %v2047 = vpow.pop %v2046
    %v2048 = vsel %vm233, %v2033, 0.0
    %2049 = vadd.xlane.f32.xlu0 %v2048
    %v2050 = vpop.xlane.xlu0 %2049
    %v2051 = vsel %vm233, %v2035, 0.0
    %2052 = vadd.xlane.f32.xlu0 %v2051
    %v2053 = vpop.xlane.xlu0 %2052
    %v2054 = vsel %vm233, %v2037, 0.0
    %2055 = vadd.xlane.f32.xlu0 %v2054
    %v2056 = vpop.xlane.xlu0 %2055
    %v2057 = vsel %vm233, %v2039, 0.0
    %2058 = vadd.xlane.f32.xlu0 %v2057
    %v2059 = vpop.xlane.xlu0 %2058
    %v2060 = vsel %vm233, %v2041, 0.0
    %2061 = vadd.xlane.f32.xlu0 %v2060
    %v2062 = vpop.xlane.xlu0 %2061
    %v2063 = vsel %vm233, %v2043, 0.0
    %2064 = vadd.xlane.f32.xlu0 %v2063
    %v2065 = vpop.xlane.xlu0 %2064
    %v2066 = vsel %vm233, %v2045, 0.0
    %2067 = vadd.xlane.f32.xlu0 %v2066
    %v2068 = vpop.xlane.xlu0 %2067
    %v2069 = vsel %vm233, %v2047, 0.0
    %2070 = vadd.xlane.f32.xlu0 %v2069
    %v2071 = vpop.xlane.xlu0 %2070
    %v2072 = vrcp.pop %v2050
    %v2073 = vrcp.pop %v2053
    %v2074 = vrcp.pop %v2056
    %v2075 = vrcp.pop %v2059
    %v2076 = vrcp.pop %v2062
    %v2077 = vrcp.pop %v2065
    %v2078 = vrcp.pop %v2068
    %v2079 = vrcp.pop %v2071
    %v2080 = vmul.f32 %v2033, %v2072
    %v2081 = vmul.f32 %v2035, %v2073
    %v2082 = vmul.f32 %v2037, %v2074
    %v2083 = vmul.f32 %v2039, %v2075
    %v2084 = vmul.f32 %v2041, %v2076
    %v2085 = vmul.f32 %v2043, %v2077
    %v2086 = vmul.f32 %v2045, %v2078
    %v2087 = vmul.f32 %v2047, %v2079
    %v2088 = vpack.c.bf16 %v2080, %v2080
    %v2089 = vpack.c.bf16 %v2081, %v2081
    %v2090 = vpack.c.bf16 %v2082, %v2082
    %v2091 = vpack.c.bf16 %v2083, %v2083
    %v2092 = vpack.c.bf16 %v2084, %v2084
    %v2093 = vpack.c.bf16 %v2085, %v2085
    %v2094 = vpack.c.bf16 %v2086, %v2086
    %v2095 = vpack.c.bf16 %v2087, %v2087
    %2096 = vrot.lane.b32.xlu0 %v1817, 64
    %v2097 = vpop.permute.xlu0 %2096
    %v2099 = vsel %vm233, %v2088, 0
    %v2102 = vsel %vm515, %v2097, 0
    %2104 = vmatpush.bf16.msra.mxu0 0
    %2105 = vmatpush.bf16.msra.mxu0 0
    %2106 = vmatpush.bf16.msra.mxu0 0
    %2107 = vmatpush.bf16.msra.mxu0 0
    %2108 = vmatpush.bf16.msra.mxu0 0
    %2109 = vmatpush.bf16.msra.mxu0 0
    %2110 = vmatpush.bf16.msra.mxu0 0
    %2111 = vmatpush.bf16.msra.mxu0 %v2102
    %2112 = vmatmul.bf16.gmra.mxu0 %v2099
    %v2113 = vpop.f32.mrf.mxu0
    %v2114 = vadd.f32 0.0, %v2113
    %v2115 = vpop.f32.mrf.mxu0
    %2116 = vdwg.mxu0
    %2117 = vrot.lane.b32.xlu0 %v1840, 64
    %v2118 = vpop.permute.xlu0 %2117
    %v2120 = vsel %vm233, %v2089, 0
    %v2123 = vsel %vm515, %v2118, 0
    %2125 = vmatpush.bf16.msra.mxu0 0
    %2126 = vmatpush.bf16.msra.mxu0 0
    %2127 = vmatpush.bf16.msra.mxu0 0
    %2128 = vmatpush.bf16.msra.mxu0 0
    %2129 = vmatpush.bf16.msra.mxu0 0
    %2130 = vmatpush.bf16.msra.mxu0 0
    %2131 = vmatpush.bf16.msra.mxu0 0
    %2132 = vmatpush.bf16.msra.mxu0 %v2123
    %2133 = vmatmul.bf16.gmra.mxu0 %v2120
    %v2134 = vpop.f32.mrf.mxu0
    %v2135 = vadd.f32 0.0, %v2134
    %v2136 = vpop.f32.mrf.mxu0
    %2137 = vdwg.mxu0
    %2138 = vrot.lane.b32.xlu0 %v1863, 64
    %v2139 = vpop.permute.xlu0 %2138
    %v2141 = vsel %vm233, %v2090, 0
    %v2144 = vsel %vm515, %v2139, 0
    %2146 = vmatpush.bf16.msra.mxu0 0
    %2147 = vmatpush.bf16.msra.mxu0 0
    %2148 = vmatpush.bf16.msra.mxu0 0
    %2149 = vmatpush.bf16.msra.mxu0 0
    %2150 = vmatpush.bf16.msra.mxu0 0
    %2151 = vmatpush.bf16.msra.mxu0 0
    %2152 = vmatpush.bf16.msra.mxu0 0
    %2153 = vmatpush.bf16.msra.mxu0 %v2144
    %2154 = vmatmul.bf16.gmra.mxu0 %v2141
    %v2155 = vpop.f32.mrf.mxu0
    %v2156 = vadd.f32 0.0, %v2155
    %v2157 = vpop.f32.mrf.mxu0
    %2158 = vdwg.mxu0
    %2159 = vrot.lane.b32.xlu0 %v1886, 64
    %v2160 = vpop.permute.xlu0 %2159
    %v2162 = vsel %vm233, %v2091, 0
    %v2165 = vsel %vm515, %v2160, 0
    %2167 = vmatpush.bf16.msra.mxu0 0
    %2168 = vmatpush.bf16.msra.mxu0 0
    %2169 = vmatpush.bf16.msra.mxu0 0
    %2170 = vmatpush.bf16.msra.mxu0 0
    %2171 = vmatpush.bf16.msra.mxu0 0
    %2172 = vmatpush.bf16.msra.mxu0 0
    %2173 = vmatpush.bf16.msra.mxu0 0
    %2174 = vmatpush.bf16.msra.mxu0 %v2165
    %2175 = vmatmul.bf16.gmra.mxu0 %v2162
    %v2176 = vpop.f32.mrf.mxu0
    %v2177 = vadd.f32 0.0, %v2176
    %v2178 = vpop.f32.mrf.mxu0
    %2179 = vdwg.mxu0
    %2180 = vrot.lane.b32.xlu0 %v1909, 64
    %v2181 = vpop.permute.xlu0 %2180
    %v2183 = vsel %vm233, %v2092, 0
    %v2186 = vsel %vm515, %v2181, 0
    %2188 = vmatpush.bf16.msra.mxu0 0
    %2189 = vmatpush.bf16.msra.mxu0 0
    %2190 = vmatpush.bf16.msra.mxu0 0
    %2191 = vmatpush.bf16.msra.mxu0 0
    %2192 = vmatpush.bf16.msra.mxu0 0
    %2193 = vmatpush.bf16.msra.mxu0 0
    %2194 = vmatpush.bf16.msra.mxu0 0
    %2195 = vmatpush.bf16.msra.mxu0 %v2186
    %2196 = vmatmul.bf16.gmra.mxu0 %v2183
    %v2197 = vpop.f32.mrf.mxu0
    %v2198 = vadd.f32 0.0, %v2197
    %v2199 = vpop.f32.mrf.mxu0
    %2200 = vdwg.mxu0
    %2201 = vrot.lane.b32.xlu0 %v1932, 64
    %v2202 = vpop.permute.xlu0 %2201
    %v2204 = vsel %vm233, %v2093, 0
    %v2207 = vsel %vm515, %v2202, 0
    %2209 = vmatpush.bf16.msra.mxu0 0
    %2210 = vmatpush.bf16.msra.mxu0 0
    %2211 = vmatpush.bf16.msra.mxu0 0
    %2212 = vmatpush.bf16.msra.mxu0 0
    %2213 = vmatpush.bf16.msra.mxu0 0
    %2214 = vmatpush.bf16.msra.mxu0 0
    %2215 = vmatpush.bf16.msra.mxu0 0
    %2216 = vmatpush.bf16.msra.mxu0 %v2207
    %2217 = vmatmul.bf16.gmra.mxu0 %v2204
    %v2218 = vpop.f32.mrf.mxu0
    %v2219 = vadd.f32 0.0, %v2218
    %v2220 = vpop.f32.mrf.mxu0
    %2221 = vdwg.mxu0
    %2222 = vrot.lane.b32.xlu0 %v1955, 64
    %v2223 = vpop.permute.xlu0 %2222
    %v2225 = vsel %vm233, %v2094, 0
    %v2228 = vsel %vm515, %v2223, 0
    %2230 = vmatpush.bf16.msra.mxu0 0
    %2231 = vmatpush.bf16.msra.mxu0 0
    %2232 = vmatpush.bf16.msra.mxu0 0
    %2233 = vmatpush.bf16.msra.mxu0 0
    %2234 = vmatpush.bf16.msra.mxu0 0
    %2235 = vmatpush.bf16.msra.mxu0 0
    %2236 = vmatpush.bf16.msra.mxu0 0
    %2237 = vmatpush.bf16.msra.mxu0 %v2228
    %2238 = vmatmul.bf16.gmra.mxu0 %v2225
    %v2239 = vpop.f32.mrf.mxu0
    %v2240 = vadd.f32 0.0, %v2239
    %v2241 = vpop.f32.mrf.mxu0
    %2242 = vdwg.mxu0
    %2243 = vrot.lane.b32.xlu0 %v1978, 64
    %v2244 = vpop.permute.xlu0 %2243
    %v2246 = vsel %vm233, %v2095, 0
    %v2249 = vsel %vm515, %v2244, 0
    %2251 = vmatpush.bf16.msra.mxu0 0
    %2252 = vmatpush.bf16.msra.mxu0 0
    %2253 = vmatpush.bf16.msra.mxu0 0
    %2254 = vmatpush.bf16.msra.mxu0 0
    %2255 = vmatpush.bf16.msra.mxu0 0
    %2256 = vmatpush.bf16.msra.mxu0 0
    %2257 = vmatpush.bf16.msra.mxu0 0
    %2258 = vmatpush.bf16.msra.mxu0 %v2249
    %2259 = vmatmul.bf16.gmra.mxu0 %v2246
    %v2260 = vpop.f32.mrf.mxu0
    %v2261 = vadd.f32 0.0, %v2260
    %v2262 = vpop.f32.mrf.mxu0
    %2263 = vdwg.mxu0
    %2266 = vrot.lane.b32.xlu0 %v2156, 8
    %v2267 = vpop.permute.xlu0 %2266
    %2268 = vrot.lane.b32.xlu0 %v2177, 8
    %v2269 = vpop.permute.xlu0 %2268
    %2274 = vrot.lane.b32.xlu0 %v2198, 16
    %v2275 = vpop.permute.xlu0 %2274
    %2276 = vrot.lane.b32.xlu0 %v2219, 16
    %v2277 = vpop.permute.xlu0 %2276
    %2282 = vrot.lane.b32.xlu0 %v2240, 24
    %v2283 = vpop.permute.xlu0 %2282
    %2284 = vrot.lane.b32.xlu0 %v2261, 24
    %v2285 = vpop.permute.xlu0 %2284
    %v2288 = vsel %vm233, %v2114, %v2267
    %v2289 = vsel %vm233, %v2135, %v2269
    %v2290 = vsel %vm705, %v2288, %v2275
    %v2291 = vsel %vm705, %v2289, %v2277
    %v2292 = vsel %vm708, %v2290, %v2283
    %v2293 = vsel %vm708, %v2291, %v2285
    %v2294 = vpack.c.bf16 %v2293, %v2292
    %v2295 = vperm.slane %v1759, 1
    %v2300 = vunpack.c.l.b16 %v1796
    %v2301 = vunpack.c.l.b16 %v1797
    %v2302 = vunpack.c.l.b16 %v1798
    %v2303 = vunpack.c.l.b16 %v1799
    %v2304 = vpack.c.b16 %v2301, %v2300
    %v2305 = vpack.c.b16 %v2303, %v2302
    %v2309 = vsel %vm191, %v2294, 0
    %2311 = vmatpush.bf16.msra.mxu0 0
    %2312 = vmatpush.bf16.msra.mxu0 0
    %2313 = vmatpush.bf16.msra.mxu0 0
    %2314 = vmatpush.bf16.msra.mxu0 0
    %2315 = vmatpush.bf16.msra.mxu0 0
    %2316 = vmatpush.bf16.msra.mxu0 0
    %2317 = vmatpush.bf16.msra.mxu0 %v2305
    %2318 = vmatpush.bf16.msra.mxu0 %v2304
    %2319 = vmatmul.bf16.gmra.mxu0 %v2309
    %v2320 = vpop.f32.mrf.mxu0
    %v2321 = vadd.f32 %v2295, %v2320
    %v2322 = vpop.f32.mrf.mxu0
    %v2323 = vadd.f32 %v2295, %v2322
    %2324 = vdwg.mxu0
    %v2325 = vadd.f32 %v1757, %v2321
    %v2326 = vadd.f32 %v1758, %v2323
    %v2327 = vsel %vm191, %v2325, 0.0
    %2328 = vadd.xlane.f32.xlu0 %v2327
    %v2329 = vpop.xlane.xlu0 %2328
    %v2330 = vsel %vm191, %v2326, 0.0
    %2331 = vadd.xlane.f32.xlu0 %v2330
    %v2332 = vpop.xlane.xlu0 %2331
    %v2333 = vmul.f32 %v2329, %v756
    %v2334 = vmul.f32 %v2332, %v756
    %v2335 = vsub.f32 %v2325, %v2333
    %v2336 = vsub.f32 %v2326, %v2334
    %v2337 = vmul.f32 %v2335, %v2335
    %v2338 = vmul.f32 %v2336, %v2336
    %v2339 = vsel %vm191, %v2337, 0.0
    %2340 = vadd.xlane.f32.xlu0 %v2339
    %v2341 = vpop.xlane.xlu0 %2340
    %v2342 = vsel %vm191, %v2338, 0.0
    %2343 = vadd.xlane.f32.xlu0 %v2342
    %v2344 = vpop.xlane.xlu0 %2343
    %v2345 = vmul.f32 %v2341, %v756
    %v2346 = vmul.f32 %v2344, %v756
    %v2347 = vadd.f32 %v2345, 1e-05
    %v2348 = vadd.f32 %v2346, 1e-05
    %v2349 = vrsqrt.pop %v2347
    %v2350 = vmul.f32 %v2349, %v2347
    %v2351 = vmul.f32 %v2350, %v2349
    %v2352 = vmul.f32 0.5, %v2351
    %v2353 = vsub.f32 1.5, %v2352
    %v2354 = vmul.f32 %v2349, %v2353
    %vm2355 = vweird.f32 %v2347
    %vm2356 = vweird.f32 %v2349
    %vm2357 = vmor %vm2355, %vm2356
    %v2358 = vsel %vm2357, %v2349, %v2354
    %v2359 = vrsqrt.pop %v2348
    %v2360 = vmul.f32 %v2359, %v2348
    %v2361 = vmul.f32 %v2360, %v2359
    %v2362 = vmul.f32 0.5, %v2361
    %v2363 = vsub.f32 1.5, %v2362
    %v2364 = vmul.f32 %v2359, %v2363
    %vm2365 = vweird.f32 %v2348
    %vm2366 = vweird.f32 %v2359
    %vm2367 = vmor %vm2365, %vm2366
    %v2368 = vsel %vm2367, %v2359, %v2364
    %v2369 = vmul.f32 %v2335, %v2358
    %v2370 = vmul.f32 %v2336, %v2368
    %v2371 = vperm.slane %v1759, 7
    %v2372 = vmul.f32 %v2369, %v2371
    %v2373 = vmul.f32 %v2370, %v2371
    %v2374 = vperm.slane %v1760, 0
    %v2375 = vadd.f32 %v2372, %v2374
    %v2376 = vadd.f32 %v2373, %v2374
    %v2377 = vld [vmem:[%s12] sm:$0xf]
    %v2378 = vld [vmem:[%s12 + $0x4] sm:$0xf]
    %v2379 = vld [vmem:[%s12 + $0x8] sm:$0xf]
    %v2380 = vld [vmem:[%s12 + $0xc] sm:$0xf]
    %v2381 = vpack.c.bf16 %v2376, %v2375
    %v2382 = vperm.slane %v1759, 2
    %v2387 = vunpack.c.l.b16 %v2377
    %v2388 = vunpack.c.l.b16 %v2378
    %v2389 = vunpack.c.l.b16 %v2379
    %v2390 = vunpack.c.l.b16 %v2380
    %v2391 = vpack.c.b16 %v2388, %v2387
    %v2392 = vpack.c.b16 %v2390, %v2389
    %v2396 = vsel %vm191, %v2381, 0
    %2398 = vmatpush.bf16.msra.mxu0 0
    %2399 = vmatpush.bf16.msra.mxu0 0
    %2400 = vmatpush.bf16.msra.mxu0 0
    %2401 = vmatpush.bf16.msra.mxu0 0
    %2402 = vmatpush.bf16.msra.mxu0 0
    %2403 = vmatpush.bf16.msra.mxu0 0
    %2404 = vmatpush.bf16.msra.mxu0 %v2392
    %2405 = vmatpush.bf16.msra.mxu0 %v2391
    %2406 = vmatmul.bf16.gmra.mxu0 %v2396
    %v2407 = vpop.f32.mrf.mxu0
    %v2408 = vadd.f32 %v2382, %v2407
    %v2409 = vpop.f32.mrf.mxu0
    %v2410 = vadd.f32 %v2382, %v2409
    %2411 = vdwg.mxu0
    %v2412 = vld [vmem:[%s13] sm:$0xf]
    %v2413 = vld [vmem:[%s13 + $0x4] sm:$0xf]
    %v2414 = vld [vmem:[%s13 + $0x8] sm:$0xf]
    %v2415 = vld [vmem:[%s13 + $0xc] sm:$0xf]
    %v2416 = vperm.slane %v1759, 3
    %v2421 = vunpack.c.l.b16 %v2412
    %v2422 = vunpack.c.l.b16 %v2413
    %v2423 = vunpack.c.l.b16 %v2414
    %v2424 = vunpack.c.l.b16 %v2415
    %v2425 = vpack.c.b16 %v2422, %v2421
    %v2426 = vpack.c.b16 %v2424, %v2423
    %v2430 = vsel %vm191, %v1756, 0
    %2432 = vmatpush.bf16.msra.mxu0 0
    %2433 = vmatpush.bf16.msra.mxu0 0
    %2434 = vmatpush.bf16.msra.mxu0 0
    %2435 = vmatpush.bf16.msra.mxu0 0
    %2436 = vmatpush.bf16.msra.mxu0 0
    %2437 = vmatpush.bf16.msra.mxu0 0
    %2438 = vmatpush.bf16.msra.mxu0 %v2426
    %2439 = vmatpush.bf16.msra.mxu0 %v2425
    %2440 = vmatmul.bf16.gmra.mxu0 %v2430
    %v2441 = vpop.f32.mrf.mxu0
    %v2442 = vadd.f32 %v2416, %v2441
    %v2443 = vpop.f32.mrf.mxu0
    %v2444 = vadd.f32 %v2416, %v2443
    %2445 = vdwg.mxu0
    %v2446 = vld [vmem:[%s14] sm:$0xf]
    %v2447 = vld [vmem:[%s14 + $0x4] sm:$0xf]
    %v2448 = vld [vmem:[%s14 + $0x8] sm:$0xf]
    %v2449 = vld [vmem:[%s14 + $0xc] sm:$0xf]
    %v2450 = vpack.c.bf16 %v2408, %v2408
    %v2451 = vpack.c.bf16 %v2410, %v2410
    %v2452 = vpack.c.bf16 %v2442, %v2442
    %v2453 = vpack.c.bf16 %v2444, %v2444
    %2456 = vrot.lane.b32.xlu0 %v2450, 120
    %v2457 = vpop.permute.xlu0 %2456
    %2458 = vrot.lane.b32.xlu0 %v2451, 120
    %v2459 = vpop.permute.xlu0 %2458
    %2460 = vrot.lane.b32.xlu0 %v2450, 112
    %v2461 = vpop.permute.xlu0 %2460
    %2462 = vrot.lane.b32.xlu0 %v2451, 112
    %v2463 = vpop.permute.xlu0 %2462
    %2464 = vrot.lane.b32.xlu0 %v2450, 104
    %v2465 = vpop.permute.xlu0 %2464
    %2466 = vrot.lane.b32.xlu0 %v2451, 104
    %v2467 = vpop.permute.xlu0 %2466
    %2470 = vrot.lane.b32.xlu0 %v2452, 120
    %v2471 = vpop.permute.xlu0 %2470
    %2472 = vrot.lane.b32.xlu0 %v2453, 120
    %v2473 = vpop.permute.xlu0 %2472
    %2474 = vrot.lane.b32.xlu0 %v2452, 112
    %v2475 = vpop.permute.xlu0 %2474
    %2476 = vrot.lane.b32.xlu0 %v2453, 112
    %v2477 = vpop.permute.xlu0 %2476
    %2478 = vrot.lane.b32.xlu0 %v2452, 104
    %v2479 = vpop.permute.xlu0 %2478
    %2480 = vrot.lane.b32.xlu0 %v2453, 104
    %v2481 = vpop.permute.xlu0 %2480
    %v2483 = vsel %vm233, %v2450, 0
    %v2486 = vsel %vm233, %v2452, 0
    %2488 = vmatpush.bf16.xpose.msra.mxu0 0
    %2489 = vmatpush.bf16.xpose.msra.mxu0 0
    %2490 = vmatpush.bf16.xpose.msra.mxu0 0
    %2491 = vmatpush.bf16.xpose.msra.mxu0 0
    %2492 = vmatpush.bf16.xpose.msra.mxu0 0
    %2493 = vmatpush.bf16.xpose.msra.mxu0 0
    %2494 = vmatpush.bf16.xpose.msra.mxu0 0
    %2495 = vmatpush.bf16.xpose.msra.mxu0 %v2486
    %2496 = vmatmul.bf16.gmra.mxu0 %v2483
    %v2497 = vpop.f32.mrf.mxu0
    %v2498 = vadd.f32 %v169, %v2497
    %v2499 = vpop.f32.mrf.mxu0
    %2500 = vdwg.mxu0
    %v2502 = vsel %vm233, %v2451, 0
    %v2505 = vsel %vm233, %v2453, 0
    %2507 = vmatpush.bf16.xpose.msra.mxu0 0
    %2508 = vmatpush.bf16.xpose.msra.mxu0 0
    %2509 = vmatpush.bf16.xpose.msra.mxu0 0
    %2510 = vmatpush.bf16.xpose.msra.mxu0 0
    %2511 = vmatpush.bf16.xpose.msra.mxu0 0
    %2512 = vmatpush.bf16.xpose.msra.mxu0 0
    %2513 = vmatpush.bf16.xpose.msra.mxu0 0
    %2514 = vmatpush.bf16.xpose.msra.mxu0 %v2505
    %2515 = vmatmul.bf16.gmra.mxu0 %v2502
    %v2516 = vpop.f32.mrf.mxu0
    %v2517 = vadd.f32 %v169, %v2516
    %v2518 = vpop.f32.mrf.mxu0
    %2519 = vdwg.mxu0
    %v2521 = vsel %vm233, %v2457, 0
    %v2524 = vsel %vm233, %v2471, 0
    %2526 = vmatpush.bf16.xpose.msra.mxu0 0
    %2527 = vmatpush.bf16.xpose.msra.mxu0 0
    %2528 = vmatpush.bf16.xpose.msra.mxu0 0
    %2529 = vmatpush.bf16.xpose.msra.mxu0 0
    %2530 = vmatpush.bf16.xpose.msra.mxu0 0
    %2531 = vmatpush.bf16.xpose.msra.mxu0 0
    %2532 = vmatpush.bf16.xpose.msra.mxu0 0
    %2533 = vmatpush.bf16.xpose.msra.mxu0 %v2524
    %2534 = vmatmul.bf16.gmra.mxu0 %v2521
    %v2535 = vpop.f32.mrf.mxu0
    %v2536 = vadd.f32 %v169, %v2535
    %v2537 = vpop.f32.mrf.mxu0
    %2538 = vdwg.mxu0
    %v2540 = vsel %vm233, %v2459, 0
    %v2543 = vsel %vm233, %v2473, 0
    %2545 = vmatpush.bf16.xpose.msra.mxu0 0
    %2546 = vmatpush.bf16.xpose.msra.mxu0 0
    %2547 = vmatpush.bf16.xpose.msra.mxu0 0
    %2548 = vmatpush.bf16.xpose.msra.mxu0 0
    %2549 = vmatpush.bf16.xpose.msra.mxu0 0
    %2550 = vmatpush.bf16.xpose.msra.mxu0 0
    %2551 = vmatpush.bf16.xpose.msra.mxu0 0
    %2552 = vmatpush.bf16.xpose.msra.mxu0 %v2543
    %2553 = vmatmul.bf16.gmra.mxu0 %v2540
    %v2554 = vpop.f32.mrf.mxu0
    %v2555 = vadd.f32 %v169, %v2554
    %v2556 = vpop.f32.mrf.mxu0
    %2557 = vdwg.mxu0
    %v2559 = vsel %vm233, %v2461, 0
    %v2562 = vsel %vm233, %v2475, 0
    %2564 = vmatpush.bf16.xpose.msra.mxu0 0
    %2565 = vmatpush.bf16.xpose.msra.mxu0 0
    %2566 = vmatpush.bf16.xpose.msra.mxu0 0
    %2567 = vmatpush.bf16.xpose.msra.mxu0 0
    %2568 = vmatpush.bf16.xpose.msra.mxu0 0
    %2569 = vmatpush.bf16.xpose.msra.mxu0 0
    %2570 = vmatpush.bf16.xpose.msra.mxu0 0
    %2571 = vmatpush.bf16.xpose.msra.mxu0 %v2562
    %2572 = vmatmul.bf16.gmra.mxu0 %v2559
    %v2573 = vpop.f32.mrf.mxu0
    %v2574 = vadd.f32 %v169, %v2573
    %v2575 = vpop.f32.mrf.mxu0
    %2576 = vdwg.mxu0
    %v2578 = vsel %vm233, %v2463, 0
    %v2581 = vsel %vm233, %v2477, 0
    %2583 = vmatpush.bf16.xpose.msra.mxu0 0
    %2584 = vmatpush.bf16.xpose.msra.mxu0 0
    %2585 = vmatpush.bf16.xpose.msra.mxu0 0
    %2586 = vmatpush.bf16.xpose.msra.mxu0 0
    %2587 = vmatpush.bf16.xpose.msra.mxu0 0
    %2588 = vmatpush.bf16.xpose.msra.mxu0 0
    %2589 = vmatpush.bf16.xpose.msra.mxu0 0
    %2590 = vmatpush.bf16.xpose.msra.mxu0 %v2581
    %2591 = vmatmul.bf16.gmra.mxu0 %v2578
    %v2592 = vpop.f32.mrf.mxu0
    %v2593 = vadd.f32 %v169, %v2592
    %v2594 = vpop.f32.mrf.mxu0
    %2595 = vdwg.mxu0
    %v2597 = vsel %vm233, %v2465, 0
    %v2600 = vsel %vm233, %v2479, 0
    %2602 = vmatpush.bf16.xpose.msra.mxu0 0
    %2603 = vmatpush.bf16.xpose.msra.mxu0 0
    %2604 = vmatpush.bf16.xpose.msra.mxu0 0
    %2605 = vmatpush.bf16.xpose.msra.mxu0 0
    %2606 = vmatpush.bf16.xpose.msra.mxu0 0
    %2607 = vmatpush.bf16.xpose.msra.mxu0 0
    %2608 = vmatpush.bf16.xpose.msra.mxu0 0
    %2609 = vmatpush.bf16.xpose.msra.mxu0 %v2600
    %2610 = vmatmul.bf16.gmra.mxu0 %v2597
    %v2611 = vpop.f32.mrf.mxu0
    %v2612 = vadd.f32 %v169, %v2611
    %v2613 = vpop.f32.mrf.mxu0
    %2614 = vdwg.mxu0
    %v2616 = vsel %vm233, %v2467, 0
    %v2619 = vsel %vm233, %v2481, 0
    %2621 = vmatpush.bf16.xpose.msra.mxu0 0
    %2622 = vmatpush.bf16.xpose.msra.mxu0 0
    %2623 = vmatpush.bf16.xpose.msra.mxu0 0
    %2624 = vmatpush.bf16.xpose.msra.mxu0 0
    %2625 = vmatpush.bf16.xpose.msra.mxu0 0
    %2626 = vmatpush.bf16.xpose.msra.mxu0 0
    %2627 = vmatpush.bf16.xpose.msra.mxu0 0
    %2628 = vmatpush.bf16.xpose.msra.mxu0 %v2619
    %2629 = vmatmul.bf16.gmra.mxu0 %v2616
    %v2630 = vpop.f32.mrf.mxu0
    %v2631 = vadd.f32 %v169, %v2630
    %v2632 = vpop.f32.mrf.mxu0
    %2633 = vdwg.mxu0
    %v2634 = vsel %vm233, %v2498, -inf
    %2635 = vmax.xlane.f32.xlu0 %v2634
    %v2636 = vpop.xlane.xlu0 %2635
    %v2637 = vsel %vm233, %v2517, -inf
    %2638 = vmax.xlane.f32.xlu0 %v2637
    %v2639 = vpop.xlane.xlu0 %2638
    %v2640 = vsel %vm233, %v2536, -inf
    %2641 = vmax.xlane.f32.xlu0 %v2640
    %v2642 = vpop.xlane.xlu0 %2641
    %v2643 = vsel %vm233, %v2555, -inf
    %2644 = vmax.xlane.f32.xlu0 %v2643
    %v2645 = vpop.xlane.xlu0 %2644
    %v2646 = vsel %vm233, %v2574, -inf
    %2647 = vmax.xlane.f32.xlu0 %v2646
    %v2648 = vpop.xlane.xlu0 %2647
    %v2649 = vsel %vm233, %v2593, -inf
    %2650 = vmax.xlane.f32.xlu0 %v2649
    %v2651 = vpop.xlane.xlu0 %2650
    %v2652 = vsel %vm233, %v2612, -inf
    %2653 = vmax.xlane.f32.xlu0 %v2652
    %v2654 = vpop.xlane.xlu0 %2653
    %v2655 = vsel %vm233, %v2631, -inf
    %2656 = vmax.xlane.f32.xlu0 %v2655
    %v2657 = vpop.xlane.xlu0 %2656
    %v2658 = vsub.f32 %v2498, %v2636
    %v2659 = vsub.f32 %v2517, %v2639
    %v2660 = vsub.f32 %v2536, %v2642
    %v2661 = vsub.f32 %v2555, %v2645
    %v2662 = vsub.f32 %v2574, %v2648
    %v2663 = vsub.f32 %v2593, %v2651
    %v2664 = vsub.f32 %v2612, %v2654
    %v2665 = vsub.f32 %v2631, %v2657
    %v2666 = vmul.f32 %v2658, 1.442695
    %v2667 = vpow.pop %v2666
    %v2668 = vmul.f32 %v2659, 1.442695
    %v2669 = vpow.pop %v2668
    %v2670 = vmul.f32 %v2660, 1.442695
    %v2671 = vpow.pop %v2670
    %v2672 = vmul.f32 %v2661, 1.442695
    %v2673 = vpow.pop %v2672
    %v2674 = vmul.f32 %v2662, 1.442695
    %v2675 = vpow.pop %v2674
    %v2676 = vmul.f32 %v2663, 1.442695
    %v2677 = vpow.pop %v2676
    %v2678 = vmul.f32 %v2664, 1.442695
    %v2679 = vpow.pop %v2678
    %v2680 = vmul.f32 %v2665, 1.442695
    %v2681 = vpow.pop %v2680
    %v2682 = vsel %vm233, %v2667, 0.0
    %2683 = vadd.xlane.f32.xlu0 %v2682
    %v2684 = vpop.xlane.xlu0 %2683
    %v2685 = vsel %vm233, %v2669, 0.0
    %2686 = vadd.xlane.f32.xlu0 %v2685
    %v2687 = vpop.xlane.xlu0 %2686
    %v2688 = vsel %vm233, %v2671, 0.0
    %2689 = vadd.xlane.f32.xlu0 %v2688
    %v2690 = vpop.xlane.xlu0 %2689
    %v2691 = vsel %vm233, %v2673, 0.0
    %2692 = vadd.xlane.f32.xlu0 %v2691
    %v2693 = vpop.xlane.xlu0 %2692
    %v2694 = vsel %vm233, %v2675, 0.0
    %2695 = vadd.xlane.f32.xlu0 %v2694
    %v2696 = vpop.xlane.xlu0 %2695
    %v2697 = vsel %vm233, %v2677, 0.0
    %2698 = vadd.xlane.f32.xlu0 %v2697
    %v2699 = vpop.xlane.xlu0 %2698
    %v2700 = vsel %vm233, %v2679, 0.0
    %2701 = vadd.xlane.f32.xlu0 %v2700
    %v2702 = vpop.xlane.xlu0 %2701
    %v2703 = vsel %vm233, %v2681, 0.0
    %2704 = vadd.xlane.f32.xlu0 %v2703
    %v2705 = vpop.xlane.xlu0 %2704
    %v2706 = vrcp.pop %v2684
    %v2707 = vrcp.pop %v2687
    %v2708 = vrcp.pop %v2690
    %v2709 = vrcp.pop %v2693
    %v2710 = vrcp.pop %v2696
    %v2711 = vrcp.pop %v2699
    %v2712 = vrcp.pop %v2702
    %v2713 = vrcp.pop %v2705
    %v2714 = vmul.f32 %v2667, %v2706
    %v2715 = vmul.f32 %v2669, %v2707
    %v2716 = vmul.f32 %v2671, %v2708
    %v2717 = vmul.f32 %v2673, %v2709
    %v2718 = vmul.f32 %v2675, %v2710
    %v2719 = vmul.f32 %v2677, %v2711
    %v2720 = vmul.f32 %v2679, %v2712
    %v2721 = vmul.f32 %v2681, %v2713
    %v2722 = vpack.c.bf16 %v2714, %v2714
    %v2723 = vpack.c.bf16 %v2715, %v2715
    %v2724 = vpack.c.bf16 %v2716, %v2716
    %v2725 = vpack.c.bf16 %v2717, %v2717
    %v2726 = vpack.c.bf16 %v2718, %v2718
    %v2727 = vpack.c.bf16 %v2719, %v2719
    %v2728 = vpack.c.bf16 %v2720, %v2720
    %v2729 = vpack.c.bf16 %v2721, %v2721
    %v2730 = vunpack.c.l.b16 %v2452
    %v2731 = vpack.c.b16 %v2730, %v2730
    %2732 = vrot.lane.b32.xlu0 %v2731, 96
    %v2733 = vpop.permute.xlu0 %2732
    %v2735 = vsel %vm233, %v2722, 0
    %v2738 = vsel %vm515, %v2733, 0
    %2740 = vmatpush.bf16.msra.mxu0 0
    %2741 = vmatpush.bf16.msra.mxu0 0
    %2742 = vmatpush.bf16.msra.mxu0 0
    %2743 = vmatpush.bf16.msra.mxu0 0
    %2744 = vmatpush.bf16.msra.mxu0 0
    %2745 = vmatpush.bf16.msra.mxu0 0
    %2746 = vmatpush.bf16.msra.mxu0 0
    %2747 = vmatpush.bf16.msra.mxu0 %v2738
    %2748 = vmatmul.bf16.gmra.mxu0 %v2735
    %v2749 = vpop.f32.mrf.mxu0
    %v2750 = vadd.f32 0.0, %v2749
    %v2751 = vpop.f32.mrf.mxu0
    %2752 = vdwg.mxu0
    %v2753 = vunpack.c.l.b16 %v2453
    %v2754 = vpack.c.b16 %v2753, %v2753
    %2755 = vrot.lane.b32.xlu0 %v2754, 96
    %v2756 = vpop.permute.xlu0 %2755
    %v2758 = vsel %vm233, %v2723, 0
    %v2761 = vsel %vm515, %v2756, 0
    %2763 = vmatpush.bf16.msra.mxu0 0
    %2764 = vmatpush.bf16.msra.mxu0 0
    %2765 = vmatpush.bf16.msra.mxu0 0
    %2766 = vmatpush.bf16.msra.mxu0 0
    %2767 = vmatpush.bf16.msra.mxu0 0
    %2768 = vmatpush.bf16.msra.mxu0 0
    %2769 = vmatpush.bf16.msra.mxu0 0
    %2770 = vmatpush.bf16.msra.mxu0 %v2761
    %2771 = vmatmul.bf16.gmra.mxu0 %v2758
    %v2772 = vpop.f32.mrf.mxu0
    %v2773 = vadd.f32 0.0, %v2772
    %v2774 = vpop.f32.mrf.mxu0
    %2775 = vdwg.mxu0
    %v2776 = vunpack.c.l.b16 %v2471
    %v2777 = vpack.c.b16 %v2776, %v2776
    %2778 = vrot.lane.b32.xlu0 %v2777, 96
    %v2779 = vpop.permute.xlu0 %2778
    %v2781 = vsel %vm233, %v2724, 0
    %v2784 = vsel %vm515, %v2779, 0
    %2786 = vmatpush.bf16.msra.mxu0 0
    %2787 = vmatpush.bf16.msra.mxu0 0
    %2788 = vmatpush.bf16.msra.mxu0 0
    %2789 = vmatpush.bf16.msra.mxu0 0
    %2790 = vmatpush.bf16.msra.mxu0 0
    %2791 = vmatpush.bf16.msra.mxu0 0
    %2792 = vmatpush.bf16.msra.mxu0 0
    %2793 = vmatpush.bf16.msra.mxu0 %v2784
    %2794 = vmatmul.bf16.gmra.mxu0 %v2781
    %v2795 = vpop.f32.mrf.mxu0
    %v2796 = vadd.f32 0.0, %v2795
    %v2797 = vpop.f32.mrf.mxu0
    %2798 = vdwg.mxu0
    %v2799 = vunpack.c.l.b16 %v2473
    %v2800 = vpack.c.b16 %v2799, %v2799
    %2801 = vrot.lane.b32.xlu0 %v2800, 96
    %v2802 = vpop.permute.xlu0 %2801
    %v2804 = vsel %vm233, %v2725, 0
    %v2807 = vsel %vm515, %v2802, 0
    %2809 = vmatpush.bf16.msra.mxu0 0
    %2810 = vmatpush.bf16.msra.mxu0 0
    %2811 = vmatpush.bf16.msra.mxu0 0
    %2812 = vmatpush.bf16.msra.mxu0 0
    %2813 = vmatpush.bf16.msra.mxu0 0
    %2814 = vmatpush.bf16.msra.mxu0 0
    %2815 = vmatpush.bf16.msra.mxu0 0
    %2816 = vmatpush.bf16.msra.mxu0 %v2807
    %2817 = vmatmul.bf16.gmra.mxu0 %v2804
    %v2818 = vpop.f32.mrf.mxu0
    %v2819 = vadd.f32 0.0, %v2818
    %v2820 = vpop.f32.mrf.mxu0
    %2821 = vdwg.mxu0
    %v2822 = vunpack.c.l.b16 %v2475
    %v2823 = vpack.c.b16 %v2822, %v2822
    %2824 = vrot.lane.b32.xlu0 %v2823, 96
    %v2825 = vpop.permute.xlu0 %2824
    %v2827 = vsel %vm233, %v2726, 0
    %v2830 = vsel %vm515, %v2825, 0
    %2832 = vmatpush.bf16.msra.mxu0 0
    %2833 = vmatpush.bf16.msra.mxu0 0
    %2834 = vmatpush.bf16.msra.mxu0 0
    %2835 = vmatpush.bf16.msra.mxu0 0
    %2836 = vmatpush.bf16.msra.mxu0 0
    %2837 = vmatpush.bf16.msra.mxu0 0
    %2838 = vmatpush.bf16.msra.mxu0 0
    %2839 = vmatpush.bf16.msra.mxu0 %v2830
    %2840 = vmatmul.bf16.gmra.mxu0 %v2827
    %v2841 = vpop.f32.mrf.mxu0
    %v2842 = vadd.f32 0.0, %v2841
    %v2843 = vpop.f32.mrf.mxu0
    %2844 = vdwg.mxu0
    %v2845 = vunpack.c.l.b16 %v2477
    %v2846 = vpack.c.b16 %v2845, %v2845
    %2847 = vrot.lane.b32.xlu0 %v2846, 96
    %v2848 = vpop.permute.xlu0 %2847
    %v2850 = vsel %vm233, %v2727, 0
    %v2853 = vsel %vm515, %v2848, 0
    %2855 = vmatpush.bf16.msra.mxu0 0
    %2856 = vmatpush.bf16.msra.mxu0 0
    %2857 = vmatpush.bf16.msra.mxu0 0
    %2858 = vmatpush.bf16.msra.mxu0 0
    %2859 = vmatpush.bf16.msra.mxu0 0
    %2860 = vmatpush.bf16.msra.mxu0 0
    %2861 = vmatpush.bf16.msra.mxu0 0
    %2862 = vmatpush.bf16.msra.mxu0 %v2853
    %2863 = vmatmul.bf16.gmra.mxu0 %v2850
    %v2864 = vpop.f32.mrf.mxu0
    %v2865 = vadd.f32 0.0, %v2864
    %v2866 = vpop.f32.mrf.mxu0
    %2867 = vdwg.mxu0
    %v2868 = vunpack.c.l.b16 %v2479
    %v2869 = vpack.c.b16 %v2868, %v2868
    %2870 = vrot.lane.b32.xlu0 %v2869, 96
    %v2871 = vpop.permute.xlu0 %2870
    %v2873 = vsel %vm233, %v2728, 0
    %v2876 = vsel %vm515, %v2871, 0
    %2878 = vmatpush.bf16.msra.mxu0 0
    %2879 = vmatpush.bf16.msra.mxu0 0
    %2880 = vmatpush.bf16.msra.mxu0 0
    %2881 = vmatpush.bf16.msra.mxu0 0
    %2882 = vmatpush.bf16.msra.mxu0 0
    %2883 = vmatpush.bf16.msra.mxu0 0
    %2884 = vmatpush.bf16.msra.mxu0 0
    %2885 = vmatpush.bf16.msra.mxu0 %v2876
    %2886 = vmatmul.bf16.gmra.mxu0 %v2873
    %v2887 = vpop.f32.mrf.mxu0
    %v2888 = vadd.f32 0.0, %v2887
    %v2889 = vpop.f32.mrf.mxu0
    %2890 = vdwg.mxu0
    %v2891 = vunpack.c.l.b16 %v2481
    %v2892 = vpack.c.b16 %v2891, %v2891
    %2893 = vrot.lane.b32.xlu0 %v2892, 96
    %v2894 = vpop.permute.xlu0 %2893
    %v2896 = vsel %vm233, %v2729, 0
    %v2899 = vsel %vm515, %v2894, 0
    %2901 = vmatpush.bf16.msra.mxu0 0
    %2902 = vmatpush.bf16.msra.mxu0 0
    %2903 = vmatpush.bf16.msra.mxu0 0
    %2904 = vmatpush.bf16.msra.mxu0 0
    %2905 = vmatpush.bf16.msra.mxu0 0
    %2906 = vmatpush.bf16.msra.mxu0 0
    %2907 = vmatpush.bf16.msra.mxu0 0
    %2908 = vmatpush.bf16.msra.mxu0 %v2899
    %2909 = vmatmul.bf16.gmra.mxu0 %v2896
    %v2910 = vpop.f32.mrf.mxu0
    %v2911 = vadd.f32 0.0, %v2910
    %v2912 = vpop.f32.mrf.mxu0
    %2913 = vdwg.mxu0
    %2916 = vrot.lane.b32.xlu0 %v2796, 8
    %v2917 = vpop.permute.xlu0 %2916
    %2918 = vrot.lane.b32.xlu0 %v2819, 8
    %v2919 = vpop.permute.xlu0 %2918
    %2924 = vrot.lane.b32.xlu0 %v2842, 16
    %v2925 = vpop.permute.xlu0 %2924
    %2926 = vrot.lane.b32.xlu0 %v2865, 16
    %v2927 = vpop.permute.xlu0 %2926
    %2932 = vrot.lane.b32.xlu0 %v2888, 24
    %v2933 = vpop.permute.xlu0 %2932
    %2934 = vrot.lane.b32.xlu0 %v2911, 24
    %v2935 = vpop.permute.xlu0 %2934
    %v2938 = vsel %vm233, %v2750, %v2917
    %v2939 = vsel %vm233, %v2773, %v2919
    %v2940 = vsel %vm705, %v2938, %v2925
    %v2941 = vsel %vm705, %v2939, %v2927
    %v2942 = vsel %vm708, %v2940, %v2933
    %v2943 = vsel %vm708, %v2941, %v2935
    %v2944 = vpack.c.bf16 %v2943, %v2942
    %v2945 = vperm.slane %v1759, 4
    %v2950 = vunpack.c.l.b16 %v2446
    %v2951 = vunpack.c.l.b16 %v2447
    %v2952 = vunpack.c.l.b16 %v2448
    %v2953 = vunpack.c.l.b16 %v2449
    %v2954 = vpack.c.b16 %v2951, %v2950
    %v2955 = vpack.c.b16 %v2953, %v2952
    %v2959 = vsel %vm191, %v2944, 0
    %2961 = vmatpush.bf16.msra.mxu0 0
    %2962 = vmatpush.bf16.msra.mxu0 0
    %2963 = vmatpush.bf16.msra.mxu0 0
    %2964 = vmatpush.bf16.msra.mxu0 0
    %2965 = vmatpush.bf16.msra.mxu0 0
    %2966 = vmatpush.bf16.msra.mxu0 0
    %2967 = vmatpush.bf16.msra.mxu0 %v2955
    %2968 = vmatpush.bf16.msra.mxu0 %v2954
    %2969 = vmatmul.bf16.gmra.mxu0 %v2959
    %v2970 = vpop.f32.mrf.mxu0
    %v2971 = vadd.f32 %v2945, %v2970
    %v2972 = vpop.f32.mrf.mxu0
    %v2973 = vadd.f32 %v2945, %v2972
    %2974 = vdwg.mxu0
    %v2975 = vadd.f32 %v2375, %v2971
    %v2976 = vadd.f32 %v2376, %v2973
    %v2977 = vsel %vm191, %v2975, 0.0
    %2978 = vadd.xlane.f32.xlu0 %v2977
    %v2979 = vpop.xlane.xlu0 %2978
    %v2980 = vsel %vm191, %v2976, 0.0
    %2981 = vadd.xlane.f32.xlu0 %v2980
    %v2982 = vpop.xlane.xlu0 %2981
    %v2983 = vmul.f32 %v2979, %v756
    %v2984 = vmul.f32 %v2982, %v756
    %v2985 = vsub.f32 %v2975, %v2983
    %v2986 = vsub.f32 %v2976, %v2984
    %v2987 = vmul.f32 %v2985, %v2985
    %v2988 = vmul.f32 %v2986, %v2986
    %v2989 = vsel %vm191, %v2987, 0.0
    %2990 = vadd.xlane.f32.xlu0 %v2989
    %v2991 = vpop.xlane.xlu0 %2990
    %v2992 = vsel %vm191, %v2988, 0.0
    %2993 = vadd.xlane.f32.xlu0 %v2992
    %v2994 = vpop.xlane.xlu0 %2993
    %v2995 = vmul.f32 %v2991, %v756
    %v2996 = vmul.f32 %v2994, %v756
    %v2997 = vadd.f32 %v2995, 1e-05
    %v2998 = vadd.f32 %v2996, 1e-05
    %v2999 = vrsqrt.pop %v2997
    %v3000 = vmul.f32 %v2999, %v2997
    %v3001 = vmul.f32 %v3000, %v2999
    %v3002 = vmul.f32 0.5, %v3001
    %v3003 = vsub.f32 1.5, %v3002
    %v3004 = vmul.f32 %v2999, %v3003
    %vm3005 = vweird.f32 %v2997
    %vm3006 = vweird.f32 %v2999
    %vm3007 = vmor %vm3005, %vm3006
    %v3008 = vsel %vm3007, %v2999, %v3004
    %v3009 = vrsqrt.pop %v2998
    %v3010 = vmul.f32 %v3009, %v2998
    %v3011 = vmul.f32 %v3010, %v3009
    %v3012 = vmul.f32 0.5, %v3011
    %v3013 = vsub.f32 1.5, %v3012
    %v3014 = vmul.f32 %v3009, %v3013
    %vm3015 = vweird.f32 %v2998
    %vm3016 = vweird.f32 %v3009
    %vm3017 = vmor %vm3015, %vm3016
    %v3018 = vsel %vm3017, %v3009, %v3014
    %v3019 = vmul.f32 %v2985, %v3008
    %v3020 = vmul.f32 %v2986, %v3018
    %v3021 = vperm.slane %v1760, 1
    %v3022 = vmul.f32 %v3019, %v3021
    %v3023 = vmul.f32 %v3020, %v3021
    %v3024 = vperm.slane %v1760, 2
    %v3025 = vadd.f32 %v3022, %v3024
    %v3026 = vadd.f32 %v3023, %v3024
    %v3027 = vld [vmem:[%s15] sm:$0xf]
    %v3028 = vld [vmem:[%s15 + $0x4] sm:$0xf]
    %v3029 = vld [vmem:[%s15 + $0x8] sm:$0xf]
    %v3030 = vld [vmem:[%s15 + $0xc] sm:$0xf]
    %v3031 = vpack.c.bf16 %v3026, %v3025
    %v3032 = vperm.slane %v1759, 5
    %v3037 = vunpack.c.l.b16 %v3027
    %v3038 = vunpack.c.l.b16 %v3028
    %v3039 = vunpack.c.l.b16 %v3029
    %v3040 = vunpack.c.l.b16 %v3030
    %v3041 = vpack.c.b16 %v3038, %v3037
    %v3042 = vpack.c.b16 %v3040, %v3039
    %v3046 = vsel %vm191, %v3031, 0
    %3048 = vmatpush.bf16.msra.mxu0 0
    %3049 = vmatpush.bf16.msra.mxu0 0
    %3050 = vmatpush.bf16.msra.mxu0 0
    %3051 = vmatpush.bf16.msra.mxu0 0
    %3052 = vmatpush.bf16.msra.mxu0 0
    %3053 = vmatpush.bf16.msra.mxu0 0
    %3054 = vmatpush.bf16.msra.mxu0 %v3042
    %3055 = vmatpush.bf16.msra.mxu0 %v3041
    %3056 = vmatmul.bf16.gmra.mxu0 %v3046
    %v3057 = vpop.f32.mrf.mxu0
    %v3058 = vadd.f32 %v3032, %v3057
    %v3059 = vpop.f32.mrf.mxu0
    %v3060 = vadd.f32 %v3032, %v3059
    %3061 = vdwg.mxu0
    %v3062 = vmax.f32 %v3058, 0.0
    %v3063 = vmax.f32 %v3060, 0.0
    %v3064 = vld [vmem:[%s16] sm:$0xf]
    %v3065 = vld [vmem:[%s16 + $0x4] sm:$0xf]
    %v3066 = vld [vmem:[%s16 + $0x8] sm:$0xf]
    %v3067 = vld [vmem:[%s16 + $0xc] sm:$0xf]
    %v3068 = vld [vmem:[%s16 + $0x10] sm:$0xf]
    %v3069 = vld [vmem:[%s16 + $0x14] sm:$0xf]
    %v3070 = vld [vmem:[%s16 + $0x18] sm:$0xf]
    %v3071 = vld [vmem:[%s16 + $0x1c] sm:$0xf]
    %v3072 = vpack.c.bf16 %v3063, %v3062
    %v3073 = vperm.slane %v1759, 6
    %v3082 = vunpack.c.l.b16 %v3064
    %v3083 = vunpack.c.l.b16 %v3065
    %v3084 = vunpack.c.l.b16 %v3066
    %v3085 = vunpack.c.l.b16 %v3067
    %v3086 = vunpack.c.l.b16 %v3068
    %v3087 = vunpack.c.l.b16 %v3069
    %v3088 = vunpack.c.l.b16 %v3070
    %v3089 = vunpack.c.l.b16 %v3071
    %v3090 = vpack.c.b16 %v3083, %v3082
    %v3091 = vpack.c.b16 %v3085, %v3084
    %v3092 = vpack.c.b16 %v3087, %v3086
    %v3093 = vpack.c.b16 %v3089, %v3088
    %v3099 = vsel %vm872, %v3072, 0
    %3101 = vmatpush.bf16.msra.mxu0 0
    %3102 = vmatpush.bf16.msra.mxu0 0
    %3103 = vmatpush.bf16.msra.mxu0 0
    %3104 = vmatpush.bf16.msra.mxu0 0
    %3105 = vmatpush.bf16.msra.mxu0 %v3093
    %3106 = vmatpush.bf16.msra.mxu0 %v3092
    %3107 = vmatpush.bf16.msra.mxu0 %v3091
    %3108 = vmatpush.bf16.msra.mxu0 %v3090
    %3109 = vmatmul.bf16.gmra.mxu0 %v3099
    %v3110 = vpop.f32.mrf.mxu0
    %v3111 = vadd.f32 %v3073, %v3110
    %v3112 = vpop.f32.mrf.mxu0
    %v3113 = vadd.f32 %v3073, %v3112
    %3114 = vdwg.mxu0
    %v3115 = vadd.f32 %v3025, %v3111
    %v3116 = vadd.f32 %v3026, %v3113
    %v3117 = vsel %vm191, %v3115, 0.0
    %3118 = vadd.xlane.f32.xlu0 %v3117
    %v3119 = vpop.xlane.xlu0 %3118
    %v3120 = vsel %vm191, %v3116, 0.0
    %3121 = vadd.xlane.f32.xlu0 %v3120
    %v3122 = vpop.xlane.xlu0 %3121
    %v3123 = vmul.f32 %v3119, %v756
    %v3124 = vmul.f32 %v3122, %v756
    %v3125 = vsub.f32 %v3115, %v3123
    %v3126 = vsub.f32 %v3116, %v3124
    %v3127 = vmul.f32 %v3125, %v3125
    %v3128 = vmul.f32 %v3126, %v3126
    %v3129 = vsel %vm191, %v3127, 0.0
    %3130 = vadd.xlane.f32.xlu0 %v3129
    %v3131 = vpop.xlane.xlu0 %3130
    %v3132 = vsel %vm191, %v3128, 0.0
    %3133 = vadd.xlane.f32.xlu0 %v3132
    %v3134 = vpop.xlane.xlu0 %3133
    %v3135 = vmul.f32 %v3131, %v756
    %v3136 = vmul.f32 %v3134, %v756
    %v3137 = vadd.f32 %v3135, 1e-05
    %v3138 = vadd.f32 %v3136, 1e-05
    %v3139 = vrsqrt.pop %v3137
    %v3140 = vmul.f32 %v3139, %v3137
    %v3141 = vmul.f32 %v3140, %v3139
    %v3142 = vmul.f32 0.5, %v3141
    %v3143 = vsub.f32 1.5, %v3142
    %v3144 = vmul.f32 %v3139, %v3143
    %vm3145 = vweird.f32 %v3137
    %vm3146 = vweird.f32 %v3139
    %vm3147 = vmor %vm3145, %vm3146
    %v3148 = vsel %vm3147, %v3139, %v3144
    %v3149 = vrsqrt.pop %v3138
    %v3150 = vmul.f32 %v3149, %v3138
    %v3151 = vmul.f32 %v3150, %v3149
    %v3152 = vmul.f32 0.5, %v3151
    %v3153 = vsub.f32 1.5, %v3152
    %v3154 = vmul.f32 %v3149, %v3153
    %vm3155 = vweird.f32 %v3138
    %vm3156 = vweird.f32 %v3149
    %vm3157 = vmor %vm3155, %vm3156
    %v3158 = vsel %vm3157, %v3149, %v3154
    %v3159 = vmul.f32 %v3125, %v3148
    %v3160 = vmul.f32 %v3126, %v3158
    %v3161 = vperm.slane %v1760, 3
    %v3162 = vmul.f32 %v3159, %v3161
    %v3163 = vmul.f32 %v3160, %v3161
    %v3164 = vperm.slane %v1760, 4
    %v3165 = vadd.f32 %v3162, %v3164
    %v3166 = vadd.f32 %v3163, %v3164
    %s3167 = scalar_lea.vmem %s17, 16
    %v3168 = vld [vmem:[%s3167] sm:$0xff]
    %v3169 = vld [vmem:[%s3167 + $0x8] sm:$0x1f]
    %s3170 = scalar_lea.vmem [#allocation10], 16
    %v3171 = vld [vmem:[%s3170] sm:$0xf]
    %v3172 = vld [vmem:[%s3170 + $0x4] sm:$0xf]
    %v3173 = vld [vmem:[%s3170 + $0x8] sm:$0xf]
    %v3174 = vld [vmem:[%s3170 + $0xc] sm:$0xf]
    %v3175 = vpack.c.bf16 %v3166, %v3165
    %v3176 = vperm.slane %v3168, 0
    %v3181 = vunpack.c.l.b16 %v3171
    %v3182 = vunpack.c.l.b16 %v3172
    %v3183 = vunpack.c.l.b16 %v3173
    %v3184 = vunpack.c.l.b16 %v3174
    %v3185 = vpack.c.b16 %v3182, %v3181
    %v3186 = vpack.c.b16 %v3184, %v3183
    %v3190 = vsel %vm191, %v3175, 0
    %3192 = vmatpush.bf16.msra.mxu0 0
    %3193 = vmatpush.bf16.msra.mxu0 0
    %3194 = vmatpush.bf16.msra.mxu0 0
    %3195 = vmatpush.bf16.msra.mxu0 0
    %3196 = vmatpush.bf16.msra.mxu0 0
    %3197 = vmatpush.bf16.msra.mxu0 0
    %3198 = vmatpush.bf16.msra.mxu0 %v3186
    %3199 = vmatpush.bf16.msra.mxu0 %v3185
    %3200 = vmatmul.bf16.gmra.mxu0 %v3190
    %v3201 = vpop.f32.mrf.mxu0
    %v3202 = vadd.f32 %v3176, %v3201
    %v3203 = vpop.f32.mrf.mxu0
    %v3204 = vadd.f32 %v3176, %v3203
    %3205 = vdwg.mxu0
    %s3206 = scalar_lea.vmem [#allocation11], 16
    %v3207 = vld [vmem:[%s3206] sm:$0xf]
    %v3208 = vld [vmem:[%s3206 + $0x4] sm:$0xf]
    %v3209 = vld [vmem:[%s3206 + $0x8] sm:$0xf]
    %v3210 = vld [vmem:[%s3206 + $0xc] sm:$0xf]
    %v3211 = vpack.c.bf16 %v3202, %v3202
    %v3212 = vpack.c.bf16 %v3204, %v3204
    %3215 = vrot.lane.b32.xlu0 %v3211, 120
    %v3216 = vpop.permute.xlu0 %3215
    %3217 = vrot.lane.b32.xlu0 %v3212, 120
    %v3218 = vpop.permute.xlu0 %3217
    %3219 = vrot.lane.b32.xlu0 %v3211, 112
    %v3220 = vpop.permute.xlu0 %3219
    %3221 = vrot.lane.b32.xlu0 %v3212, 112
    %v3222 = vpop.permute.xlu0 %3221
    %3223 = vrot.lane.b32.xlu0 %v3211, 104
    %v3224 = vpop.permute.xlu0 %3223
    %3225 = vrot.lane.b32.xlu0 %v3212, 104
    %v3226 = vpop.permute.xlu0 %3225
    %v3227 = vunpack.c.l.b16 %v3211
    %v3228 = vpack.c.b16 %v3227, %v3227
    %3229 = vrot.lane.b32.xlu0 %v3228, 96
    %v3230 = vpop.permute.xlu0 %3229
    %v3232 = vsel %vm233, %v3211, 0
    %v3235 = vsel %vm233, %v3230, 0
    %3237 = vmatpush.bf16.xpose.msra.mxu0 0
    %3238 = vmatpush.bf16.xpose.msra.mxu0 0
    %3239 = vmatpush.bf16.xpose.msra.mxu0 0
    %3240 = vmatpush.bf16.xpose.msra.mxu0 0
    %3241 = vmatpush.bf16.xpose.msra.mxu0 0
    %3242 = vmatpush.bf16.xpose.msra.mxu0 0
    %3243 = vmatpush.bf16.xpose.msra.mxu0 0
    %3244 = vmatpush.bf16.xpose.msra.mxu0 %v3235
    %3245 = vmatmul.bf16.gmra.mxu0 %v3232
    %v3246 = vpop.f32.mrf.mxu0
    %v3247 = vadd.f32 %v168, %v3246
    %v3248 = vpop.f32.mrf.mxu0
    %3249 = vdwg.mxu0
    %v3250 = vunpack.c.l.b16 %v3212
    %v3251 = vpack.c.b16 %v3250, %v3250
    %3252 = vrot.lane.b32.xlu0 %v3251, 96
    %v3253 = vpop.permute.xlu0 %3252
    %v3255 = vsel %vm233, %v3212, 0
    %v3258 = vsel %vm233, %v3253, 0
    %3260 = vmatpush.bf16.xpose.msra.mxu0 0
    %3261 = vmatpush.bf16.xpose.msra.mxu0 0
    %3262 = vmatpush.bf16.xpose.msra.mxu0 0
    %3263 = vmatpush.bf16.xpose.msra.mxu0 0
    %3264 = vmatpush.bf16.xpose.msra.mxu0 0
    %3265 = vmatpush.bf16.xpose.msra.mxu0 0
    %3266 = vmatpush.bf16.xpose.msra.mxu0 0
    %3267 = vmatpush.bf16.xpose.msra.mxu0 %v3258
    %3268 = vmatmul.bf16.gmra.mxu0 %v3255
    %v3269 = vpop.f32.mrf.mxu0
    %v3270 = vadd.f32 %v168, %v3269
    %v3271 = vpop.f32.mrf.mxu0
    %3272 = vdwg.mxu0
    %v3273 = vunpack.c.l.b16 %v3216
    %v3274 = vpack.c.b16 %v3273, %v3273
    %3275 = vrot.lane.b32.xlu0 %v3274, 96
    %v3276 = vpop.permute.xlu0 %3275
    %v3278 = vsel %vm233, %v3216, 0
    %v3281 = vsel %vm233, %v3276, 0
    %3283 = vmatpush.bf16.xpose.msra.mxu0 0
    %3284 = vmatpush.bf16.xpose.msra.mxu0 0
    %3285 = vmatpush.bf16.xpose.msra.mxu0 0
    %3286 = vmatpush.bf16.xpose.msra.mxu0 0
    %3287 = vmatpush.bf16.xpose.msra.mxu0 0
    %3288 = vmatpush.bf16.xpose.msra.mxu0 0
    %3289 = vmatpush.bf16.xpose.msra.mxu0 0
    %3290 = vmatpush.bf16.xpose.msra.mxu0 %v3281
    %3291 = vmatmul.bf16.gmra.mxu0 %v3278
    %v3292 = vpop.f32.mrf.mxu0
    %v3293 = vadd.f32 %v168, %v3292
    %v3294 = vpop.f32.mrf.mxu0
    %3295 = vdwg.mxu0
    %v3296 = vunpack.c.l.b16 %v3218
    %v3297 = vpack.c.b16 %v3296, %v3296
    %3298 = vrot.lane.b32.xlu0 %v3297, 96
    %v3299 = vpop.permute.xlu0 %3298
    %v3301 = vsel %vm233, %v3218, 0
    %v3304 = vsel %vm233, %v3299, 0
    %3306 = vmatpush.bf16.xpose.msra.mxu0 0
    %3307 = vmatpush.bf16.xpose.msra.mxu0 0
    %3308 = vmatpush.bf16.xpose.msra.mxu0 0
    %3309 = vmatpush.bf16.xpose.msra.mxu0 0
    %3310 = vmatpush.bf16.xpose.msra.mxu0 0
    %3311 = vmatpush.bf16.xpose.msra.mxu0 0
    %3312 = vmatpush.bf16.xpose.msra.mxu0 0
    %3313 = vmatpush.bf16.xpose.msra.mxu0 %v3304
    %3314 = vmatmul.bf16.gmra.mxu0 %v3301
    %v3315 = vpop.f32.mrf.mxu0
    %v3316 = vadd.f32 %v168, %v3315
    %v3317 = vpop.f32.mrf.mxu0
    %3318 = vdwg.mxu0
    %v3319 = vunpack.c.l.b16 %v3220
    %v3320 = vpack.c.b16 %v3319, %v3319
    %3321 = vrot.lane.b32.xlu0 %v3320, 96
    %v3322 = vpop.permute.xlu0 %3321
    %v3324 = vsel %vm233, %v3220, 0
    %v3327 = vsel %vm233, %v3322, 0
    %3329 = vmatpush.bf16.xpose.msra.mxu0 0
    %3330 = vmatpush.bf16.xpose.msra.mxu0 0
    %3331 = vmatpush.bf16.xpose.msra.mxu0 0
    %3332 = vmatpush.bf16.xpose.msra.mxu0 0
    %3333 = vmatpush.bf16.xpose.msra.mxu0 0
    %3334 = vmatpush.bf16.xpose.msra.mxu0 0
    %3335 = vmatpush.bf16.xpose.msra.mxu0 0
    %3336 = vmatpush.bf16.xpose.msra.mxu0 %v3327
    %3337 = vmatmul.bf16.gmra.mxu0 %v3324
    %v3338 = vpop.f32.mrf.mxu0
    %v3339 = vadd.f32 %v168, %v3338
    %v3340 = vpop.f32.mrf.mxu0
    %3341 = vdwg.mxu0
    %v3342 = vunpack.c.l.b16 %v3222
    %v3343 = vpack.c.b16 %v3342, %v3342
    %3344 = vrot.lane.b32.xlu0 %v3343, 96
    %v3345 = vpop.permute.xlu0 %3344
    %v3347 = vsel %vm233, %v3222, 0
    %v3350 = vsel %vm233, %v3345, 0
    %3352 = vmatpush.bf16.xpose.msra.mxu0 0
    %3353 = vmatpush.bf16.xpose.msra.mxu0 0
    %3354 = vmatpush.bf16.xpose.msra.mxu0 0
    %3355 = vmatpush.bf16.xpose.msra.mxu0 0
    %3356 = vmatpush.bf16.xpose.msra.mxu0 0
    %3357 = vmatpush.bf16.xpose.msra.mxu0 0
    %3358 = vmatpush.bf16.xpose.msra.mxu0 0
    %3359 = vmatpush.bf16.xpose.msra.mxu0 %v3350
    %3360 = vmatmul.bf16.gmra.mxu0 %v3347
    %v3361 = vpop.f32.mrf.mxu0
    %v3362 = vadd.f32 %v168, %v3361
    %v3363 = vpop.f32.mrf.mxu0
    %3364 = vdwg.mxu0
    %v3365 = vunpack.c.l.b16 %v3224
    %v3366 = vpack.c.b16 %v3365, %v3365
    %3367 = vrot.lane.b32.xlu0 %v3366, 96
    %v3368 = vpop.permute.xlu0 %3367
    %v3370 = vsel %vm233, %v3224, 0
    %v3373 = vsel %vm233, %v3368, 0
    %3375 = vmatpush.bf16.xpose.msra.mxu0 0
    %3376 = vmatpush.bf16.xpose.msra.mxu0 0
    %3377 = vmatpush.bf16.xpose.msra.mxu0 0
    %3378 = vmatpush.bf16.xpose.msra.mxu0 0
    %3379 = vmatpush.bf16.xpose.msra.mxu0 0
    %3380 = vmatpush.bf16.xpose.msra.mxu0 0
    %3381 = vmatpush.bf16.xpose.msra.mxu0 0
    %3382 = vmatpush.bf16.xpose.msra.mxu0 %v3373
    %3383 = vmatmul.bf16.gmra.mxu0 %v3370
    %v3384 = vpop.f32.mrf.mxu0
    %v3385 = vadd.f32 %v168, %v3384
    %v3386 = vpop.f32.mrf.mxu0
    %3387 = vdwg.mxu0
    %v3388 = vunpack.c.l.b16 %v3226
    %v3389 = vpack.c.b16 %v3388, %v3388
    %3390 = vrot.lane.b32.xlu0 %v3389, 96
    %v3391 = vpop.permute.xlu0 %3390
    %v3393 = vsel %vm233, %v3226, 0
    %v3396 = vsel %vm233, %v3391, 0
    %3398 = vmatpush.bf16.xpose.msra.mxu0 0
    %3399 = vmatpush.bf16.xpose.msra.mxu0 0
    %3400 = vmatpush.bf16.xpose.msra.mxu0 0
    %3401 = vmatpush.bf16.xpose.msra.mxu0 0
    %3402 = vmatpush.bf16.xpose.msra.mxu0 0
    %3403 = vmatpush.bf16.xpose.msra.mxu0 0
    %3404 = vmatpush.bf16.xpose.msra.mxu0 0
    %3405 = vmatpush.bf16.xpose.msra.mxu0 %v3396
    %3406 = vmatmul.bf16.gmra.mxu0 %v3393
    %v3407 = vpop.f32.mrf.mxu0
    %v3408 = vadd.f32 %v168, %v3407
    %v3409 = vpop.f32.mrf.mxu0
    %3410 = vdwg.mxu0
    %v3411 = vsel %vm233, %v3247, -inf
    %3412 = vmax.xlane.f32.xlu0 %v3411
    %v3413 = vpop.xlane.xlu0 %3412
    %v3414 = vsel %vm233, %v3270, -inf
    %3415 = vmax.xlane.f32.xlu0 %v3414
    %v3416 = vpop.xlane.xlu0 %3415
    %v3417 = vsel %vm233, %v3293, -inf
    %3418 = vmax.xlane.f32.xlu0 %v3417
    %v3419 = vpop.xlane.xlu0 %3418
    %v3420 = vsel %vm233, %v3316, -inf
    %3421 = vmax.xlane.f32.xlu0 %v3420
    %v3422 = vpop.xlane.xlu0 %3421
    %v3423 = vsel %vm233, %v3339, -inf
    %3424 = vmax.xlane.f32.xlu0 %v3423
    %v3425 = vpop.xlane.xlu0 %3424
    %v3426 = vsel %vm233, %v3362, -inf
    %3427 = vmax.xlane.f32.xlu0 %v3426
    %v3428 = vpop.xlane.xlu0 %3427
    %v3429 = vsel %vm233, %v3385, -inf
    %3430 = vmax.xlane.f32.xlu0 %v3429
    %v3431 = vpop.xlane.xlu0 %3430
    %v3432 = vsel %vm233, %v3408, -inf
    %3433 = vmax.xlane.f32.xlu0 %v3432
    %v3434 = vpop.xlane.xlu0 %3433
    %v3435 = vsub.f32 %v3247, %v3413
    %v3436 = vsub.f32 %v3270, %v3416
    %v3437 = vsub.f32 %v3293, %v3419
    %v3438 = vsub.f32 %v3316, %v3422
    %v3439 = vsub.f32 %v3339, %v3425
    %v3440 = vsub.f32 %v3362, %v3428
    %v3441 = vsub.f32 %v3385, %v3431
    %v3442 = vsub.f32 %v3408, %v3434
    %v3443 = vmul.f32 %v3435, 1.442695
    %v3444 = vpow.pop %v3443
    %v3445 = vmul.f32 %v3436, 1.442695
    %v3446 = vpow.pop %v3445
    %v3447 = vmul.f32 %v3437, 1.442695
    %v3448 = vpow.pop %v3447
    %v3449 = vmul.f32 %v3438, 1.442695
    %v3450 = vpow.pop %v3449
    %v3451 = vmul.f32 %v3439, 1.442695
    %v3452 = vpow.pop %v3451
    %v3453 = vmul.f32 %v3440, 1.442695
    %v3454 = vpow.pop %v3453
    %v3455 = vmul.f32 %v3441, 1.442695
    %v3456 = vpow.pop %v3455
    %v3457 = vmul.f32 %v3442, 1.442695
    %v3458 = vpow.pop %v3457
    %v3459 = vsel %vm233, %v3444, 0.0
    %3460 = vadd.xlane.f32.xlu0 %v3459
    %v3461 = vpop.xlane.xlu0 %3460
    %v3462 = vsel %vm233, %v3446, 0.0
    %3463 = vadd.xlane.f32.xlu0 %v3462
    %v3464 = vpop.xlane.xlu0 %3463
    %v3465 = vsel %vm233, %v3448, 0.0
    %3466 = vadd.xlane.f32.xlu0 %v3465
    %v3467 = vpop.xlane.xlu0 %3466
    %v3468 = vsel %vm233, %v3450, 0.0
    %3469 = vadd.xlane.f32.xlu0 %v3468
    %v3470 = vpop.xlane.xlu0 %3469
    %v3471 = vsel %vm233, %v3452, 0.0
    %3472 = vadd.xlane.f32.xlu0 %v3471
    %v3473 = vpop.xlane.xlu0 %3472
    %v3474 = vsel %vm233, %v3454, 0.0
    %3475 = vadd.xlane.f32.xlu0 %v3474
    %v3476 = vpop.xlane.xlu0 %3475
    %v3477 = vsel %vm233, %v3456, 0.0
    %3478 = vadd.xlane.f32.xlu0 %v3477
    %v3479 = vpop.xlane.xlu0 %3478
    %v3480 = vsel %vm233, %v3458, 0.0
    %3481 = vadd.xlane.f32.xlu0 %v3480
    %v3482 = vpop.xlane.xlu0 %3481
    %v3483 = vrcp.pop %v3461
    %v3484 = vrcp.pop %v3464
    %v3485 = vrcp.pop %v3467
    %v3486 = vrcp.pop %v3470
    %v3487 = vrcp.pop %v3473
    %v3488 = vrcp.pop %v3476
    %v3489 = vrcp.pop %v3479
    %v3490 = vrcp.pop %v3482
    %v3491 = vmul.f32 %v3444, %v3483
    %v3492 = vmul.f32 %v3446, %v3484
    %v3493 = vmul.f32 %v3448, %v3485
    %v3494 = vmul.f32 %v3450, %v3486
    %v3495 = vmul.f32 %v3452, %v3487
    %v3496 = vmul.f32 %v3454, %v3488
    %v3497 = vmul.f32 %v3456, %v3489
    %v3498 = vmul.f32 %v3458, %v3490
    %v3499 = vpack.c.bf16 %v3491, %v3491
    %v3500 = vpack.c.bf16 %v3492, %v3492
    %v3501 = vpack.c.bf16 %v3493, %v3493
    %v3502 = vpack.c.bf16 %v3494, %v3494
    %v3503 = vpack.c.bf16 %v3495, %v3495
    %v3504 = vpack.c.bf16 %v3496, %v3496
    %v3505 = vpack.c.bf16 %v3497, %v3497
    %v3506 = vpack.c.bf16 %v3498, %v3498
    %3507 = vrot.lane.b32.xlu0 %v3228, 64
    %v3508 = vpop.permute.xlu0 %3507
    %v3510 = vsel %vm233, %v3499, 0
    %v3513 = vsel %vm515, %v3508, 0
    %3515 = vmatpush.bf16.msra.mxu0 0
    %3516 = vmatpush.bf16.msra.mxu0 0
    %3517 = vmatpush.bf16.msra.mxu0 0
    %3518 = vmatpush.bf16.msra.mxu0 0
    %3519 = vmatpush.bf16.msra.mxu0 0
    %3520 = vmatpush.bf16.msra.mxu0 0
    %3521 = vmatpush.bf16.msra.mxu0 0
    %3522 = vmatpush.bf16.msra.mxu0 %v3513
    %3523 = vmatmul.bf16.gmra.mxu0 %v3510
    %v3524 = vpop.f32.mrf.mxu0
    %v3525 = vadd.f32 0.0, %v3524
    %v3526 = vpop.f32.mrf.mxu0
    %3527 = vdwg.mxu0
    %3528 = vrot.lane.b32.xlu0 %v3251, 64
    %v3529 = vpop.permute.xlu0 %3528
    %v3531 = vsel %vm233, %v3500, 0
    %v3534 = vsel %vm515, %v3529, 0
    %3536 = vmatpush.bf16.msra.mxu0 0
    %3537 = vmatpush.bf16.msra.mxu0 0
    %3538 = vmatpush.bf16.msra.mxu0 0
    %3539 = vmatpush.bf16.msra.mxu0 0
    %3540 = vmatpush.bf16.msra.mxu0 0
    %3541 = vmatpush.bf16.msra.mxu0 0
    %3542 = vmatpush.bf16.msra.mxu0 0
    %3543 = vmatpush.bf16.msra.mxu0 %v3534
    %3544 = vmatmul.bf16.gmra.mxu0 %v3531
    %v3545 = vpop.f32.mrf.mxu0
    %v3546 = vadd.f32 0.0, %v3545
    %v3547 = vpop.f32.mrf.mxu0
    %3548 = vdwg.mxu0
    %3549 = vrot.lane.b32.xlu0 %v3274, 64
    %v3550 = vpop.permute.xlu0 %3549
    %v3552 = vsel %vm233, %v3501, 0
    %v3555 = vsel %vm515, %v3550, 0
    %3557 = vmatpush.bf16.msra.mxu0 0
    %3558 = vmatpush.bf16.msra.mxu0 0
    %3559 = vmatpush.bf16.msra.mxu0 0
    %3560 = vmatpush.bf16.msra.mxu0 0
    %3561 = vmatpush.bf16.msra.mxu0 0
    %3562 = vmatpush.bf16.msra.mxu0 0
    %3563 = vmatpush.bf16.msra.mxu0 0
    %3564 = vmatpush.bf16.msra.mxu0 %v3555
    %3565 = vmatmul.bf16.gmra.mxu0 %v3552
    %v3566 = vpop.f32.mrf.mxu0
    %v3567 = vadd.f32 0.0, %v3566
    %v3568 = vpop.f32.mrf.mxu0
    %3569 = vdwg.mxu0
    %3570 = vrot.lane.b32.xlu0 %v3297, 64
    %v3571 = vpop.permute.xlu0 %3570
    %v3573 = vsel %vm233, %v3502, 0
    %v3576 = vsel %vm515, %v3571, 0
    %3578 = vmatpush.bf16.msra.mxu0 0
    %3579 = vmatpush.bf16.msra.mxu0 0
    %3580 = vmatpush.bf16.msra.mxu0 0
    %3581 = vmatpush.bf16.msra.mxu0 0
    %3582 = vmatpush.bf16.msra.mxu0 0
    %3583 = vmatpush.bf16.msra.mxu0 0
    %3584 = vmatpush.bf16.msra.mxu0 0
    %3585 = vmatpush.bf16.msra.mxu0 %v3576
    %3586 = vmatmul.bf16.gmra.mxu0 %v3573
    %v3587 = vpop.f32.mrf.mxu0
    %v3588 = vadd.f32 0.0, %v3587
    %v3589 = vpop.f32.mrf.mxu0
    %3590 = vdwg.mxu0
    %3591 = vrot.lane.b32.xlu0 %v3320, 64
    %v3592 = vpop.permute.xlu0 %3591
    %v3594 = vsel %vm233, %v3503, 0
    %v3597 = vsel %vm515, %v3592, 0
    %3599 = vmatpush.bf16.msra.mxu0 0
    %3600 = vmatpush.bf16.msra.mxu0 0
    %3601 = vmatpush.bf16.msra.mxu0 0
    %3602 = vmatpush.bf16.msra.mxu0 0
    %3603 = vmatpush.bf16.msra.mxu0 0
    %3604 = vmatpush.bf16.msra.mxu0 0
    %3605 = vmatpush.bf16.msra.mxu0 0
    %3606 = vmatpush.bf16.msra.mxu0 %v3597
    %3607 = vmatmul.bf16.gmra.mxu0 %v3594
    %v3608 = vpop.f32.mrf.mxu0
    %v3609 = vadd.f32 0.0, %v3608
    %v3610 = vpop.f32.mrf.mxu0
    %3611 = vdwg.mxu0
    %3612 = vrot.lane.b32.xlu0 %v3343, 64
    %v3613 = vpop.permute.xlu0 %3612
    %v3615 = vsel %vm233, %v3504, 0
    %v3618 = vsel %vm515, %v3613, 0
    %3620 = vmatpush.bf16.msra.mxu0 0
    %3621 = vmatpush.bf16.msra.mxu0 0
    %3622 = vmatpush.bf16.msra.mxu0 0
    %3623 = vmatpush.bf16.msra.mxu0 0
    %3624 = vmatpush.bf16.msra.mxu0 0
    %3625 = vmatpush.bf16.msra.mxu0 0
    %3626 = vmatpush.bf16.msra.mxu0 0
    %3627 = vmatpush.bf16.msra.mxu0 %v3618
    %3628 = vmatmul.bf16.gmra.mxu0 %v3615
    %v3629 = vpop.f32.mrf.mxu0
    %v3630 = vadd.f32 0.0, %v3629
    %v3631 = vpop.f32.mrf.mxu0
    %3632 = vdwg.mxu0
    %3633 = vrot.lane.b32.xlu0 %v3366, 64
    %v3634 = vpop.permute.xlu0 %3633
    %v3636 = vsel %vm233, %v3505, 0
    %v3639 = vsel %vm515, %v3634, 0
    %3641 = vmatpush.bf16.msra.mxu0 0
    %3642 = vmatpush.bf16.msra.mxu0 0
    %3643 = vmatpush.bf16.msra.mxu0 0
    %3644 = vmatpush.bf16.msra.mxu0 0
    %3645 = vmatpush.bf16.msra.mxu0 0
    %3646 = vmatpush.bf16.msra.mxu0 0
    %3647 = vmatpush.bf16.msra.mxu0 0
    %3648 = vmatpush.bf16.msra.mxu0 %v3639
    %3649 = vmatmul.bf16.gmra.mxu0 %v3636
    %v3650 = vpop.f32.mrf.mxu0
    %v3651 = vadd.f32 0.0, %v3650
    %v3652 = vpop.f32.mrf.mxu0
    %3653 = vdwg.mxu0
    %3654 = vrot.lane.b32.xlu0 %v3389, 64
    %v3655 = vpop.permute.xlu0 %3654
    %v3657 = vsel %vm233, %v3506, 0
    %v3660 = vsel %vm515, %v3655, 0
    %3662 = vmatpush.bf16.msra.mxu0 0
    %3663 = vmatpush.bf16.msra.mxu0 0
    %3664 = vmatpush.bf16.msra.mxu0 0
    %3665 = vmatpush.bf16.msra.mxu0 0
    %3666 = vmatpush.bf16.msra.mxu0 0
    %3667 = vmatpush.bf16.msra.mxu0 0
    %3668 = vmatpush.bf16.msra.mxu0 0
    %3669 = vmatpush.bf16.msra.mxu0 %v3660
    %3670 = vmatmul.bf16.gmra.mxu0 %v3657
    %v3671 = vpop.f32.mrf.mxu0
    %v3672 = vadd.f32 0.0, %v3671
    %v3673 = vpop.f32.mrf.mxu0
    %3674 = vdwg.mxu0
    %3677 = vrot.lane.b32.xlu0 %v3567, 8
    %v3678 = vpop.permute.xlu0 %3677
    %3679 = vrot.lane.b32.xlu0 %v3588, 8
    %v3680 = vpop.permute.xlu0 %3679
    %3685 = vrot.lane.b32.xlu0 %v3609, 16
    %v3686 = vpop.permute.xlu0 %3685
    %3687 = vrot.lane.b32.xlu0 %v3630, 16
    %v3688 = vpop.permute.xlu0 %3687
    %3693 = vrot.lane.b32.xlu0 %v3651, 24
    %v3694 = vpop.permute.xlu0 %3693
    %3695 = vrot.lane.b32.xlu0 %v3672, 24
    %v3696 = vpop.permute.xlu0 %3695
    %v3699 = vsel %vm233, %v3525, %v3678
    %v3700 = vsel %vm233, %v3546, %v3680
    %v3701 = vsel %vm705, %v3699, %v3686
    %v3702 = vsel %vm705, %v3700, %v3688
    %v3703 = vsel %vm708, %v3701, %v3694
    %v3704 = vsel %vm708, %v3702, %v3696
    %v3705 = vpack.c.bf16 %v3704, %v3703
    %v3706 = vperm.slane %v3168, 1
    %v3711 = vunpack.c.l.b16 %v3207
    %v3712 = vunpack.c.l.b16 %v3208
    %v3713 = vunpack.c.l.b16 %v3209
    %v3714 = vunpack.c.l.b16 %v3210
    %v3715 = vpack.c.b16 %v3712, %v3711
    %v3716 = vpack.c.b16 %v3714, %v3713
    %v3720 = vsel %vm191, %v3705, 0
    %3722 = vmatpush.bf16.msra.mxu0 0
    %3723 = vmatpush.bf16.msra.mxu0 0
    %3724 = vmatpush.bf16.msra.mxu0 0
    %3725 = vmatpush.bf16.msra.mxu0 0
    %3726 = vmatpush.bf16.msra.mxu0 0
    %3727 = vmatpush.bf16.msra.mxu0 0
    %3728 = vmatpush.bf16.msra.mxu0 %v3716
    %3729 = vmatpush.bf16.msra.mxu0 %v3715
    %3730 = vmatmul.bf16.gmra.mxu0 %v3720
    %v3731 = vpop.f32.mrf.mxu0
    %v3732 = vadd.f32 %v3706, %v3731
    %v3733 = vpop.f32.mrf.mxu0
    %v3734 = vadd.f32 %v3706, %v3733
    %3735 = vdwg.mxu0
    %v3736 = vadd.f32 %v3165, %v3732
    %v3737 = vadd.f32 %v3166, %v3734
    %v3738 = vsel %vm191, %v3736, 0.0
    %3739 = vadd.xlane.f32.xlu0 %v3738
    %v3740 = vpop.xlane.xlu0 %3739
    %v3741 = vsel %vm191, %v3737, 0.0
    %3742 = vadd.xlane.f32.xlu0 %v3741
    %v3743 = vpop.xlane.xlu0 %3742
    %v3744 = vmul.f32 %v3740, %v756
    %v3745 = vmul.f32 %v3743, %v756
    %v3746 = vsub.f32 %v3736, %v3744
    %v3747 = vsub.f32 %v3737, %v3745
    %v3748 = vmul.f32 %v3746, %v3746
    %v3749 = vmul.f32 %v3747, %v3747
    %v3750 = vsel %vm191, %v3748, 0.0
    %3751 = vadd.xlane.f32.xlu0 %v3750
    %v3752 = vpop.xlane.xlu0 %3751
    %v3753 = vsel %vm191, %v3749, 0.0
    %3754 = vadd.xlane.f32.xlu0 %v3753
    %v3755 = vpop.xlane.xlu0 %3754
    %v3756 = vmul.f32 %v3752, %v756
    %v3757 = vmul.f32 %v3755, %v756
    %v3758 = vadd.f32 %v3756, 1e-05
    %v3759 = vadd.f32 %v3757, 1e-05
    %v3760 = vrsqrt.pop %v3758
    %v3761 = vmul.f32 %v3760, %v3758
    %v3762 = vmul.f32 %v3761, %v3760
    %v3763 = vmul.f32 0.5, %v3762
    %v3764 = vsub.f32 1.5, %v3763
    %v3765 = vmul.f32 %v3760, %v3764
    %vm3766 = vweird.f32 %v3758
    %vm3767 = vweird.f32 %v3760
    %vm3768 = vmor %vm3766, %vm3767
    %v3769 = vsel %vm3768, %v3760, %v3765
    %v3770 = vrsqrt.pop %v3759
    %v3771 = vmul.f32 %v3770, %v3759
    %v3772 = vmul.f32 %v3771, %v3770
    %v3773 = vmul.f32 0.5, %v3772
    %v3774 = vsub.f32 1.5, %v3773
    %v3775 = vmul.f32 %v3770, %v3774
    %vm3776 = vweird.f32 %v3759
    %vm3777 = vweird.f32 %v3770
    %vm3778 = vmor %vm3776, %vm3777
    %v3779 = vsel %vm3778, %v3770, %v3775
    %v3780 = vmul.f32 %v3746, %v3769
    %v3781 = vmul.f32 %v3747, %v3779
    %v3782 = vperm.slane %v3168, 7
    %v3783 = vmul.f32 %v3780, %v3782
    %v3784 = vmul.f32 %v3781, %v3782
    %v3785 = vperm.slane %v3169, 0
    %v3786 = vadd.f32 %v3783, %v3785
    %v3787 = vadd.f32 %v3784, %v3785
    %s3788 = scalar_lea.vmem %s12, 16
    %v3789 = vld [vmem:[%s3788] sm:$0xf]
    %v3790 = vld [vmem:[%s3788 + $0x4] sm:$0xf]
    %v3791 = vld [vmem:[%s3788 + $0x8] sm:$0xf]
    %v3792 = vld [vmem:[%s3788 + $0xc] sm:$0xf]
    %v3793 = vpack.c.bf16 %v3787, %v3786
    %v3794 = vperm.slane %v3168, 2
    %v3799 = vunpack.c.l.b16 %v3789
    %v3800 = vunpack.c.l.b16 %v3790
    %v3801 = vunpack.c.l.b16 %v3791
    %v3802 = vunpack.c.l.b16 %v3792
    %v3803 = vpack.c.b16 %v3800, %v3799
    %v3804 = vpack.c.b16 %v3802, %v3801
    %v3808 = vsel %vm191, %v3793, 0
    %3810 = vmatpush.bf16.msra.mxu0 0
    %3811 = vmatpush.bf16.msra.mxu0 0
    %3812 = vmatpush.bf16.msra.mxu0 0
    %3813 = vmatpush.bf16.msra.mxu0 0
    %3814 = vmatpush.bf16.msra.mxu0 0
    %3815 = vmatpush.bf16.msra.mxu0 0
    %3816 = vmatpush.bf16.msra.mxu0 %v3804
    %3817 = vmatpush.bf16.msra.mxu0 %v3803
    %3818 = vmatmul.bf16.gmra.mxu0 %v3808
    %v3819 = vpop.f32.mrf.mxu0
    %v3820 = vadd.f32 %v3794, %v3819
    %v3821 = vpop.f32.mrf.mxu0
    %v3822 = vadd.f32 %v3794, %v3821
    %3823 = vdwg.mxu0
    %s3824 = scalar_lea.vmem %s13, 16
    %v3825 = vld [vmem:[%s3824] sm:$0xf]
    %v3826 = vld [vmem:[%s3824 + $0x4] sm:$0xf]
    %v3827 = vld [vmem:[%s3824 + $0x8] sm:$0xf]
    %v3828 = vld [vmem:[%s3824 + $0xc] sm:$0xf]
    %v3829 = vperm.slane %v3168, 3
    %v3834 = vunpack.c.l.b16 %v3825
    %v3835 = vunpack.c.l.b16 %v3826
    %v3836 = vunpack.c.l.b16 %v3827
    %v3837 = vunpack.c.l.b16 %v3828
    %v3838 = vpack.c.b16 %v3835, %v3834
    %v3839 = vpack.c.b16 %v3837, %v3836
    %3842 = vmatpush.bf16.msra.mxu0 0
    %3843 = vmatpush.bf16.msra.mxu0 0
    %3844 = vmatpush.bf16.msra.mxu0 0
    %3845 = vmatpush.bf16.msra.mxu0 0
    %3846 = vmatpush.bf16.msra.mxu0 0
    %3847 = vmatpush.bf16.msra.mxu0 0
    %3848 = vmatpush.bf16.msra.mxu0 %v3839
    %3849 = vmatpush.bf16.msra.mxu0 %v3838
    %3850 = vmatmul.bf16.gmra.mxu0 %v2430
    %v3851 = vpop.f32.mrf.mxu0
    %v3852 = vadd.f32 %v3829, %v3851
    %v3853 = vpop.f32.mrf.mxu0
    %v3854 = vadd.f32 %v3829, %v3853
    %3855 = vdwg.mxu0
    %s3856 = scalar_lea.vmem %s14, 16
    %v3857 = vld [vmem:[%s3856] sm:$0xf]
    %v3858 = vld [vmem:[%s3856 + $0x4] sm:$0xf]
    %v3859 = vld [vmem:[%s3856 + $0x8] sm:$0xf]
    %v3860 = vld [vmem:[%s3856 + $0xc] sm:$0xf]
    %v3861 = vpack.c.bf16 %v3820, %v3820
    %v3862 = vpack.c.bf16 %v3822, %v3822
    %v3863 = vpack.c.bf16 %v3852, %v3852
    %v3864 = vpack.c.bf16 %v3854, %v3854
    %3867 = vrot.lane.b32.xlu0 %v3861, 120
    %v3868 = vpop.permute.xlu0 %3867
    %3869 = vrot.lane.b32.xlu0 %v3862, 120
    %v3870 = vpop.permute.xlu0 %3869
    %3871 = vrot.lane.b32.xlu0 %v3861, 112
    %v3872 = vpop.permute.xlu0 %3871
    %3873 = vrot.lane.b32.xlu0 %v3862, 112
    %v3874 = vpop.permute.xlu0 %3873
    %3875 = vrot.lane.b32.xlu0 %v3861, 104
    %v3876 = vpop.permute.xlu0 %3875
    %3877 = vrot.lane.b32.xlu0 %v3862, 104
    %v3878 = vpop.permute.xlu0 %3877
    %3881 = vrot.lane.b32.xlu0 %v3863, 120
    %v3882 = vpop.permute.xlu0 %3881
    %3883 = vrot.lane.b32.xlu0 %v3864, 120
    %v3884 = vpop.permute.xlu0 %3883
    %3885 = vrot.lane.b32.xlu0 %v3863, 112
    %v3886 = vpop.permute.xlu0 %3885
    %3887 = vrot.lane.b32.xlu0 %v3864, 112
    %v3888 = vpop.permute.xlu0 %3887
    %3889 = vrot.lane.b32.xlu0 %v3863, 104
    %v3890 = vpop.permute.xlu0 %3889
    %3891 = vrot.lane.b32.xlu0 %v3864, 104
    %v3892 = vpop.permute.xlu0 %3891
    %v3894 = vsel %vm233, %v3861, 0
    %v3897 = vsel %vm233, %v3863, 0
    %3899 = vmatpush.bf16.xpose.msra.mxu0 0
    %3900 = vmatpush.bf16.xpose.msra.mxu0 0
    %3901 = vmatpush.bf16.xpose.msra.mxu0 0
    %3902 = vmatpush.bf16.xpose.msra.mxu0 0
    %3903 = vmatpush.bf16.xpose.msra.mxu0 0
    %3904 = vmatpush.bf16.xpose.msra.mxu0 0
    %3905 = vmatpush.bf16.xpose.msra.mxu0 0
    %3906 = vmatpush.bf16.xpose.msra.mxu0 %v3897
    %3907 = vmatmul.bf16.gmra.mxu0 %v3894
    %v3908 = vpop.f32.mrf.mxu0
    %v3909 = vadd.f32 %v169, %v3908
    %v3910 = vpop.f32.mrf.mxu0
    %3911 = vdwg.mxu0
    %v3913 = vsel %vm233, %v3862, 0
    %v3916 = vsel %vm233, %v3864, 0
    %3918 = vmatpush.bf16.xpose.msra.mxu0 0
    %3919 = vmatpush.bf16.xpose.msra.mxu0 0
    %3920 = vmatpush.bf16.xpose.msra.mxu0 0
    %3921 = vmatpush.bf16.xpose.msra.mxu0 0
    %3922 = vmatpush.bf16.xpose.msra.mxu0 0
    %3923 = vmatpush.bf16.xpose.msra.mxu0 0
    %3924 = vmatpush.bf16.xpose.msra.mxu0 0
    %3925 = vmatpush.bf16.xpose.msra.mxu0 %v3916
    %3926 = vmatmul.bf16.gmra.mxu0 %v3913
    %v3927 = vpop.f32.mrf.mxu0
    %v3928 = vadd.f32 %v169, %v3927
    %v3929 = vpop.f32.mrf.mxu0
    %3930 = vdwg.mxu0
    %v3932 = vsel %vm233, %v3868, 0
    %v3935 = vsel %vm233, %v3882, 0
    %3937 = vmatpush.bf16.xpose.msra.mxu0 0
    %3938 = vmatpush.bf16.xpose.msra.mxu0 0
    %3939 = vmatpush.bf16.xpose.msra.mxu0 0
    %3940 = vmatpush.bf16.xpose.msra.mxu0 0
    %3941 = vmatpush.bf16.xpose.msra.mxu0 0
    %3942 = vmatpush.bf16.xpose.msra.mxu0 0
    %3943 = vmatpush.bf16.xpose.msra.mxu0 0
    %3944 = vmatpush.bf16.xpose.msra.mxu0 %v3935
    %3945 = vmatmul.bf16.gmra.mxu0 %v3932
    %v3946 = vpop.f32.mrf.mxu0
    %v3947 = vadd.f32 %v169, %v3946
    %v3948 = vpop.f32.mrf.mxu0
    %3949 = vdwg.mxu0
    %v3951 = vsel %vm233, %v3870, 0
    %v3954 = vsel %vm233, %v3884, 0
    %3956 = vmatpush.bf16.xpose.msra.mxu0 0
    %3957 = vmatpush.bf16.xpose.msra.mxu0 0
    %3958 = vmatpush.bf16.xpose.msra.mxu0 0
    %3959 = vmatpush.bf16.xpose.msra.mxu0 0
    %3960 = vmatpush.bf16.xpose.msra.mxu0 0
    %3961 = vmatpush.bf16.xpose.msra.mxu0 0
    %3962 = vmatpush.bf16.xpose.msra.mxu0 0
    %3963 = vmatpush.bf16.xpose.msra.mxu0 %v3954
    %3964 = vmatmul.bf16.gmra.mxu0 %v3951
    %v3965 = vpop.f32.mrf.mxu0
    %v3966 = vadd.f32 %v169, %v3965
    %v3967 = vpop.f32.mrf.mxu0
    %3968 = vdwg.mxu0
    %v3970 = vsel %vm233, %v3872, 0
    %v3973 = vsel %vm233, %v3886, 0
    %3975 = vmatpush.bf16.xpose.msra.mxu0 0
    %3976 = vmatpush.bf16.xpose.msra.mxu0 0
    %3977 = vmatpush.bf16.xpose.msra.mxu0 0
    %3978 = vmatpush.bf16.xpose.msra.mxu0 0
    %3979 = vmatpush.bf16.xpose.msra.mxu0 0
    %3980 = vmatpush.bf16.xpose.msra.mxu0 0
    %3981 = vmatpush.bf16.xpose.msra.mxu0 0
    %3982 = vmatpush.bf16.xpose.msra.mxu0 %v3973
    %3983 = vmatmul.bf16.gmra.mxu0 %v3970
    %v3984 = vpop.f32.mrf.mxu0
    %v3985 = vadd.f32 %v169, %v3984
    %v3986 = vpop.f32.mrf.mxu0
    %3987 = vdwg.mxu0
    %v3989 = vsel %vm233, %v3874, 0
    %v3992 = vsel %vm233, %v3888, 0
    %3994 = vmatpush.bf16.xpose.msra.mxu0 0
    %3995 = vmatpush.bf16.xpose.msra.mxu0 0
    %3996 = vmatpush.bf16.xpose.msra.mxu0 0
    %3997 = vmatpush.bf16.xpose.msra.mxu0 0
    %3998 = vmatpush.bf16.xpose.msra.mxu0 0
    %3999 = vmatpush.bf16.xpose.msra.mxu0 0
    %4000 = vmatpush.bf16.xpose.msra.mxu0 0
    %4001 = vmatpush.bf16.xpose.msra.mxu0 %v3992
    %4002 = vmatmul.bf16.gmra.mxu0 %v3989
    %v4003 = vpop.f32.mrf.mxu0
    %v4004 = vadd.f32 %v169, %v4003
    %v4005 = vpop.f32.mrf.mxu0
    %4006 = vdwg.mxu0
    %v4008 = vsel %vm233, %v3876, 0
    %v4011 = vsel %vm233, %v3890, 0
    %4013 = vmatpush.bf16.xpose.msra.mxu0 0
    %4014 = vmatpush.bf16.xpose.msra.mxu0 0
    %4015 = vmatpush.bf16.xpose.msra.mxu0 0
    %4016 = vmatpush.bf16.xpose.msra.mxu0 0
    %4017 = vmatpush.bf16.xpose.msra.mxu0 0
    %4018 = vmatpush.bf16.xpose.msra.mxu0 0
    %4019 = vmatpush.bf16.xpose.msra.mxu0 0
    %4020 = vmatpush.bf16.xpose.msra.mxu0 %v4011
    %4021 = vmatmul.bf16.gmra.mxu0 %v4008
    %v4022 = vpop.f32.mrf.mxu0
    %v4023 = vadd.f32 %v169, %v4022
    %v4024 = vpop.f32.mrf.mxu0
    %4025 = vdwg.mxu0
    %v4027 = vsel %vm233, %v3878, 0
    %v4030 = vsel %vm233, %v3892, 0
    %4032 = vmatpush.bf16.xpose.msra.mxu0 0
    %4033 = vmatpush.bf16.xpose.msra.mxu0 0
    %4034 = vmatpush.bf16.xpose.msra.mxu0 0
    %4035 = vmatpush.bf16.xpose.msra.mxu0 0
    %4036 = vmatpush.bf16.xpose.msra.mxu0 0
    %4037 = vmatpush.bf16.xpose.msra.mxu0 0
    %4038 = vmatpush.bf16.xpose.msra.mxu0 0
    %4039 = vmatpush.bf16.xpose.msra.mxu0 %v4030
    %4040 = vmatmul.bf16.gmra.mxu0 %v4027
    %v4041 = vpop.f32.mrf.mxu0
    %v4042 = vadd.f32 %v169, %v4041
    %v4043 = vpop.f32.mrf.mxu0
    %4044 = vdwg.mxu0
    %v4045 = vsel %vm233, %v3909, -inf
    %4046 = vmax.xlane.f32.xlu0 %v4045
    %v4047 = vpop.xlane.xlu0 %4046
    %v4048 = vsel %vm233, %v3928, -inf
    %4049 = vmax.xlane.f32.xlu0 %v4048
    %v4050 = vpop.xlane.xlu0 %4049
    %v4051 = vsel %vm233, %v3947, -inf
    %4052 = vmax.xlane.f32.xlu0 %v4051
    %v4053 = vpop.xlane.xlu0 %4052
    %v4054 = vsel %vm233, %v3966, -inf
    %4055 = vmax.xlane.f32.xlu0 %v4054
    %v4056 = vpop.xlane.xlu0 %4055
    %v4057 = vsel %vm233, %v3985, -inf
    %4058 = vmax.xlane.f32.xlu0 %v4057
    %v4059 = vpop.xlane.xlu0 %4058
    %v4060 = vsel %vm233, %v4004, -inf
    %4061 = vmax.xlane.f32.xlu0 %v4060
    %v4062 = vpop.xlane.xlu0 %4061
    %v4063 = vsel %vm233, %v4023, -inf
    %4064 = vmax.xlane.f32.xlu0 %v4063
    %v4065 = vpop.xlane.xlu0 %4064
    %v4066 = vsel %vm233, %v4042, -inf
    %4067 = vmax.xlane.f32.xlu0 %v4066
    %v4068 = vpop.xlane.xlu0 %4067
    %v4069 = vsub.f32 %v3909, %v4047
    %v4070 = vsub.f32 %v3928, %v4050
    %v4071 = vsub.f32 %v3947, %v4053
    %v4072 = vsub.f32 %v3966, %v4056
    %v4073 = vsub.f32 %v3985, %v4059
    %v4074 = vsub.f32 %v4004, %v4062
    %v4075 = vsub.f32 %v4023, %v4065
    %v4076 = vsub.f32 %v4042, %v4068
    %v4077 = vmul.f32 %v4069, 1.442695
    %v4078 = vpow.pop %v4077
    %v4079 = vmul.f32 %v4070, 1.442695
    %v4080 = vpow.pop %v4079
    %v4081 = vmul.f32 %v4071, 1.442695
    %v4082 = vpow.pop %v4081
    %v4083 = vmul.f32 %v4072, 1.442695
    %v4084 = vpow.pop %v4083
    %v4085 = vmul.f32 %v4073, 1.442695
    %v4086 = vpow.pop %v4085
    %v4087 = vmul.f32 %v4074, 1.442695
    %v4088 = vpow.pop %v4087
    %v4089 = vmul.f32 %v4075, 1.442695
    %v4090 = vpow.pop %v4089
    %v4091 = vmul.f32 %v4076, 1.442695
    %v4092 = vpow.pop %v4091
    %v4093 = vsel %vm233, %v4078, 0.0
    %4094 = vadd.xlane.f32.xlu0 %v4093
    %v4095 = vpop.xlane.xlu0 %4094
    %v4096 = vsel %vm233, %v4080, 0.0
    %4097 = vadd.xlane.f32.xlu0 %v4096
    %v4098 = vpop.xlane.xlu0 %4097
    %v4099 = vsel %vm233, %v4082, 0.0
    %4100 = vadd.xlane.f32.xlu0 %v4099
    %v4101 = vpop.xlane.xlu0 %4100
    %v4102 = vsel %vm233, %v4084, 0.0
    %4103 = vadd.xlane.f32.xlu0 %v4102
    %v4104 = vpop.xlane.xlu0 %4103
    %v4105 = vsel %vm233, %v4086, 0.0
    %4106 = vadd.xlane.f32.xlu0 %v4105
    %v4107 = vpop.xlane.xlu0 %4106
    %v4108 = vsel %vm233, %v4088, 0.0
    %4109 = vadd.xlane.f32.xlu0 %v4108
    %v4110 = vpop.xlane.xlu0 %4109
    %v4111 = vsel %vm233, %v4090, 0.0
    %4112 = vadd.xlane.f32.xlu0 %v4111
    %v4113 = vpop.xlane.xlu0 %4112
    %v4114 = vsel %vm233, %v4092, 0.0
    %4115 = vadd.xlane.f32.xlu0 %v4114
    %v4116 = vpop.xlane.xlu0 %4115
    %v4117 = vrcp.pop %v4095
    %v4118 = vrcp.pop %v4098
    %v4119 = vrcp.pop %v4101
    %v4120 = vrcp.pop %v4104
    %v4121 = vrcp.pop %v4107
    %v4122 = vrcp.pop %v4110
    %v4123 = vrcp.pop %v4113
    %v4124 = vrcp.pop %v4116
    %v4125 = vmul.f32 %v4078, %v4117
    %v4126 = vmul.f32 %v4080, %v4118
    %v4127 = vmul.f32 %v4082, %v4119
    %v4128 = vmul.f32 %v4084, %v4120
    %v4129 = vmul.f32 %v4086, %v4121
    %v4130 = vmul.f32 %v4088, %v4122
    %v4131 = vmul.f32 %v4090, %v4123
    %v4132 = vmul.f32 %v4092, %v4124
    %v4133 = vpack.c.bf16 %v4125, %v4125
    %v4134 = vpack.c.bf16 %v4126, %v4126
    %v4135 = vpack.c.bf16 %v4127, %v4127
    %v4136 = vpack.c.bf16 %v4128, %v4128
    %v4137 = vpack.c.bf16 %v4129, %v4129
    %v4138 = vpack.c.bf16 %v4130, %v4130
    %v4139 = vpack.c.bf16 %v4131, %v4131
    %v4140 = vpack.c.bf16 %v4132, %v4132
    %v4141 = vunpack.c.l.b16 %v3863
    %v4142 = vpack.c.b16 %v4141, %v4141
    %4143 = vrot.lane.b32.xlu0 %v4142, 96
    %v4144 = vpop.permute.xlu0 %4143
    %v4146 = vsel %vm233, %v4133, 0
    %v4149 = vsel %vm515, %v4144, 0
    %4151 = vmatpush.bf16.msra.mxu0 0
    %4152 = vmatpush.bf16.msra.mxu0 0
    %4153 = vmatpush.bf16.msra.mxu0 0
    %4154 = vmatpush.bf16.msra.mxu0 0
    %4155 = vmatpush.bf16.msra.mxu0 0
    %4156 = vmatpush.bf16.msra.mxu0 0
    %4157 = vmatpush.bf16.msra.mxu0 0
    %4158 = vmatpush.bf16.msra.mxu0 %v4149
    %4159 = vmatmul.bf16.gmra.mxu0 %v4146
    %v4160 = vpop.f32.mrf.mxu0
    %v4161 = vadd.f32 0.0, %v4160
    %v4162 = vpop.f32.mrf.mxu0
    %4163 = vdwg.mxu0
    %v4164 = vunpack.c.l.b16 %v3864
    %v4165 = vpack.c.b16 %v4164, %v4164
    %4166 = vrot.lane.b32.xlu0 %v4165, 96
    %v4167 = vpop.permute.xlu0 %4166
    %v4169 = vsel %vm233, %v4134, 0
    %v4172 = vsel %vm515, %v4167, 0
    %4174 = vmatpush.bf16.msra.mxu0 0
    %4175 = vmatpush.bf16.msra.mxu0 0
    %4176 = vmatpush.bf16.msra.mxu0 0
    %4177 = vmatpush.bf16.msra.mxu0 0
    %4178 = vmatpush.bf16.msra.mxu0 0
    %4179 = vmatpush.bf16.msra.mxu0 0
    %4180 = vmatpush.bf16.msra.mxu0 0
    %4181 = vmatpush.bf16.msra.mxu0 %v4172
    %4182 = vmatmul.bf16.gmra.mxu0 %v4169
    %v4183 = vpop.f32.mrf.mxu0
    %v4184 = vadd.f32 0.0, %v4183
    %v4185 = vpop.f32.mrf.mxu0
    %4186 = vdwg.mxu0
    %v4187 = vunpack.c.l.b16 %v3882
    %v4188 = vpack.c.b16 %v4187, %v4187
    %4189 = vrot.lane.b32.xlu0 %v4188, 96
    %v4190 = vpop.permute.xlu0 %4189
    %v4192 = vsel %vm233, %v4135, 0
    %v4195 = vsel %vm515, %v4190, 0
    %4197 = vmatpush.bf16.msra.mxu0 0
    %4198 = vmatpush.bf16.msra.mxu0 0
    %4199 = vmatpush.bf16.msra.mxu0 0
    %4200 = vmatpush.bf16.msra.mxu0 0
    %4201 = vmatpush.bf16.msra.mxu0 0
    %4202 = vmatpush.bf16.msra.mxu0 0
    %4203 = vmatpush.bf16.msra.mxu0 0
    %4204 = vmatpush.bf16.msra.mxu0 %v4195
    %4205 = vmatmul.bf16.gmra.mxu0 %v4192
    %v4206 = vpop.f32.mrf.mxu0
    %v4207 = vadd.f32 0.0, %v4206
    %v4208 = vpop.f32.mrf.mxu0
    %4209 = vdwg.mxu0
    %v4210 = vunpack.c.l.b16 %v3884
    %v4211 = vpack.c.b16 %v4210, %v4210
    %4212 = vrot.lane.b32.xlu0 %v4211, 96
    %v4213 = vpop.permute.xlu0 %4212
    %v4215 = vsel %vm233, %v4136, 0
    %v4218 = vsel %vm515, %v4213, 0
    %4220 = vmatpush.bf16.msra.mxu0 0
    %4221 = vmatpush.bf16.msra.mxu0 0
    %4222 = vmatpush.bf16.msra.mxu0 0
    %4223 = vmatpush.bf16.msra.mxu0 0
    %4224 = vmatpush.bf16.msra.mxu0 0
    %4225 = vmatpush.bf16.msra.mxu0 0
    %4226 = vmatpush.bf16.msra.mxu0 0
    %4227 = vmatpush.bf16.msra.mxu0 %v4218
    %4228 = vmatmul.bf16.gmra.mxu0 %v4215
    %v4229 = vpop.f32.mrf.mxu0
    %v4230 = vadd.f32 0.0, %v4229
    %v4231 = vpop.f32.mrf.mxu0
    %4232 = vdwg.mxu0
    %v4233 = vunpack.c.l.b16 %v3886
    %v4234 = vpack.c.b16 %v4233, %v4233
    %4235 = vrot.lane.b32.xlu0 %v4234, 96
    %v4236 = vpop.permute.xlu0 %4235
    %v4238 = vsel %vm233, %v4137, 0
    %v4241 = vsel %vm515, %v4236, 0
    %4243 = vmatpush.bf16.msra.mxu0 0
    %4244 = vmatpush.bf16.msra.mxu0 0
    %4245 = vmatpush.bf16.msra.mxu0 0
    %4246 = vmatpush.bf16.msra.mxu0 0
    %4247 = vmatpush.bf16.msra.mxu0 0
    %4248 = vmatpush.bf16.msra.mxu0 0
    %4249 = vmatpush.bf16.msra.mxu0 0
    %4250 = vmatpush.bf16.msra.mxu0 %v4241
    %4251 = vmatmul.bf16.gmra.mxu0 %v4238
    %v4252 = vpop.f32.mrf.mxu0
    %v4253 = vadd.f32 0.0, %v4252
    %v4254 = vpop.f32.mrf.mxu0
    %4255 = vdwg.mxu0
    %v4256 = vunpack.c.l.b16 %v3888
    %v4257 = vpack.c.b16 %v4256, %v4256
    %4258 = vrot.lane.b32.xlu0 %v4257, 96
    %v4259 = vpop.permute.xlu0 %4258
    %v4261 = vsel %vm233, %v4138, 0
    %v4264 = vsel %vm515, %v4259, 0
    %4266 = vmatpush.bf16.msra.mxu0 0
    %4267 = vmatpush.bf16.msra.mxu0 0
    %4268 = vmatpush.bf16.msra.mxu0 0
    %4269 = vmatpush.bf16.msra.mxu0 0
    %4270 = vmatpush.bf16.msra.mxu0 0
    %4271 = vmatpush.bf16.msra.mxu0 0
    %4272 = vmatpush.bf16.msra.mxu0 0
    %4273 = vmatpush.bf16.msra.mxu0 %v4264
    %4274 = vmatmul.bf16.gmra.mxu0 %v4261
    %v4275 = vpop.f32.mrf.mxu0
    %v4276 = vadd.f32 0.0, %v4275
    %v4277 = vpop.f32.mrf.mxu0
    %4278 = vdwg.mxu0
    %v4279 = vunpack.c.l.b16 %v3890
    %v4280 = vpack.c.b16 %v4279, %v4279
    %4281 = vrot.lane.b32.xlu0 %v4280, 96
    %v4282 = vpop.permute.xlu0 %4281
    %v4284 = vsel %vm233, %v4139, 0
    %v4287 = vsel %vm515, %v4282, 0
    %4289 = vmatpush.bf16.msra.mxu0 0
    %4290 = vmatpush.bf16.msra.mxu0 0
    %4291 = vmatpush.bf16.msra.mxu0 0
    %4292 = vmatpush.bf16.msra.mxu0 0
    %4293 = vmatpush.bf16.msra.mxu0 0
    %4294 = vmatpush.bf16.msra.mxu0 0
    %4295 = vmatpush.bf16.msra.mxu0 0
    %4296 = vmatpush.bf16.msra.mxu0 %v4287
    %4297 = vmatmul.bf16.gmra.mxu0 %v4284
    %v4298 = vpop.f32.mrf.mxu0
    %v4299 = vadd.f32 0.0, %v4298
    %v4300 = vpop.f32.mrf.mxu0
    %4301 = vdwg.mxu0
    %v4302 = vunpack.c.l.b16 %v3892
    %v4303 = vpack.c.b16 %v4302, %v4302
    %4304 = vrot.lane.b32.xlu0 %v4303, 96
    %v4305 = vpop.permute.xlu0 %4304
    %v4307 = vsel %vm233, %v4140, 0
    %v4310 = vsel %vm515, %v4305, 0
    %4312 = vmatpush.bf16.msra.mxu0 0
    %4313 = vmatpush.bf16.msra.mxu0 0
    %4314 = vmatpush.bf16.msra.mxu0 0
    %4315 = vmatpush.bf16.msra.mxu0 0
    %4316 = vmatpush.bf16.msra.mxu0 0
    %4317 = vmatpush.bf16.msra.mxu0 0
    %4318 = vmatpush.bf16.msra.mxu0 0
    %4319 = vmatpush.bf16.msra.mxu0 %v4310
    %4320 = vmatmul.bf16.gmra.mxu0 %v4307
    %v4321 = vpop.f32.mrf.mxu0
    %v4322 = vadd.f32 0.0, %v4321
    %v4323 = vpop.f32.mrf.mxu0
    %4324 = vdwg.mxu0
    %4327 = vrot.lane.b32.xlu0 %v4207, 8
    %v4328 = vpop.permute.xlu0 %4327
    %4329 = vrot.lane.b32.xlu0 %v4230, 8
    %v4330 = vpop.permute.xlu0 %4329
    %4335 = vrot.lane.b32.xlu0 %v4253, 16
    %v4336 = vpop.permute.xlu0 %4335
    %4337 = vrot.lane.b32.xlu0 %v4276, 16
    %v4338 = vpop.permute.xlu0 %4337
    %4343 = vrot.lane.b32.xlu0 %v4299, 24
    %v4344 = vpop.permute.xlu0 %4343
    %4345 = vrot.lane.b32.xlu0 %v4322, 24
    %v4346 = vpop.permute.xlu0 %4345
    %v4349 = vsel %vm233, %v4161, %v4328
    %v4350 = vsel %vm233, %v4184, %v4330
    %v4351 = vsel %vm705, %v4349, %v4336
    %v4352 = vsel %vm705, %v4350, %v4338
    %v4353 = vsel %vm708, %v4351, %v4344
    %v4354 = vsel %vm708, %v4352, %v4346
    %v4355 = vpack.c.bf16 %v4354, %v4353
    %v4356 = vperm.slane %v3168, 4
    %v4361 = vunpack.c.l.b16 %v3857
    %v4362 = vunpack.c.l.b16 %v3858
    %v4363 = vunpack.c.l.b16 %v3859
    %v4364 = vunpack.c.l.b16 %v3860
    %v4365 = vpack.c.b16 %v4362, %v4361
    %v4366 = vpack.c.b16 %v4364, %v4363
    %v4370 = vsel %vm191, %v4355, 0
    %4372 = vmatpush.bf16.msra.mxu0 0
    %4373 = vmatpush.bf16.msra.mxu0 0
    %4374 = vmatpush.bf16.msra.mxu0 0
    %4375 = vmatpush.bf16.msra.mxu0 0
    %4376 = vmatpush.bf16.msra.mxu0 0
    %4377 = vmatpush.bf16.msra.mxu0 0
    %4378 = vmatpush.bf16.msra.mxu0 %v4366
    %4379 = vmatpush.bf16.msra.mxu0 %v4365
    %4380 = vmatmul.bf16.gmra.mxu0 %v4370
    %v4381 = vpop.f32.mrf.mxu0
    %v4382 = vadd.f32 %v4356, %v4381
    %v4383 = vpop.f32.mrf.mxu0
    %v4384 = vadd.f32 %v4356, %v4383
    %4385 = vdwg.mxu0
    %v4386 = vadd.f32 %v3786, %v4382
    %v4387 = vadd.f32 %v3787, %v4384
    %v4388 = vsel %vm191, %v4386, 0.0
    %4389 = vadd.xlane.f32.xlu0 %v4388
    %v4390 = vpop.xlane.xlu0 %4389
    %v4391 = vsel %vm191, %v4387, 0.0
    %4392 = vadd.xlane.f32.xlu0 %v4391
    %v4393 = vpop.xlane.xlu0 %4392
    %v4394 = vmul.f32 %v4390, %v756
    %v4395 = vmul.f32 %v4393, %v756
    %v4396 = vsub.f32 %v4386, %v4394
    %v4397 = vsub.f32 %v4387, %v4395
    %v4398 = vmul.f32 %v4396, %v4396
    %v4399 = vmul.f32 %v4397, %v4397
    %v4400 = vsel %vm191, %v4398, 0.0
    %4401 = vadd.xlane.f32.xlu0 %v4400
    %v4402 = vpop.xlane.xlu0 %4401
    %v4403 = vsel %vm191, %v4399, 0.0
    %4404 = vadd.xlane.f32.xlu0 %v4403
    %v4405 = vpop.xlane.xlu0 %4404
    %v4406 = vmul.f32 %v4402, %v756
    %v4407 = vmul.f32 %v4405, %v756
    %v4408 = vadd.f32 %v4406, 1e-05
    %v4409 = vadd.f32 %v4407, 1e-05
    %v4410 = vrsqrt.pop %v4408
    %v4411 = vmul.f32 %v4410, %v4408
    %v4412 = vmul.f32 %v4411, %v4410
    %v4413 = vmul.f32 0.5, %v4412
    %v4414 = vsub.f32 1.5, %v4413
    %v4415 = vmul.f32 %v4410, %v4414
    %vm4416 = vweird.f32 %v4408
    %vm4417 = vweird.f32 %v4410
    %vm4418 = vmor %vm4416, %vm4417
    %v4419 = vsel %vm4418, %v4410, %v4415
    %v4420 = vrsqrt.pop %v4409
    %v4421 = vmul.f32 %v4420, %v4409
    %v4422 = vmul.f32 %v4421, %v4420
    %v4423 = vmul.f32 0.5, %v4422
    %v4424 = vsub.f32 1.5, %v4423
    %v4425 = vmul.f32 %v4420, %v4424
    %vm4426 = vweird.f32 %v4409
    %vm4427 = vweird.f32 %v4420
    %vm4428 = vmor %vm4426, %vm4427
    %v4429 = vsel %vm4428, %v4420, %v4425
    %v4430 = vmul.f32 %v4396, %v4419
    %v4431 = vmul.f32 %v4397, %v4429
    %v4432 = vperm.slane %v3169, 1
    %v4433 = vmul.f32 %v4430, %v4432
    %v4434 = vmul.f32 %v4431, %v4432
    %v4435 = vperm.slane %v3169, 2
    %v4436 = vadd.f32 %v4433, %v4435
    %v4437 = vadd.f32 %v4434, %v4435
    %s4438 = scalar_lea.vmem %s15, 16
    %v4439 = vld [vmem:[%s4438] sm:$0xf]
    %v4440 = vld [vmem:[%s4438 + $0x4] sm:$0xf]
    %v4441 = vld [vmem:[%s4438 + $0x8] sm:$0xf]
    %v4442 = vld [vmem:[%s4438 + $0xc] sm:$0xf]
    %v4443 = vpack.c.bf16 %v4437, %v4436
    %v4444 = vperm.slane %v3168, 5
    %v4449 = vunpack.c.l.b16 %v4439
    %v4450 = vunpack.c.l.b16 %v4440
    %v4451 = vunpack.c.l.b16 %v4441
    %v4452 = vunpack.c.l.b16 %v4442
    %v4453 = vpack.c.b16 %v4450, %v4449
    %v4454 = vpack.c.b16 %v4452, %v4451
    %v4458 = vsel %vm191, %v4443, 0
    %4460 = vmatpush.bf16.msra.mxu0 0
    %4461 = vmatpush.bf16.msra.mxu0 0
    %4462 = vmatpush.bf16.msra.mxu0 0
    %4463 = vmatpush.bf16.msra.mxu0 0
    %4464 = vmatpush.bf16.msra.mxu0 0
    %4465 = vmatpush.bf16.msra.mxu0 0
    %4466 = vmatpush.bf16.msra.mxu0 %v4454
    %4467 = vmatpush.bf16.msra.mxu0 %v4453
    %4468 = vmatmul.bf16.gmra.mxu0 %v4458
    %v4469 = vpop.f32.mrf.mxu0
    %v4470 = vadd.f32 %v4444, %v4469
    %v4471 = vpop.f32.mrf.mxu0
    %v4472 = vadd.f32 %v4444, %v4471
    %4473 = vdwg.mxu0
    %v4474 = vmax.f32 %v4470, 0.0
    %v4475 = vmax.f32 %v4472, 0.0
    %s4476 = scalar_lea.vmem %s16, 32
    %v4477 = vld [vmem:[%s4476] sm:$0xf]
    %v4478 = vld [vmem:[%s4476 + $0x4] sm:$0xf]
    %v4479 = vld [vmem:[%s4476 + $0x8] sm:$0xf]
    %v4480 = vld [vmem:[%s4476 + $0xc] sm:$0xf]
    %v4481 = vld [vmem:[%s4476 + $0x10] sm:$0xf]
    %v4482 = vld [vmem:[%s4476 + $0x14] sm:$0xf]
    %v4483 = vld [vmem:[%s4476 + $0x18] sm:$0xf]
    %v4484 = vld [vmem:[%s4476 + $0x1c] sm:$0xf]
    %v4485 = vpack.c.bf16 %v4475, %v4474
    %v4486 = vperm.slane %v3168, 6
    %v4495 = vunpack.c.l.b16 %v4477
    %v4496 = vunpack.c.l.b16 %v4478
    %v4497 = vunpack.c.l.b16 %v4479
    %v4498 = vunpack.c.l.b16 %v4480
    %v4499 = vunpack.c.l.b16 %v4481
    %v4500 = vunpack.c.l.b16 %v4482
    %v4501 = vunpack.c.l.b16 %v4483
    %v4502 = vunpack.c.l.b16 %v4484
    %v4503 = vpack.c.b16 %v4496, %v4495
    %v4504 = vpack.c.b16 %v4498, %v4497
    %v4505 = vpack.c.b16 %v4500, %v4499
    %v4506 = vpack.c.b16 %v4502, %v4501
    %v4512 = vsel %vm872, %v4485, 0
    %4514 = vmatpush.bf16.msra.mxu0 0
    %4515 = vmatpush.bf16.msra.mxu0 0
    %4516 = vmatpush.bf16.msra.mxu0 0
    %4517 = vmatpush.bf16.msra.mxu0 0
    %4518 = vmatpush.bf16.msra.mxu0 %v4506
    %4519 = vmatpush.bf16.msra.mxu0 %v4505
    %4520 = vmatpush.bf16.msra.mxu0 %v4504
    %4521 = vmatpush.bf16.msra.mxu0 %v4503
    %4522 = vmatmul.bf16.gmra.mxu0 %v4512
    %v4523 = vpop.f32.mrf.mxu0
    %v4524 = vadd.f32 %v4486, %v4523
    %v4525 = vpop.f32.mrf.mxu0
    %v4526 = vadd.f32 %v4486, %v4525
    %4527 = vdwg.mxu0
    %v4528 = vadd.f32 %v4436, %v4524
    %v4529 = vadd.f32 %v4437, %v4526
    %v4530 = vsel %vm191, %v4528, 0.0
    %4531 = vadd.xlane.f32.xlu0 %v4530
    %v4532 = vpop.xlane.xlu0 %4531
    %v4533 = vsel %vm191, %v4529, 0.0
    %4534 = vadd.xlane.f32.xlu0 %v4533
    %v4535 = vpop.xlane.xlu0 %4534
    %v4536 = vmul.f32 %v4532, %v756
    %v4537 = vmul.f32 %v4535, %v756
    %v4538 = vsub.f32 %v4528, %v4536
    %v4539 = vsub.f32 %v4529, %v4537
    %v4540 = vmul.f32 %v4538, %v4538
    %v4541 = vmul.f32 %v4539, %v4539
    %v4542 = vsel %vm191, %v4540, 0.0
    %4543 = vadd.xlane.f32.xlu0 %v4542
    %v4544 = vpop.xlane.xlu0 %4543
    %v4545 = vsel %vm191, %v4541, 0.0
    %4546 = vadd.xlane.f32.xlu0 %v4545
    %v4547 = vpop.xlane.xlu0 %4546
    %v4548 = vmul.f32 %v4544, %v756
    %v4549 = vmul.f32 %v4547, %v756
    %v4550 = vadd.f32 %v4548, 1e-05
    %v4551 = vadd.f32 %v4549, 1e-05
    %v4552 = vrsqrt.pop %v4550
    %v4553 = vmul.f32 %v4552, %v4550
    %v4554 = vmul.f32 %v4553, %v4552
    %v4555 = vmul.f32 0.5, %v4554
    %v4556 = vsub.f32 1.5, %v4555
    %v4557 = vmul.f32 %v4552, %v4556
    %vm4558 = vweird.f32 %v4550
    %vm4559 = vweird.f32 %v4552
    %vm4560 = vmor %vm4558, %vm4559
    %v4561 = vsel %vm4560, %v4552, %v4557
    %v4562 = vrsqrt.pop %v4551
    %v4563 = vmul.f32 %v4562, %v4551
    %v4564 = vmul.f32 %v4563, %v4562
    %v4565 = vmul.f32 0.5, %v4564
    %v4566 = vsub.f32 1.5, %v4565
    %v4567 = vmul.f32 %v4562, %v4566
    %vm4568 = vweird.f32 %v4551
    %vm4569 = vweird.f32 %v4562
    %vm4570 = vmor %vm4568, %vm4569
    %v4571 = vsel %vm4570, %v4562, %v4567
    %v4572 = vmul.f32 %v4538, %v4561
    %v4573 = vmul.f32 %v4539, %v4571
    %v4574 = vperm.slane %v3169, 3
    %v4575 = vmul.f32 %v4572, %v4574
    %v4576 = vmul.f32 %v4573, %v4574
    %v4577 = vperm.slane %v3169, 4
    %v4578 = vadd.f32 %v4575, %v4577
    %v4579 = vadd.f32 %v4576, %v4577
    %v4580 = vld [vmem:[%s19] sm:$0x1]
    %v4581 = vld [vmem:[%s19 + $0x1] sm:$0x1]
    %v4582 = vsel %vm191, %v4578, 0.0
    %4583 = vadd.xlane.f32.xlu0 %v4582
    %v4584 = vpop.xlane.xlu0 %4583
    %v4585 = vsel %vm191, %v4579, 0.0
    %4586 = vadd.xlane.f32.xlu0 %v4585
    %v4587 = vpop.xlane.xlu0 %4586
    %v4588 = vmul.f32 %v4584, %v756
    %v4589 = vmul.f32 %v4587, %v756
    %v4590 = vsub.f32 %v4578, %v4588
    %v4591 = vsub.f32 %v4579, %v4589
    %v4592 = vmul.f32 %v4590, %v4590
    %v4593 = vmul.f32 %v4591, %v4591
    %v4594 = vsel %vm191, %v4592, 0.0
    %4595 = vadd.xlane.f32.xlu0 %v4594
    %v4596 = vpop.xlane.xlu0 %4595
    %v4597 = vsel %vm191, %v4593, 0.0
    %4598 = vadd.xlane.f32.xlu0 %v4597
    %v4599 = vpop.xlane.xlu0 %4598
    %v4600 = vmul.f32 %v4596, %v756
    %v4601 = vmul.f32 %v4599, %v756
    %v4602 = vadd.f32 %v4600, 1e-05
    %v4603 = vadd.f32 %v4601, 1e-05
    %v4604 = vrsqrt.pop %v4602
    %v4605 = vmul.f32 %v4604, %v4602
    %v4606 = vmul.f32 %v4605, %v4604
    %v4607 = vmul.f32 0.5, %v4606
    %v4608 = vsub.f32 1.5, %v4607
    %v4609 = vmul.f32 %v4604, %v4608
    %vm4610 = vweird.f32 %v4602
    %vm4611 = vweird.f32 %v4604
    %vm4612 = vmor %vm4610, %vm4611
    %v4613 = vsel %vm4612, %v4604, %v4609
    %v4614 = vrsqrt.pop %v4603
    %v4615 = vmul.f32 %v4614, %v4603
    %v4616 = vmul.f32 %v4615, %v4614
    %v4617 = vmul.f32 0.5, %v4616
    %v4618 = vsub.f32 1.5, %v4617
    %v4619 = vmul.f32 %v4614, %v4618
    %vm4620 = vweird.f32 %v4603
    %vm4621 = vweird.f32 %v4614
    %vm4622 = vmor %vm4620, %vm4621
    %v4623 = vsel %vm4622, %v4614, %v4619
    %v4624 = vmul.f32 %v4590, %v4613
    %v4625 = vmul.f32 %v4591, %v4623
    %v4626 = vperm.slane %v4580, 0
    %v4627 = vmul.f32 %v4624, %v4626
    %v4628 = vmul.f32 %v4625, %v4626
    %v4629 = vperm.slane %v4581, 0
    %v4630 = vadd.f32 %v4627, %v4629
    %v4631 = vadd.f32 %v4628, %v4629
    %v4632 = vld [vmem:[%s20] sm:$0xf]
    %v4633 = vld [vmem:[%s20 + $0x4] sm:$0xf]
    %v4634 = vld [vmem:[%s20 + $0x8] sm:$0xf]
    %v4635 = vld [vmem:[%s20 + $0xc] sm:$0xf]
    %v4636 = vld [vmem:[%s21] sm:$0x1]
    %v4637 = vpack.c.bf16 %v4631, %v4630
    %v4639 = vperm.slane %v4636, 0
    %v4645 = vunpack.c.l.b16 %v4632
    %v4646 = vunpack.c.l.b16 %v4633
    %v4647 = vunpack.c.l.b16 %v4634
    %v4648 = vunpack.c.l.b16 %v4635
    %v4649 = vpack.c.b16 %v4646, %v4645
    %v4650 = vpack.c.b16 %v4648, %v4647
    %v4654 = vsel %vm191, %v4637, 0
    %4656 = vmatpush.bf16.msra.mxu0 0
    %4657 = vmatpush.bf16.msra.mxu0 0
    %4658 = vmatpush.bf16.msra.mxu0 0
    %4659 = vmatpush.bf16.msra.mxu0 0
    %4660 = vmatpush.bf16.msra.mxu0 0
    %4661 = vmatpush.bf16.msra.mxu0 0
    %4662 = vmatpush.bf16.msra.mxu0 %v4650
    %4663 = vmatpush.bf16.msra.mxu0 %v4649
    %4664 = vmatmul.bf16.gmra.mxu0 %v4654
    %v4665 = vpop.f32.mrf.mxu0
    %v4666 = vadd.f32 %v4639, %v4665
    %v4667 = vpop.f32.mrf.mxu0
    %v4668 = vadd.f32 %v4639, %v4667
    %4669 = vdwg.mxu0
    %4670 = vst [vmem:[#allocation13] sm:$0xff] %v4666
    %4671 = vst [vmem:[#allocation13 + $0x8] sm:$0xff] %v4668
    // Predicated region
    $region114: #{math_solver_forward.1} parent=1 // pred_check
      _
    $region115: #{math_solver_forward.1} parent=1 // pred_check_branch
      %4673 = sbr.rel (0) target = $region117
    $region116: #{math_solver_forward.1} parent=1 // pred_region
      %4675 = vsyncadd [#allocation4], 0
      %s4676 = sshll.u32 [#allocation13], 4
      %s4677 = int_to_ptr.vmem [resolvable:$true] %s4676
      %s4678 = sshll.u32 %s22, 4
      %s4679 = int_to_ptr.hbm [resolvable:$true] %s4678
      %4684 = dma.vmem_to_hbm [thread:$0]  %s4677, 256, %s4679, [#allocation4], 128, 128, 8
    $region117: #{math_solver_forward.1} parent=1 // pred_fallthru
      _
    // Predicated region
    $region118: #{math_solver_forward.1} parent=1 // pred_check
      _
    $region119: #{math_solver_forward.1} parent=1 // pred_check_branch
      %4686 = sbr.rel (0) target = $region121
    $region120: #{math_solver_forward.1} parent=1 // pred_region
      %4688 = dma.done [#allocation4], 256
    $region121: #{math_solver_forward.1} parent=1 // pred_fallthru
      _
    %4689 = vsyncpa [#allocation3], 1
    %4690 = vsyncpa [#allocation6], 1
    %4691 = vsyncpa [#allocation9], 1
    %4692 = vsyncpa [#allocation12], 1
    %4693 = vsyncpa [#allocation4], 1

</llo_original>
